<compile_context>
chip_gen: v5e
topology: v5e:2x2
jax: 0.10.0
libtpu: 0.0.40
codegen_flags: <defaults>
</compile_context>

<pallas_src>
import functools

import jax
import jax.numpy as jnp
from jax.experimental import pallas as pl
from jax.experimental.pallas import tpu as pltpu


def _round_up(v, m):
    return (v + m - 1) // m * m


def _choose_tiles(n):
    """Pick (npad, tm, tk) for the node dimension.

    npad : padded node count (rows and cols of adj; divisible by tm and tk)
    tm   : row tile      -- >= 2 tiles when possible so v7x megacore splits it
    tk   : contraction tile -- multiple of 128, as large as divides npad
    """
    npad = _round_up(n, 128)
    tk = next(c for c in (1024, 512, 256, 128) if npad % c == 0)
    tm = npad  # fallback: single row tile
    for c in (512, 256, 128, 64, 32, 16, 8):
        if npad % c == 0 and npad // c >= 2:
            tm = c
            break
    return npad, tm, tk


def _vmem_limit(est_bytes):
    # Generous headroom over the static estimate, capped so the same tiling
    # compiles on v7x (64 MiB physical VMEM) as well as v5e/v6e (128 MiB).
    return int(min(max(4 * est_bytes, 16 << 20), 48 << 20))


# ---------------------------------------------------------------------------
# Kernel 1: dense transform  s1 = x @ W1   (row-tiled, W1 resident in VMEM)
# ---------------------------------------------------------------------------
def _linear_kernel(x_ref, w_ref, out_ref):
    out_ref[...] = jnp.dot(
        x_ref[...], w_ref[...], preferred_element_type=jnp.float32
    ).astype(out_ref.dtype)


def _linear(x, w, *, tm):
    n, f = x.shape
    h = w.shape[1]
    est = 2 * tm * f * 2 + 2 * f * h * 2 + 2 * tm * h * 2
    return pl.pallas_call(
        _linear_kernel,
        out_shape=jax.ShapeDtypeStruct((n, h), jnp.bfloat16),
        grid_spec=pltpu.PrefetchScalarGridSpec(
            num_scalar_prefetch=0,
            grid=(n // tm,),
            in_specs=[
                pl.BlockSpec((tm, f), lambda i: (i, 0)),
                pl.BlockSpec((f, h), lambda i: (0, 0)),
            ],
            out_specs=pl.BlockSpec((tm, h), lambda i: (i, 0)),
        ),
        compiler_params=pltpu.CompilerParams(
            dimension_semantics=("parallel",),
            vmem_limit_bytes=_vmem_limit(est)),
        cost_estimate=pl.CostEstimate(
            flops=2 * n * f * h,
            transcendentals=0,
            bytes_accessed=n * f * 2 + f * h * 2 + n * h * 2),
    )(x, w)


# ---------------------------------------------------------------------------
# Kernel 2: propagate-1 with fused layer-2 transform
#   s2 = relu(adj @ s1 + b1) @ W2
#   grid = (row tiles [parallel], contraction tiles [arbitrary])
#   s1 / b1 / W2 are VMEM-resident (constant index_map); adj streams.
# ---------------------------------------------------------------------------
def _prop1_kernel(adj_ref, s1_ref, b1_ref, w2_ref, s2_ref, acc_ref, *, tk):
    k = pl.program_id(1)
    koff = pl.multiple_of(k * tk, tk)
    prod = jnp.dot(adj_ref[...], s1_ref[pl.ds(koff, tk), :],
                   preferred_element_type=jnp.float32)

    @pl.when(k == 0)
    def _init():
        acc_ref[...] = prod          # direct write; no zero-fill pass

    @pl.when(k != 0)
    def _accum():
        acc_ref[...] += prod

    @pl.when(k == pl.num_programs(1) - 1)
    def _finalize():
        h1 = jnp.maximum(acc_ref[...] + b1_ref[...], 0.0)
        # F.dropout(..., training=False) -> identity in eval mode.
        s2_ref[...] = jnp.dot(
            h1.astype(jnp.bfloat16), w2_ref[...],
            preferred_element_type=jnp.float32).astype(s2_ref.dtype)


def _propagate1(adj, s1, b1, w2, *, tm, tk):
    npad = adj.shape[0]
    hp = s1.shape[1]
    cp = w2.shape[1]
    est = (2 * tm * tk * 2          # adj, double-buffered
           + 2 * npad * hp * 2      # s1 resident
           + 2 * hp * 4             # b1
           + 2 * hp * cp * 2        # w2 resident
           + 2 * tm * cp * 2        # s2 out, double-buffered
           + tm * hp * 4)           # f32 accumulator
    return pl.pallas_call(
        functools.partial(_prop1_kernel, tk=tk),
        out_shape=jax.ShapeDtypeStruct((npad, cp), jnp.bfloat16),
        grid_spec=pltpu.PrefetchScalarGridSpec(
            num_scalar_prefetch=0,
            grid=(npad // tm, npad // tk),
            in_specs=[
                pl.BlockSpec((tm, tk), lambda i, k: (i, k)),
                pl.BlockSpec((npad, hp), lambda i, k: (0, 0)),   # resident
                pl.BlockSpec((1, hp), lambda i, k: (0, 0)),      # resident
                pl.BlockSpec((hp, cp), lambda i, k: (0, 0)),     # resident
            ],
            out_specs=pl.BlockSpec((tm, cp), lambda i, k: (i, 0)),
            scratch_shapes=[pltpu.VMEM((tm, hp), jnp.float32)],
        ),
        compiler_params=pltpu.CompilerParams(
            dimension_semantics=("parallel", "arbitrary"),
            vmem_limit_bytes=_vmem_limit(est)),
        cost_estimate=pl.CostEstimate(
            flops=2 * npad * npad * hp + 2 * npad * hp * cp,
            transcendentals=0,
            bytes_accessed=npad * npad * 2 + npad * hp * 2
            + hp * cp * 2 + npad * cp * 2),
    )(adj, s1, b1, w2)


# ---------------------------------------------------------------------------
# Kernel 3: propagate-2 with fused log_softmax epilogue
#   out = log_softmax(adj @ s2 + b2, dim=1)
# ---------------------------------------------------------------------------
def _prop2_kernel(adj_ref, s2_ref, b2_ref, out_ref, acc_ref, *, tk, valid_cols):
    k = pl.program_id(1)
    koff = pl.multiple_of(k * tk, tk)
    prod = jnp.dot(adj_ref[...], s2_ref[pl.ds(koff, tk), :],
                   preferred_element_type=jnp.float32)

    @pl.when(k == 0)
    def _init():
        acc_ref[...] = prod

    @pl.when(k != 0)
    def _accum():
        acc_ref[...] += prod

    @pl.when(k == pl.num_programs(1) - 1)
    def _finalize():
        h = acc_ref[...] + b2_ref[...]
        col = jax.lax.broadcasted_iota(jnp.int32, h.shape, 1)
        h = jnp.where(col < valid_cols, h, -jnp.inf)   # mask padded classes
        m = jnp.max(h, axis=1, keepdims=True)
        z = h - m
        lse = jnp.log(jnp.sum(jnp.exp(z), axis=1, keepdims=True))
        out_ref[...] = (z - lse).astype(out_ref.dtype)


def _propagate2(adj, s2, b2, *, tm, tk, valid_cols):
    npad = adj.shape[0]
    cp = s2.shape[1]
    est = (2 * tm * tk * 2          # adj, double-buffered
           + 2 * npad * cp * 2      # s2 resident
           + 2 * cp * 4             # b2
           + 2 * tm * cp * 4        # f32 out, double-buffered
           + tm * cp * 4)           # f32 accumulator
    return pl.pallas_call(
        functools.partial(_prop2_kernel, tk=tk, valid_cols=valid_cols),
        out_shape=jax.ShapeDtypeStruct((npad, cp), jnp.float32),
        grid_spec=pltpu.PrefetchScalarGridSpec(
            num_scalar_prefetch=0,
            grid=(npad // tm, npad // tk),
            in_specs=[
                pl.BlockSpec((tm, tk), lambda i, k: (i, k)),
                pl.BlockSpec((npad, cp), lambda i, k: (0, 0)),   # resident
                pl.BlockSpec((1, cp), lambda i, k: (0, 0)),      # resident
            ],
            out_specs=pl.BlockSpec((tm, cp), lambda i, k: (i, 0)),
            scratch_shapes=[pltpu.VMEM((tm, cp), jnp.float32)],
        ),
        compiler_params=pltpu.CompilerParams(
            dimension_semantics=("parallel", "arbitrary"),
            vmem_limit_bytes=_vmem_limit(est)),
        cost_estimate=pl.CostEstimate(
            flops=2 * npad * npad * cp,
            transcendentals=npad * cp,
            bytes_accessed=npad * npad * 2 + npad * cp * 2 + npad * cp * 4),
    )(adj, s2, b2)


# ---------------------------------------------------------------------------
# Full GCN forward (eval mode)
# ---------------------------------------------------------------------------
@jax.jit
def gcn_forward(x, adj, w1, b1, w2, b2):
    n, nfeat = x.shape
    nhid = w1.shape[1]
    nclass = w2.shape[1]

    npad, tm, tk = _choose_tiles(n)
    assert npad % tm == 0 and npad % tk == 0, (npad, tm, tk)

    fp = _round_up(nfeat, 128)      # lane-dense / MXU-aligned K for layer 1
    hp = _round_up(nhid, 128)
    cp = _round_up(nclass, 128)

    # bf16 MXU operands, f32 biases for the epilogues.
    x_p = jnp.pad(x, ((0, npad - n), (0, fp - nfeat))).astype(jnp.bfloat16)
    adj_p = jnp.pad(adj, ((0, npad - n), (0, npad - n))).astype(jnp.bfloat16)
    w1_p = jnp.pad(w1, ((0, fp - nfeat), (0, hp - nhid))).astype(jnp.bfloat16)
    b1_p = jnp.pad(b1.reshape(1, -1), ((0, 0), (0, hp - nhid))).astype(jnp.float32)
    w2_p = jnp.pad(w2, ((0, hp - nhid), (0, cp - nclass))).astype(jnp.bfloat16)
    b2_p = jnp.pad(b2.reshape(1, -1), ((0, 0), (0, cp - nclass))).astype(jnp.float32)

    # Layer 1 dense transform: s1 = x @ W1
    s1 = _linear(x_p, w1_p, tm=tm)
    # Layer 1 propagation + ReLU, fused with layer 2 dense transform:
    #   s2 = relu(adj @ s1 + b1) @ W2        (eval-mode dropout is identity)
    s2 = _propagate1(adj_p, s1, b1_p, w2_p, tm=tm, tk=tk)
    # Layer 2 propagation + log_softmax:
    #   out = log_softmax(adj @ s2 + b2, dim=1)
    out = _propagate2(adj_p, s2, b2_p, tm=tm, tk=tk, valid_cols=nclass)

    return out[:n, :nclass]


# ---------------------------------------------------------------------------
# Reference (same bf16-matmul / f32-accumulate recipe, pure JAX)
# ---------------------------------------------------------------------------
def gcn_reference(x, adj, w1, b1, w2, b2):
    bf = jnp.bfloat16
    ab = adj.astype(bf)
    s1 = jnp.dot(x.astype(bf), w1.astype(bf), preferred_element_type=jnp.float32)
    h1 = jnp.maximum(
        jnp.dot(ab, s1.astype(bf), preferred_element_type=jnp.float32)
        + b1.reshape(1, -1), 0.0)
    s2 = jnp.dot(h1.astype(bf), w2.astype(bf), preferred_element_type=jnp.float32)
    h2 = jnp.dot(ab, s2.astype(bf), preferred_element_type=jnp.float32) + b2.reshape(1, -1)
    return jax.nn.log_softmax(h2, axis=1)


def init_params(key, nfeat, nhid, nclass):
    # Mirrors pygcn GraphConvolution.reset_parameters: uniform(-stdv, stdv),
    # stdv = 1 / sqrt(out_features).
    k1, k2, k3, k4 = jax.random.split(key, 4)
    stdv1 = 1.0 / jnp.sqrt(nhid)
    stdv2 = 1.0 / jnp.sqrt(nclass)
    w1 = jax.random.uniform(k1, (nfeat, nhid), jnp.float32, -stdv1, stdv1)
    b1 = jax.random.uniform(k2, (nhid,), jnp.float32, -stdv1, stdv1)
    w2 = jax.random.uniform(k3, (nhid, nclass), jnp.float32, -stdv2, stdv2)
    b2 = jax.random.uniform(k4, (nclass,), jnp.float32, -stdv2, stdv2)
    return w1, b1, w2, b2


if __name__ == "__main__":
    N, NFEAT, NHID, NCLASS = 512, 96, 64, 10
    key = jax.random.PRNGKey(0)
    kx, kadj, kp = jax.random.split(key, 3)

    x = jax.random.normal(kx, (N, NFEAT), jnp.float32)
    # Symmetric, row-normalized adjacency with self-loops (typical GCN input).
    a = (jax.random.uniform(kadj, (N, N)) < 0.05).astype(jnp.float32)
    a = jnp.maximum(a, a.T) + jnp.eye(N, dtype=jnp.float32)
    adj = a / jnp.sum(a, axis=1, keepdims=True)

    w1, b1, w2, b2 = init_params(kp, NFEAT, NHID, NCLASS)

    out = gcn_forward(x, adj, w1, b1, w2, b2)
    jax.block_until_ready(out)
    assert out.shape == (N, NCLASS)

    ref = gcn_reference(x, adj, w1, b1, w2, b2)
    err = float(jnp.max(jnp.abs(out - ref)))
    assert jnp.allclose(out, ref, atol=1e-2, rtol=1e-2), f"mismatch: {err}"

    print("KERNEL_OK")
</pallas_src>

<mosaic_0001>
module attributes {stable_mosaic.version = 11 : i64} {
  func.func @_linear_kernel(%arg0: i32, %arg1: memref<256x128xbf16, #tpu.memory_space<vmem>>, %arg2: memref<128x128xbf16, #tpu.memory_space<vmem>>, %arg3: memref<256x128xbf16, #tpu.memory_space<vmem>>) attributes {dimension_semantics = [#tpu.dimension_semantics<parallel>], iteration_bounds = array<i64: 2>, scalar_prefetch = 0 : i64, scratch_operands = 0 : i64, tpu.core_type = #tpu.core_type<tc>, window_params = [{transform_indices = @transform_0, window_bounds = array<i64: 256, 128>}, {pipeline_mode = #tpu.pipeline_mode<synchronous>, transform_indices = @transform_1, window_bounds = array<i64: 128, 128>}, {transform_indices = @transform_2, window_bounds = array<i64: 256, 128>}]} {
    %c0 = arith.constant 0 : index
    %c0_0 = arith.constant 0 : index
    %0 = vector.load %arg1[%c0, %c0_0] : memref<256x128xbf16, #tpu.memory_space<vmem>>, vector<256x128xbf16>
    %c0_1 = arith.constant 0 : index
    %c0_2 = arith.constant 0 : index
    %1 = vector.load %arg2[%c0_1, %c0_2] : memref<128x128xbf16, #tpu.memory_space<vmem>>, vector<128x128xbf16>
    %cst = arith.constant dense<0.000000e+00> : vector<256x128xf32>
    %2 = tpu.matmul %0, %1, %cst {dimension_numbers = #tpu.dot_dimension_numbers<[1], [0], [0], [1], [0, 0, 1, 1], [], []>} : vector<256x128xbf16>, vector<128x128xbf16>, vector<256x128xf32> -> vector<256x128xf32>
    %3 = arith.truncf %2 : vector<256x128xf32> to vector<256x128xbf16>
    %c0_3 = arith.constant 0 : index
    %c0_4 = arith.constant 0 : index
    %4 = vector.load %arg3[%c0_3, %c0_4] : memref<256x128xbf16, #tpu.memory_space<vmem>>, vector<256x128xbf16>
    tpu.vector_store %arg3[%c0_3, %c0_4], %3 {strides = array<i32>} : memref<256x128xbf16, #tpu.memory_space<vmem>>, vector<256x128xbf16>,
    return
  }
  func.func @transform_0(%arg0: i32) -> (i32, i32) {
    %c0_i32 = arith.constant 0 : i32
    %c0_i32_0 = arith.constant 0 : i32
    return %arg0, %c0_i32 : i32, i32
  }
  func.func @transform_1(%arg0: i32) -> (i32, i32) {
    %c0_i32 = arith.constant 0 : i32
    %c0_i32_0 = arith.constant 0 : i32
    %c0_i32_1 = arith.constant 0 : i32
    return %c0_i32, %c0_i32_0 : i32, i32
  }
  func.func @transform_2(%arg0: i32) -> (i32, i32) {
    %c0_i32 = arith.constant 0 : i32
    %c0_i32_0 = arith.constant 0 : i32
    return %arg0, %c0_i32 : i32, i32
  }
}

module attributes {stable_mosaic.version = 11 : i64} {
  func.func @_prop1_kernel(%arg0: i32, %arg1: i32, %arg2: memref<256x512xbf16, #tpu.memory_space<vmem>>, %arg3: memref<512x128xbf16, #tpu.memory_space<vmem>>, %arg4: memref<1x128xf32, #tpu.memory_space<vmem>>, %arg5: memref<128x128xbf16, #tpu.memory_space<vmem>>, %arg6: memref<256x128xbf16, #tpu.memory_space<vmem>>, %arg7: memref<256x128xf32, #tpu.memory_space<vmem>>) attributes {dimension_semantics = [#tpu.dimension_semantics<parallel>, #tpu.dimension_semantics<arbitrary>], iteration_bounds = array<i64: 2, 1>, scalar_prefetch = 0 : i64, scratch_operands = 1 : i64, tpu.core_type = #tpu.core_type<tc>, window_params = [{transform_indices = @transform_0, window_bounds = array<i64: 256, 512>}, {pipeline_mode = #tpu.pipeline_mode<synchronous>, transform_indices = @transform_1, window_bounds = array<i64: 512, 128>}, {pipeline_mode = #tpu.pipeline_mode<synchronous>, transform_indices = @transform_2, window_bounds = array<i64: 1, 128>}, {pipeline_mode = #tpu.pipeline_mode<synchronous>, transform_indices = @transform_3, window_bounds = array<i64: 128, 128>}, {transform_indices = @transform_4, window_bounds = array<i64: 256, 128>}]} {
    %c512_i32 = arith.constant 512 : i32
    %0 = arith.muli %arg1, %c512_i32 : i32
    %1 = tpu.assume_multiple %0, 512 : i32
    %c0 = arith.constant 0 : index
    %c0_0 = arith.constant 0 : index
    %2 = vector.load %arg2[%c0, %c0_0] : memref<256x512xbf16, #tpu.memory_space<vmem>>, vector<256x512xbf16>
    %3 = arith.index_cast %1 : i32 to index
    %c0_1 = arith.constant 0 : index
    %4 = vector.load %arg3[%3, %c0_1] : memref<512x128xbf16, #tpu.memory_space<vmem>>, vector<512x128xbf16>
    %cst = arith.constant dense<0.000000e+00> : vector<256x128xf32>
    %5 = tpu.matmul %2, %4, %cst {dimension_numbers = #tpu.dot_dimension_numbers<[1], [0], [0], [1], [0, 0, 1, 1], [], []>} : vector<256x512xbf16>, vector<512x128xbf16>, vector<256x128xf32> -> vector<256x128xf32>
    %c0_i32 = arith.constant 0 : i32
    %6 = arith.cmpi eq, %arg1, %c0_i32 : i32
    %7 = arith.extui %6 : i1 to i32
    %c0_i32_2 = arith.constant 0 : i32
    %8 = arith.cmpi ne, %7, %c0_i32_2 : i32
    scf.if %8 {
      %c0_7 = arith.constant 0 : index
      %c0_8 = arith.constant 0 : index
      %15 = vector.load %arg7[%c0_7, %c0_8] : memref<256x128xf32, #tpu.memory_space<vmem>>, vector<256x128xf32>
      tpu.vector_store %arg7[%c0_7, %c0_8], %5 {strides = array<i32>} : memref<256x128xf32, #tpu.memory_space<vmem>>, vector<256x128xf32>,
    } else {
    }
    %c0_i32_3 = arith.constant 0 : i32
    %9 = arith.cmpi ne, %arg1, %c0_i32_3 : i32
    %10 = arith.extui %9 : i1 to i32
    %c0_i32_4 = arith.constant 0 : i32
    %11 = arith.cmpi ne, %10, %c0_i32_4 : i32
    scf.if %11 {
      %c0_7 = arith.constant 0 : index
      %c0_8 = arith.constant 0 : index
      %15 = vector.load %arg7[%c0_7, %c0_8] : memref<256x128xf32, #tpu.memory_space<vmem>>, vector<256x128xf32>
      %16 = arith.addf %15, %5 : vector<256x128xf32>
      %c0_9 = arith.constant 0 : index
      %c0_10 = arith.constant 0 : index
      %17 = vector.load %arg7[%c0_9, %c0_10] : memref<256x128xf32, #tpu.memory_space<vmem>>, vector<256x128xf32>
      tpu.vector_store %arg7[%c0_9, %c0_10], %16 {strides = array<i32>} : memref<256x128xf32, #tpu.memory_space<vmem>>, vector<256x128xf32>,
    } else {
    }
    %c0_i32_5 = arith.constant 0 : i32
    %12 = arith.cmpi eq, %arg1, %c0_i32_5 : i32
    %13 = arith.extui %12 : i1 to i32
    %c0_i32_6 = arith.constant 0 : i32
    %14 = arith.cmpi ne, %13, %c0_i32_6 : i32
    scf.if %14 {
      %c0_7 = arith.constant 0 : index
      %c0_8 = arith.constant 0 : index
      %15 = vector.load %arg7[%c0_7, %c0_8] : memref<256x128xf32, #tpu.memory_space<vmem>>, vector<256x128xf32>
      %c0_9 = arith.constant 0 : index
      %c0_10 = arith.constant 0 : index
      %16 = vector.load %arg4[%c0_9, %c0_10] : memref<1x128xf32, #tpu.memory_space<vmem>>, vector<1x128xf32>
      %17 = vector.broadcast %16 : vector<1x128xf32> to vector<256x128xf32>
      %18 = arith.addf %15, %17 : vector<256x128xf32>
      %cst_11 = arith.constant 0.000000e+00 : f32
      %19 = vector.broadcast %cst_11 : f32 to vector<256x128xf32>
      %20 = arith.maximumf %18, %19 : vector<256x128xf32>
      %21 = arith.truncf %20 : vector<256x128xf32> to vector<256x128xbf16>
      %c0_12 = arith.constant 0 : index
      %c0_13 = arith.constant 0 : index
      %22 = vector.load %arg5[%c0_12, %c0_13] : memref<128x128xbf16, #tpu.memory_space<vmem>>, vector<128x128xbf16>
      %cst_14 = arith.constant dense<0.000000e+00> : vector<256x128xf32>
      %23 = tpu.matmul %21, %22, %cst_14 {dimension_numbers = #tpu.dot_dimension_numbers<[1], [0], [0], [1], [0, 0, 1, 1], [], []>} : vector<256x128xbf16>, vector<128x128xbf16>, vector<256x128xf32> -> vector<256x128xf32>
      %24 = arith.truncf %23 : vector<256x128xf32> to vector<256x128xbf16>
      %c0_15 = arith.constant 0 : index
      %c0_16 = arith.constant 0 : index
      %25 = vector.load %arg6[%c0_15, %c0_16] : memref<256x128xbf16, #tpu.memory_space<vmem>>, vector<256x128xbf16>
      tpu.vector_store %arg6[%c0_15, %c0_16], %24 {strides = array<i32>} : memref<256x128xbf16, #tpu.memory_space<vmem>>, vector<256x128xbf16>,
    } else {
    }
    return
  }
  func.func @transform_0(%arg0: i32, %arg1: i32) -> (i32, i32) {
    %c0_i32 = arith.constant 0 : i32
    return %arg0, %arg1 : i32, i32
  }
  func.func @transform_1(%arg0: i32, %arg1: i32) -> (i32, i32) {
    %c0_i32 = arith.constant 0 : i32
    %c0_i32_0 = arith.constant 0 : i32
    %c0_i32_1 = arith.constant 0 : i32
    return %c0_i32, %c0_i32_0 : i32, i32
  }
  func.func @transform_2(%arg0: i32, %arg1: i32) -> (i32, i32) {
    %c0_i32 = arith.constant 0 : i32
    %c0_i32_0 = arith.constant 0 : i32
    %c0_i32_1 = arith.constant 0 : i32
    return %c0_i32, %c0_i32_0 : i32, i32
  }
  func.func @transform_3(%arg0: i32, %arg1: i32) -> (i32, i32) {
    %c0_i32 = arith.constant 0 : i32
    %c0_i32_0 = arith.constant 0 : i32
    %c0_i32_1 = arith.constant 0 : i32
    return %c0_i32, %c0_i32_0 : i32, i32
  }
  func.func @transform_4(%arg0: i32, %arg1: i32) -> (i32, i32) {
    %c0_i32 = arith.constant 0 : i32
    %c0_i32_0 = arith.constant 0 : i32
    return %arg0, %c0_i32 : i32, i32
  }
}

module attributes {stable_mosaic.version = 11 : i64} {
  func.func @_prop2_kernel(%arg0: i32, %arg1: i32, %arg2: memref<256x512xbf16, #tpu.memory_space<vmem>>, %arg3: memref<512x128xbf16, #tpu.memory_space<vmem>>, %arg4: memref<1x128xf32, #tpu.memory_space<vmem>>, %arg5: memref<256x128xf32, #tpu.memory_space<vmem>>, %arg6: memref<256x128xf32, #tpu.memory_space<vmem>>) attributes {dimension_semantics = [#tpu.dimension_semantics<parallel>, #tpu.dimension_semantics<arbitrary>], iteration_bounds = array<i64: 2, 1>, scalar_prefetch = 0 : i64, scratch_operands = 1 : i64, tpu.core_type = #tpu.core_type<tc>, window_params = [{transform_indices = @transform_0, window_bounds = array<i64: 256, 512>}, {pipeline_mode = #tpu.pipeline_mode<synchronous>, transform_indices = @transform_1, window_bounds = array<i64: 512, 128>}, {pipeline_mode = #tpu.pipeline_mode<synchronous>, transform_indices = @transform_2, window_bounds = array<i64: 1, 128>}, {transform_indices = @transform_3, window_bounds = array<i64: 256, 128>}]} {
    %c512_i32 = arith.constant 512 : i32
    %0 = arith.muli %arg1, %c512_i32 : i32
    %1 = tpu.assume_multiple %0, 512 : i32
    %c0 = arith.constant 0 : index
    %c0_0 = arith.constant 0 : index
    %2 = vector.load %arg2[%c0, %c0_0] : memref<256x512xbf16, #tpu.memory_space<vmem>>, vector<256x512xbf16>
    %3 = arith.index_cast %1 : i32 to index
    %c0_1 = arith.constant 0 : index
    %4 = vector.load %arg3[%3, %c0_1] : memref<512x128xbf16, #tpu.memory_space<vmem>>, vector<512x128xbf16>
    %cst = arith.constant dense<0.000000e+00> : vector<256x128xf32>
    %5 = tpu.matmul %2, %4, %cst {dimension_numbers = #tpu.dot_dimension_numbers<[1], [0], [0], [1], [0, 0, 1, 1], [], []>} : vector<256x512xbf16>, vector<512x128xbf16>, vector<256x128xf32> -> vector<256x128xf32>
    %c0_i32 = arith.constant 0 : i32
    %6 = arith.cmpi eq, %arg1, %c0_i32 : i32
    %7 = arith.extui %6 : i1 to i32
    %c0_i32_2 = arith.constant 0 : i32
    %8 = arith.cmpi ne, %7, %c0_i32_2 : i32
    scf.if %8 {
      %c0_7 = arith.constant 0 : index
      %c0_8 = arith.constant 0 : index
      %15 = vector.load %arg6[%c0_7, %c0_8] : memref<256x128xf32, #tpu.memory_space<vmem>>, vector<256x128xf32>
      tpu.vector_store %arg6[%c0_7, %c0_8], %5 {strides = array<i32>} : memref<256x128xf32, #tpu.memory_space<vmem>>, vector<256x128xf32>,
    } else {
    }
    %c0_i32_3 = arith.constant 0 : i32
    %9 = arith.cmpi ne, %arg1, %c0_i32_3 : i32
    %10 = arith.extui %9 : i1 to i32
    %c0_i32_4 = arith.constant 0 : i32
    %11 = arith.cmpi ne, %10, %c0_i32_4 : i32
    scf.if %11 {
      %c0_7 = arith.constant 0 : index
      %c0_8 = arith.constant 0 : index
      %15 = vector.load %arg6[%c0_7, %c0_8] : memref<256x128xf32, #tpu.memory_space<vmem>>, vector<256x128xf32>
      %16 = arith.addf %15, %5 : vector<256x128xf32>
      %c0_9 = arith.constant 0 : index
      %c0_10 = arith.constant 0 : index
      %17 = vector.load %arg6[%c0_9, %c0_10] : memref<256x128xf32, #tpu.memory_space<vmem>>, vector<256x128xf32>
      tpu.vector_store %arg6[%c0_9, %c0_10], %16 {strides = array<i32>} : memref<256x128xf32, #tpu.memory_space<vmem>>, vector<256x128xf32>,
    } else {
    }
    %c0_i32_5 = arith.constant 0 : i32
    %12 = arith.cmpi eq, %arg1, %c0_i32_5 : i32
    %13 = arith.extui %12 : i1 to i32
    %c0_i32_6 = arith.constant 0 : i32
    %14 = arith.cmpi ne, %13, %c0_i32_6 : i32
    scf.if %14 {
      %c0_7 = arith.constant 0 : index
      %c0_8 = arith.constant 0 : index
      %15 = vector.load %arg6[%c0_7, %c0_8] : memref<256x128xf32, #tpu.memory_space<vmem>>, vector<256x128xf32>
      %c0_9 = arith.constant 0 : index
      %c0_10 = arith.constant 0 : index
      %16 = vector.load %arg4[%c0_9, %c0_10] : memref<1x128xf32, #tpu.memory_space<vmem>>, vector<1x128xf32>
      %17 = vector.broadcast %16 : vector<1x128xf32> to vector<256x128xf32>
      %18 = arith.addf %15, %17 : vector<256x128xf32>
      %19 = tpu.iota {dimensions = array<i32: 1>} : vector<256x128xi32>
      %c10_i32 = arith.constant 10 : i32
      %20 = vector.broadcast %c10_i32 : i32 to vector<256x128xi32>
      %21 = arith.cmpi slt, %19, %20 : vector<256x128xi32>
      %cst_11 = arith.constant 0xFF800000 : f32
      %22 = vector.broadcast %cst_11 : f32 to vector<256x128xf32>
      %23 = arith.select %21, %18, %22 : vector<256x128xi1>, vector<256x128xf32>
      %cst_12 = arith.constant dense<0xFF800000> : vector<256xf32>
      %24 = vector.multi_reduction <maximumf>, %23, %cst_12 [1] : vector<256x128xf32> to vector<256xf32>
      %25 = vector.shape_cast %24 : vector<256xf32> to vector<256x1xf32>
      %26 = vector.broadcast %25 : vector<256x1xf32> to vector<256x128xf32>
      %27 = arith.subf %23, %26 : vector<256x128xf32>
      %28 = math.exp %27 : vector<256x128xf32>
      %cst_13 = arith.constant dense<0.000000e+00> : vector<256xf32>
      %29 = vector.multi_reduction <add>, %28, %cst_13 [1] : vector<256x128xf32> to vector<256xf32>
      %30 = vector.shape_cast %29 : vector<256xf32> to vector<256x1xf32>
      %31 = math.log %30 : vector<256x1xf32>
      %32 = vector.broadcast %31 : vector<256x1xf32> to vector<256x128xf32>
      %33 = arith.subf %27, %32 : vector<256x128xf32>
      %c0_14 = arith.constant 0 : index
      %c0_15 = arith.constant 0 : index
      %34 = vector.load %arg5[%c0_14, %c0_15] : memref<256x128xf32, #tpu.memory_space<vmem>>, vector<256x128xf32>
      tpu.vector_store %arg5[%c0_14, %c0_15], %33 {strides = array<i32>} : memref<256x128xf32, #tpu.memory_space<vmem>>, vector<256x128xf32>,
    } else {
    }
    return
  }
  func.func @transform_0(%arg0: i32, %arg1: i32) -> (i32, i32) {
    %c0_i32 = arith.constant 0 : i32
    return %arg0, %arg1 : i32, i32
  }
  func.func @transform_1(%arg0: i32, %arg1: i32) -> (i32, i32) {
    %c0_i32 = arith.constant 0 : i32
    %c0_i32_0 = arith.constant 0 : i32
    %c0_i32_1 = arith.constant 0 : i32
    return %c0_i32, %c0_i32_0 : i32, i32
  }
  func.func @transform_2(%arg0: i32, %arg1: i32) -> (i32, i32) {
    %c0_i32 = arith.constant 0 : i32
    %c0_i32_0 = arith.constant 0 : i32
    %c0_i32_1 = arith.constant 0 : i32
    return %c0_i32, %c0_i32_0 : i32, i32
  }
  func.func @transform_3(%arg0: i32, %arg1: i32) -> (i32, i32) {
    %c0_i32 = arith.constant 0 : i32
    %c0_i32_0 = arith.constant 0 : i32
    return %arg0, %c0_i32 : i32, i32
  }
}

</mosaic_0001>

<llo_original>
// kernel: gcn_forward.3
$region0: #{gcn_forward.3}
  #allocation0 [shape = 'u32[]', space=smem, size = 0x4, offset = 0x4, fixed_abs, tag = 'smem constant byte address 0x4 - core index']
  #allocation1 [shape = 'u32[72,128]{1,0:T(1,128)}', space=vmem, size = 0x9000, scoped, tag = 'internal scratch']
  %s0 = inlined_call_operand.vmem [shape: bf16[512,128], index: 0, kind: input, shape index: {}]
  %s1 = inlined_call_operand.vmem [shape: bf16[128,128], index: 1, kind: input, shape index: {}]
  %s2 = inlined_call_operand.vmem [shape: bf16[512,128], index: 2, kind: output, shape index: {}]
  %s3 = sld [smem:[#allocation0]]
  $region41: #{gcn_forward.3} parent=0
    _
  %s5 = ssub.s32 1, %s3
  %s6 = scalar_select 0, %s5, %s3
  loop: start=0, step=1, limit=4
  $region2: #{gcn_forward.3} parent=0 // loop_pre_header
    _
  $region3: #{gcn_forward.3} parent=0 // loop_header
    %s8 = sphi 0, %s12
    %p9 = scmp.ge.s32.totalorder %s8, 4
    %s18 = sphi 0, %s20
    %s21 = sphi 0, %s18
    %s22 = sphi 0, %s21
    %s38 = sphi 0, %s22
    %s42 = sphi 0, %s42
    %s44 = sphi 0, %s42
    %s45 = sphi 0, %s44
    %s59 = sphi 0, %s45
    %s65 = sphi 0, %s67
    %s68 = sphi 0, %s65
    %s69 = sphi 0, %s68
    %s85 = sphi 0, %s69
  $region4: #{gcn_forward.3} parent=0 // loop_header_branch
    %11 = sbr.rel (%p9) target = $region8
  $region5: #{gcn_forward.3} parent=0 // loop_body
    %s13 = ssub.s32 %s8, 1
    %s14 = ssub.s32 %s8, 2
    %s15 = sadd.s32 %s8, 1
    %s16 = ssub.s32 %s8, %s15
    %p17 = scmp.eq.s32.totalorder %s16, 0
    %s19 = sadd.s32 %s18, 1
    %s20 = scalar_select %p17, %s18, %s19
    %p23 = pneg %p17
    %p24 = scmp.eq.s32.totalorder %s8, 1
    %p25 = por %p23, %p24
    %p26 = scmp.ne.s32.totalorder %s18, %s21
    %p27 = scmp.eq.s32.totalorder %s8, 0
    %p28 = por %p26, %p27
    %p29 = scmp.ne.s32.totalorder %s18, %s21
    %p30 = scmp.eq.s32.totalorder %s13, 1
    %p31 = por %p29, %p30
    %p32 = scmp.ne.s32.totalorder %s21, %s22
    %p33 = scmp.eq.s32.totalorder %s13, 0
    %p34 = por %p32, %p33
    %p35 = scmp.ne.s32.totalorder %s21, %s22
    %p36 = scmp.eq.s32.totalorder %s14, 1
    %p37 = por %p35, %p36
    %p39 = scmp.ne.s32.totalorder %s22, %s38
    %p40 = scmp.eq.s32.totalorder %s14, 0
    %p41 = por %p39, %p40
    %s43 = sadd.s32 %s42, 1
    %p46 = scmp.eq.s32.totalorder %s8, 1
    %p47 = scmp.ne.s32.totalorder %s42, %s44
    %p48 = scmp.eq.s32.totalorder %s8, 0
    %p49 = por %p47, %p48
    %p50 = scmp.ne.s32.totalorder %s42, %s44
    %p51 = scmp.eq.s32.totalorder %s13, 1
    %p52 = por %p50, %p51
    %p53 = scmp.ne.s32.totalorder %s44, %s45
    %p54 = scmp.eq.s32.totalorder %s13, 0
    %p55 = por %p53, %p54
    %p56 = scmp.ne.s32.totalorder %s44, %s45
    %p57 = scmp.eq.s32.totalorder %s14, 1
    %p58 = por %p56, %p57
    %p60 = scmp.ne.s32.totalorder %s45, %s59
    %p61 = scmp.eq.s32.totalorder %s14, 0
    %p62 = por %p60, %p61
    %s63 = ssub.s32 %s8, %s15
    %p64 = scmp.eq.s32.totalorder %s63, 0
    %s66 = sadd.s32 %s65, 1
    %s67 = scalar_select %p64, %s65, %s66
    %p70 = pneg %p64
    %p71 = scmp.eq.s32.totalorder %s8, 1
    %p72 = por %p70, %p71
    %p73 = scmp.ne.s32.totalorder %s65, %s68
    %p74 = scmp.eq.s32.totalorder %s8, 0
    %p75 = por %p73, %p74
    %p76 = scmp.ne.s32.totalorder %s65, %s68
    %p77 = scmp.eq.s32.totalorder %s13, 1
    %p78 = por %p76, %p77
    %p79 = scmp.ne.s32.totalorder %s68, %s69
    %p80 = scmp.eq.s32.totalorder %s13, 0
    %p81 = por %p79, %p80
    %p82 = scmp.ne.s32.totalorder %s68, %s69
    %p83 = scmp.eq.s32.totalorder %s14, 1
    %p84 = por %p82, %p83
    %p86 = scmp.ne.s32.totalorder %s69, %s85
    %p87 = scmp.eq.s32.totalorder %s14, 0
    %p88 = por %p86, %p87
    %p89 = scmp.le.s32.totalorder 1, %s8
    %p90 = scmp.lt.s32.totalorder %s8, 3
    %p91 = pnand %p89, %p90
    %p92 = pneg %p91
    // Predicated region
    $region9: #{gcn_forward.3} parent=5 // pred_check
      _
    $region10: #{gcn_forward.3} parent=5 // pred_check_branch
      %94 = sbr.rel (%p91) target = $region12
    $region11: #{gcn_forward.3} parent=5 // pred_region
      %s95 = ssub.s32 %s8, 1
      // Predicated region
      $region13: #{gcn_forward.3} parent=11 // pred_check
        %p96 = pneg %p55
      $region14: #{gcn_forward.3} parent=11 // pred_check_branch
        %98 = sbr.rel (%p96) target = $region16
      $region15: #{gcn_forward.3} parent=11 // pred_region
        _
      $region16: #{gcn_forward.3} parent=11 // pred_fallthru
        _
    $region12: #{gcn_forward.3} parent=5 // pred_fallthru
      _
    %p99 = scmp.lt.s32.totalorder %s8, 2
    // Predicated region
    $region17: #{gcn_forward.3} parent=5 // pred_check
      %p100 = pneg %p99
    $region18: #{gcn_forward.3} parent=5 // pred_check_branch
      %102 = sbr.rel (%p100) target = $region20
    $region19: #{gcn_forward.3} parent=5 // pred_region
      // Predicated region
      $region21: #{gcn_forward.3} parent=19 // pred_check
        %p103 = pneg %p28
      $region22: #{gcn_forward.3} parent=19 // pred_check_branch
        %105 = sbr.rel (%p103) target = $region24
      $region23: #{gcn_forward.3} parent=19 // pred_region
        %s106 = smul.u32 32, %s8
        %p107 = scmp.lt.s32.totalorder %s106, 63
        %s108 = scalar_select %p107, %s106, 63
        %s109 = smul.addr %s108, 4
        %s110 = scalar_lea.vmem %s0, %s109
        %s111 = smul.u32 32, %s8
      $region24: #{gcn_forward.3} parent=19 // pred_fallthru
        _
    $region20: #{gcn_forward.3} parent=5 // pred_fallthru
      _
    %p112 = scmp.le.s32.totalorder 1, %s8
    %p113 = scmp.lt.s32.totalorder %s8, 3
    %p114 = pnand %p112, %p113
    %p115 = pneg %p114
    // Predicated region
    $region25: #{gcn_forward.3} parent=5 // pred_check
      _
    $region26: #{gcn_forward.3} parent=5 // pred_check_branch
      %117 = sbr.rel (%p114) target = $region28
    $region27: #{gcn_forward.3} parent=5 // pred_region
      %s118 = ssub.s32 %s8, 1
      %s119 = smul.u32 32, %s13
      %p120 = scmp.lt.s32.totalorder %s119, 63
      %s121 = scalar_select %p120, %s119, 63
      %s122 = smul.addr %s121, 4
      %s123 = scalar_lea.vmem %s0, %s122
      %p124 = pneg %p34
      %p125 = pneg %p31
      %p126 = pneg %p55
      %p127 = pneg %p52
      %p128 = pneg %p81
      %p129 = pneg %p78
      %s130 = smul.u32 32, %s13
      %p131 = scmp.lt.s32.totalorder %s130, 63
      %s132 = scalar_select %p131, %s130, 63
      %s133 = smul.addr %s132, 4
      %s134 = scalar_lea.vmem %s2, %s133
      %s135 = smul.u32 32, %s13
      %p136 = scmp.lt.s32.totalorder %s135, 63
      %s137 = scalar_select %p136, %s135, 63
      %s138 = smul.addr %s137, 4
      %s139 = scalar_lea.vmem %s0, %s138
      %s140 = smul.u32 32, %s13
      %s141 = smul.u32 32, %s13
      %p142 = scmp.lt.s32.totalorder %s141, 63
      %s143 = scalar_select %p142, %s141, 63
      %s144 = smul.addr %s143, 4
      %s145 = scalar_lea.vmem %s2, %s144
      %s146 = smul.u32 32, %s13
      %v147 = vld [vmem:[%s139] sm:$0xf]
      %v148 = vld [vmem:[%s139 + $0x4] sm:$0xf]
      %v149 = vld [vmem:[%s139 + $0x8] sm:$0xf]
      %v150 = vld [vmem:[%s139 + $0xc] sm:$0xf]
      %v151 = vld [vmem:[%s139 + $0x10] sm:$0xf]
      %v152 = vld [vmem:[%s139 + $0x14] sm:$0xf]
      %v153 = vld [vmem:[%s139 + $0x18] sm:$0xf]
      %v154 = vld [vmem:[%s139 + $0x1c] sm:$0xf]
      %v155 = vld [vmem:[%s139 + $0x20] sm:$0xf]
      %v156 = vld [vmem:[%s139 + $0x24] sm:$0xf]
      %v157 = vld [vmem:[%s139 + $0x28] sm:$0xf]
      %v158 = vld [vmem:[%s139 + $0x2c] sm:$0xf]
      %v159 = vld [vmem:[%s139 + $0x30] sm:$0xf]
      %v160 = vld [vmem:[%s139 + $0x34] sm:$0xf]
      %v161 = vld [vmem:[%s139 + $0x38] sm:$0xf]
      %v162 = vld [vmem:[%s139 + $0x3c] sm:$0xf]
      %v163 = vld [vmem:[%s139 + $0x40] sm:$0xf]
      %v164 = vld [vmem:[%s139 + $0x44] sm:$0xf]
      %v165 = vld [vmem:[%s139 + $0x48] sm:$0xf]
      %v166 = vld [vmem:[%s139 + $0x4c] sm:$0xf]
      %v167 = vld [vmem:[%s139 + $0x50] sm:$0xf]
      %v168 = vld [vmem:[%s139 + $0x54] sm:$0xf]
      %v169 = vld [vmem:[%s139 + $0x58] sm:$0xf]
      %v170 = vld [vmem:[%s139 + $0x5c] sm:$0xf]
      %v171 = vld [vmem:[%s139 + $0x60] sm:$0xf]
      %v172 = vld [vmem:[%s139 + $0x64] sm:$0xf]
      %v173 = vld [vmem:[%s139 + $0x68] sm:$0xf]
      %v174 = vld [vmem:[%s139 + $0x6c] sm:$0xf]
      %v175 = vld [vmem:[%s139 + $0x70] sm:$0xf]
      %v176 = vld [vmem:[%s139 + $0x74] sm:$0xf]
      %v177 = vld [vmem:[%s139 + $0x78] sm:$0xf]
      %v178 = vld [vmem:[%s139 + $0x7c] sm:$0xf]
      %v179 = vld [vmem:[%s1] sm:$0xf]
      %v180 = vld [vmem:[%s1 + $0x4] sm:$0xf]
      %v181 = vld [vmem:[%s1 + $0x8] sm:$0xf]
      %v182 = vld [vmem:[%s1 + $0xc] sm:$0xf]
      %v183 = vld [vmem:[%s1 + $0x10] sm:$0xf]
      %v184 = vld [vmem:[%s1 + $0x14] sm:$0xf]
      %v185 = vld [vmem:[%s1 + $0x18] sm:$0xf]
      %v186 = vld [vmem:[%s1 + $0x1c] sm:$0xf]
      %v187 = vld [vmem:[%s1 + $0x20] sm:$0xf]
      %v188 = vld [vmem:[%s1 + $0x24] sm:$0xf]
      %v189 = vld [vmem:[%s1 + $0x28] sm:$0xf]
      %v190 = vld [vmem:[%s1 + $0x2c] sm:$0xf]
      %v191 = vld [vmem:[%s1 + $0x30] sm:$0xf]
      %v192 = vld [vmem:[%s1 + $0x34] sm:$0xf]
      %v193 = vld [vmem:[%s1 + $0x38] sm:$0xf]
      %v194 = vld [vmem:[%s1 + $0x3c] sm:$0xf]
      %v227 = vunpack.c.l.b16 %v147
      %v228 = vunpack.c.l.b16 %v148
      %v229 = vunpack.c.l.b16 %v149
      %v230 = vunpack.c.l.b16 %v150
      %v231 = vunpack.c.l.b16 %v151
      %v232 = vunpack.c.l.b16 %v152
      %v233 = vunpack.c.l.b16 %v153
      %v234 = vunpack.c.l.b16 %v154
      %v235 = vunpack.c.l.b16 %v155
      %v236 = vunpack.c.l.b16 %v156
      %v237 = vunpack.c.l.b16 %v157
      %v238 = vunpack.c.l.b16 %v158
      %v239 = vunpack.c.l.b16 %v159
      %v240 = vunpack.c.l.b16 %v160
      %v241 = vunpack.c.l.b16 %v161
      %v242 = vunpack.c.l.b16 %v162
      %v243 = vunpack.c.l.b16 %v163
      %v244 = vunpack.c.l.b16 %v164
      %v245 = vunpack.c.l.b16 %v165
      %v246 = vunpack.c.l.b16 %v166
      %v247 = vunpack.c.l.b16 %v167
      %v248 = vunpack.c.l.b16 %v168
      %v249 = vunpack.c.l.b16 %v169
      %v250 = vunpack.c.l.b16 %v170
      %v251 = vunpack.c.l.b16 %v171
      %v252 = vunpack.c.l.b16 %v172
      %v253 = vunpack.c.l.b16 %v173
      %v254 = vunpack.c.l.b16 %v174
      %v255 = vunpack.c.l.b16 %v175
      %v256 = vunpack.c.l.b16 %v176
      %v257 = vunpack.c.l.b16 %v177
      %v258 = vunpack.c.l.b16 %v178
      %v259 = vpack.c.b16 %v228, %v227
      %v260 = vpack.c.b16 %v230, %v229
      %v261 = vpack.c.b16 %v232, %v231
      %v262 = vpack.c.b16 %v234, %v233
      %v263 = vpack.c.b16 %v236, %v235
      %v264 = vpack.c.b16 %v238, %v237
      %v265 = vpack.c.b16 %v240, %v239
      %v266 = vpack.c.b16 %v242, %v241
      %v267 = vpack.c.b16 %v244, %v243
      %v268 = vpack.c.b16 %v246, %v245
      %v269 = vpack.c.b16 %v248, %v247
      %v270 = vpack.c.b16 %v250, %v249
      %v271 = vpack.c.b16 %v252, %v251
      %v272 = vpack.c.b16 %v254, %v253
      %v273 = vpack.c.b16 %v256, %v255
      %v274 = vpack.c.b16 %v258, %v257
      %v307 = vunpack.c.l.b16 %v179
      %v308 = vunpack.c.l.b16 %v180
      %v309 = vunpack.c.l.b16 %v181
      %v310 = vunpack.c.l.b16 %v182
      %v311 = vunpack.c.l.b16 %v183
      %v312 = vunpack.c.l.b16 %v184
      %v313 = vunpack.c.l.b16 %v185
      %v314 = vunpack.c.l.b16 %v186
      %v315 = vunpack.c.l.b16 %v187
      %v316 = vunpack.c.l.b16 %v188
      %v317 = vunpack.c.l.b16 %v189
      %v318 = vunpack.c.l.b16 %v190
      %v319 = vunpack.c.l.b16 %v191
      %v320 = vunpack.c.l.b16 %v192
      %v321 = vunpack.c.l.b16 %v193
      %v322 = vunpack.c.l.b16 %v194
      %v323 = vpack.c.b16 %v308, %v307
      %v324 = vpack.c.b16 %v310, %v309
      %v325 = vpack.c.b16 %v312, %v311
      %v326 = vpack.c.b16 %v314, %v313
      %v327 = vpack.c.b16 %v316, %v315
      %v328 = vpack.c.b16 %v318, %v317
      %v329 = vpack.c.b16 %v320, %v319
      %v330 = vpack.c.b16 %v322, %v321
      %339 = vmatpush.bf16.msra.mxu0 %v330
      %340 = vmatpush.bf16.msra.mxu0 %v329
      %341 = vmatpush.bf16.msra.mxu0 %v328
      %342 = vmatpush.bf16.msra.mxu0 %v327
      %343 = vmatpush.bf16.msra.mxu0 %v326
      %344 = vmatpush.bf16.msra.mxu0 %v325
      %345 = vmatpush.bf16.msra.mxu0 %v324
      %346 = vmatpush.bf16.msra.mxu0 %v323
      %347 = vmatmul.bf16.gmra.mxu0 %v259
      %v348 = vpop.f32.mrf.mxu0
      %v349 = vadd.f32 0.0, %v348
      %v350 = vpop.f32.mrf.mxu0
      %v351 = vadd.f32 0.0, %v350
      %352 = vmatmul.bf16.gmra.mxu0 %v260
      %v353 = vpop.f32.mrf.mxu0
      %v354 = vadd.f32 0.0, %v353
      %v355 = vpop.f32.mrf.mxu0
      %v356 = vadd.f32 0.0, %v355
      %357 = vmatmul.bf16.gmra.mxu0 %v261
      %v358 = vpop.f32.mrf.mxu0
      %v359 = vadd.f32 0.0, %v358
      %v360 = vpop.f32.mrf.mxu0
      %v361 = vadd.f32 0.0, %v360
      %362 = vmatmul.bf16.gmra.mxu0 %v262
      %v363 = vpop.f32.mrf.mxu0
      %v364 = vadd.f32 0.0, %v363
      %v365 = vpop.f32.mrf.mxu0
      %v366 = vadd.f32 0.0, %v365
      %367 = vmatmul.bf16.gmra.mxu0 %v263
      %v368 = vpop.f32.mrf.mxu0
      %v369 = vadd.f32 0.0, %v368
      %v370 = vpop.f32.mrf.mxu0
      %v371 = vadd.f32 0.0, %v370
      %372 = vmatmul.bf16.gmra.mxu0 %v264
      %v373 = vpop.f32.mrf.mxu0
      %v374 = vadd.f32 0.0, %v373
      %v375 = vpop.f32.mrf.mxu0
      %v376 = vadd.f32 0.0, %v375
      %377 = vmatmul.bf16.gmra.mxu0 %v265
      %v378 = vpop.f32.mrf.mxu0
      %v379 = vadd.f32 0.0, %v378
      %v380 = vpop.f32.mrf.mxu0
      %v381 = vadd.f32 0.0, %v380
      %382 = vmatmul.bf16.gmra.mxu0 %v266
      %v383 = vpop.f32.mrf.mxu0
      %v384 = vadd.f32 0.0, %v383
      %v385 = vpop.f32.mrf.mxu0
      %v386 = vadd.f32 0.0, %v385
      %387 = vmatmul.bf16.gmra.mxu0 %v267
      %v388 = vpop.f32.mrf.mxu0
      %v389 = vadd.f32 0.0, %v388
      %v390 = vpop.f32.mrf.mxu0
      %v391 = vadd.f32 0.0, %v390
      %392 = vmatmul.bf16.gmra.mxu0 %v268
      %v393 = vpop.f32.mrf.mxu0
      %v394 = vadd.f32 0.0, %v393
      %v395 = vpop.f32.mrf.mxu0
      %v396 = vadd.f32 0.0, %v395
      %397 = vmatmul.bf16.gmra.mxu0 %v269
      %v398 = vpop.f32.mrf.mxu0
      %v399 = vadd.f32 0.0, %v398
      %v400 = vpop.f32.mrf.mxu0
      %v401 = vadd.f32 0.0, %v400
      %402 = vmatmul.bf16.gmra.mxu0 %v270
      %v403 = vpop.f32.mrf.mxu0
      %v404 = vadd.f32 0.0, %v403
      %v405 = vpop.f32.mrf.mxu0
      %v406 = vadd.f32 0.0, %v405
      %407 = vmatmul.bf16.gmra.mxu0 %v271
      %v408 = vpop.f32.mrf.mxu0
      %v409 = vadd.f32 0.0, %v408
      %v410 = vpop.f32.mrf.mxu0
      %v411 = vadd.f32 0.0, %v410
      %412 = vmatmul.bf16.gmra.mxu0 %v272
      %v413 = vpop.f32.mrf.mxu0
      %v414 = vadd.f32 0.0, %v413
      %v415 = vpop.f32.mrf.mxu0
      %v416 = vadd.f32 0.0, %v415
      %417 = vmatmul.bf16.gmra.mxu0 %v273
      %v418 = vpop.f32.mrf.mxu0
      %v419 = vadd.f32 0.0, %v418
      %v420 = vpop.f32.mrf.mxu0
      %v421 = vadd.f32 0.0, %v420
      %422 = vmatmul.bf16.gmra.mxu0 %v274
      %v423 = vpop.f32.mrf.mxu0
      %v424 = vadd.f32 0.0, %v423
      %v425 = vpop.f32.mrf.mxu0
      %v426 = vadd.f32 0.0, %v425
      %427 = vdwg.mxu0
      %v428 = vpack.c.bf16 %v349, %v349
      %v429 = vpack.c.bf16 %v351, %v351
      %v430 = vpack.c.bf16 %v354, %v354
      %v431 = vpack.c.bf16 %v356, %v356
      %v432 = vpack.c.bf16 %v359, %v359
      %v433 = vpack.c.bf16 %v361, %v361
      %v434 = vpack.c.bf16 %v364, %v364
      %v435 = vpack.c.bf16 %v366, %v366
      %v436 = vpack.c.bf16 %v369, %v369
      %v437 = vpack.c.bf16 %v371, %v371
      %v438 = vpack.c.bf16 %v374, %v374
      %v439 = vpack.c.bf16 %v376, %v376
      %v440 = vpack.c.bf16 %v379, %v379
      %v441 = vpack.c.bf16 %v381, %v381
      %v442 = vpack.c.bf16 %v384, %v384
      %v443 = vpack.c.bf16 %v386, %v386
      %v444 = vpack.c.bf16 %v389, %v389
      %v445 = vpack.c.bf16 %v391, %v391
      %v446 = vpack.c.bf16 %v394, %v394
      %v447 = vpack.c.bf16 %v396, %v396
      %v448 = vpack.c.bf16 %v399, %v399
      %v449 = vpack.c.bf16 %v401, %v401
      %v450 = vpack.c.bf16 %v404, %v404
      %v451 = vpack.c.bf16 %v406, %v406
      %v452 = vpack.c.bf16 %v409, %v409
      %v453 = vpack.c.bf16 %v411, %v411
      %v454 = vpack.c.bf16 %v414, %v414
      %v455 = vpack.c.bf16 %v416, %v416
      %v456 = vpack.c.bf16 %v419, %v419
      %v457 = vpack.c.bf16 %v421, %v421
      %v458 = vpack.c.bf16 %v424, %v424
      %v459 = vpack.c.bf16 %v426, %v426
      %460 = vst [vmem:[%s145] sm:$0xf] %v428
      %461 = vst [vmem:[%s145 + $0x4] sm:$0xf] %v429
      %462 = vst [vmem:[%s145 + $0x8] sm:$0xf] %v430
      %463 = vst [vmem:[%s145 + $0xc] sm:$0xf] %v431
      %464 = vst [vmem:[%s145 + $0x10] sm:$0xf] %v432
      %465 = vst [vmem:[%s145 + $0x14] sm:$0xf] %v433
      %466 = vst [vmem:[%s145 + $0x18] sm:$0xf] %v434
      %467 = vst [vmem:[%s145 + $0x1c] sm:$0xf] %v435
      %468 = vst [vmem:[%s145 + $0x20] sm:$0xf] %v436
      %469 = vst [vmem:[%s145 + $0x24] sm:$0xf] %v437
      %470 = vst [vmem:[%s145 + $0x28] sm:$0xf] %v438
      %471 = vst [vmem:[%s145 + $0x2c] sm:$0xf] %v439
      %472 = vst [vmem:[%s145 + $0x30] sm:$0xf] %v440
      %473 = vst [vmem:[%s145 + $0x34] sm:$0xf] %v441
      %474 = vst [vmem:[%s145 + $0x38] sm:$0xf] %v442
      %475 = vst [vmem:[%s145 + $0x3c] sm:$0xf] %v443
      %476 = vst [vmem:[%s145 + $0x40] sm:$0xf] %v444
      %477 = vst [vmem:[%s145 + $0x44] sm:$0xf] %v445
      %478 = vst [vmem:[%s145 + $0x48] sm:$0xf] %v446
      %479 = vst [vmem:[%s145 + $0x4c] sm:$0xf] %v447
      %480 = vst [vmem:[%s145 + $0x50] sm:$0xf] %v448
      %481 = vst [vmem:[%s145 + $0x54] sm:$0xf] %v449
      %482 = vst [vmem:[%s145 + $0x58] sm:$0xf] %v450
      %483 = vst [vmem:[%s145 + $0x5c] sm:$0xf] %v451
      %484 = vst [vmem:[%s145 + $0x60] sm:$0xf] %v452
      %485 = vst [vmem:[%s145 + $0x64] sm:$0xf] %v453
      %486 = vst [vmem:[%s145 + $0x68] sm:$0xf] %v454
      %487 = vst [vmem:[%s145 + $0x6c] sm:$0xf] %v455
      %488 = vst [vmem:[%s145 + $0x70] sm:$0xf] %v456
      %489 = vst [vmem:[%s145 + $0x74] sm:$0xf] %v457
      %490 = vst [vmem:[%s145 + $0x78] sm:$0xf] %v458
      %491 = vst [vmem:[%s145 + $0x7c] sm:$0xf] %v459
      %s492 = smul.u32 32, %s13
      %p493 = scmp.lt.s32.totalorder %s492, 63
      %s494 = scalar_select %p493, %s492, 63
      %s495 = smul.addr %s494, 4
      %s496 = scalar_lea.vmem %s2, %s495
      // Predicated region
      $region29: #{gcn_forward.3} parent=27 // pred_check
        %p497 = pneg %p78
      $region30: #{gcn_forward.3} parent=27 // pred_check_branch
        %499 = sbr.rel (%p497) target = $region32
      $region31: #{gcn_forward.3} parent=27 // pred_region
        %s500 = smul.u32 32, %s13
      $region32: #{gcn_forward.3} parent=27 // pred_fallthru
        _
    $region28: #{gcn_forward.3} parent=5 // pred_fallthru
      _
    %p501 = scmp.le.s32.totalorder 2, %s8
    // Predicated region
    $region33: #{gcn_forward.3} parent=5 // pred_check
      %p502 = pneg %p501
    $region34: #{gcn_forward.3} parent=5 // pred_check_branch
      %504 = sbr.rel (%p502) target = $region36
    $region35: #{gcn_forward.3} parent=5 // pred_region
      %s505 = ssub.s32 %s8, 2
      // Predicated region
      $region37: #{gcn_forward.3} parent=35 // pred_check
        %p506 = pneg %p84
      $region38: #{gcn_forward.3} parent=35 // pred_check_branch
        %508 = sbr.rel (%p506) target = $region40
      $region39: #{gcn_forward.3} parent=35 // pred_region
        %s509 = smul.u32 32, %s14
        %p510 = scmp.lt.s32.totalorder %s509, 63
        %s511 = scalar_select %p510, %s509, 63
        %s512 = smul.addr %s511, 4
        %s513 = scalar_lea.vmem %s2, %s512
      $region40: #{gcn_forward.3} parent=35 // pred_fallthru
        _
    $region36: #{gcn_forward.3} parent=5 // pred_fallthru
      _
  $region6: #{gcn_forward.3} parent=0 // loop_footer
    %s12 = sadd.s32 1, %s8
  $region7: #{gcn_forward.3} parent=0 // loop_footer_branch
    %7 = sbr.rel target = $region3
  $region8: #{gcn_forward.3} parent=0 // loop_exit
    _

// kernel: gcn_forward.4
$region0: #{gcn_forward.4}
  #allocation0 [shape = 'u32[]', space=smem, size = 0x4, offset = 0x4, fixed_abs, tag = 'smem constant byte address 0x4 - core index']
  #allocation1 [shape = 'u32[72,128]{1,0:T(1,128)}', space=vmem, size = 0x9000, scoped, tag = 'internal scratch']
  #allocation2 [shape = 'f32[256,128]{1,0:T(8,128)}', space=vmem, size = 0x20000, scoped, tag = 'scratch operand']
  %s0 = inlined_call_operand.vmem [shape: bf16[512,512], index: 0, kind: input, shape index: {}]
  %s1 = inlined_call_operand.vmem [shape: bf16[512,128], index: 1, kind: input, shape index: {}]
  %s2 = inlined_call_operand.vmem [shape: f32[1,128], index: 2, kind: input, shape index: {}]
  %s3 = inlined_call_operand.vmem [shape: bf16[128,128], index: 3, kind: input, shape index: {}]
  %s4 = inlined_call_operand.vmem [shape: bf16[512,128], index: 4, kind: output, shape index: {}]
  %s5 = sld [smem:[#allocation0]]
  $region61: #{gcn_forward.4} parent=0
    _
  %s7 = ssub.s32 1, %s5
  %s8 = scalar_select 0, %s7, %s5
  loop: start=0, step=1, limit=4
  $region2: #{gcn_forward.4} parent=0 // loop_pre_header
    _
  $region3: #{gcn_forward.4} parent=0 // loop_header
    %s10 = sphi 0, %s14
    %p11 = scmp.ge.s32.totalorder %s10, 4
    %s17 = sphi 0, %s29
    %s18 = sphi 0, %s25
    %s19 = sphi 0, %s17
    %s20 = sphi 0, %s18
    %s21 = sphi 0, %s19
    %s22 = sphi 0, %s20
    %s34 = sphi 0, %s36
    %s37 = sphi 0, %s34
    %s38 = sphi 0, %s37
    %s54 = sphi 0, %s38
    %s58 = sphi 0, %s58
    %s60 = sphi 0, %s58
    %s61 = sphi 0, %s60
    %s75 = sphi 0, %s61
    %s79 = sphi 0, %s79
    %s81 = sphi 0, %s79
    %s82 = sphi 0, %s81
    %s96 = sphi 0, %s82
    %s100 = sphi 0, %s100
    %s102 = sphi 0, %s100
    %s103 = sphi 0, %s102
    %s117 = sphi 0, %s103
    %s123 = sphi 0, %s125
    %s126 = sphi 0, %s123
    %s127 = sphi 0, %s126
    %s143 = sphi 0, %s127
  $region4: #{gcn_forward.4} parent=0 // loop_header_branch
    %13 = sbr.rel (%p11) target = $region8
  $region5: #{gcn_forward.4} parent=0 // loop_body
    %s15 = ssub.s32 %s10, 1
    %s16 = ssub.s32 %s10, 2
    %s23 = sadd.s32 1, %s18
    %p24 = scmp.ge.s32.totalorder %s23, 1
    %s25 = scalar_select %p24, 0, %s23
    %s26 = sadd.s32 1, %s17
    %s27 = scalar_select %p24, %s26, %s17
    %p28 = scmp.ge.s32.totalorder %s27, 2
    %s29 = scalar_select %p28, 0, %s27
    %s30 = ssub.s32 %s17, %s29
    %s31 = ssub.s32 %s18, %s25
    %s32 = sor.u32 %s30, %s31
    %p33 = scmp.eq.s32.totalorder %s32, 0
    %s35 = sadd.s32 %s34, 1
    %s36 = scalar_select %p33, %s34, %s35
    %p39 = pneg %p33
    %p40 = scmp.eq.s32.totalorder %s10, 1
    %p41 = por %p39, %p40
    %p42 = scmp.ne.s32.totalorder %s34, %s37
    %p43 = scmp.eq.s32.totalorder %s10, 0
    %p44 = por %p42, %p43
    %p45 = scmp.ne.s32.totalorder %s34, %s37
    %p46 = scmp.eq.s32.totalorder %s15, 1
    %p47 = por %p45, %p46
    %p48 = scmp.ne.s32.totalorder %s37, %s38
    %p49 = scmp.eq.s32.totalorder %s15, 0
    %p50 = por %p48, %p49
    %p51 = scmp.ne.s32.totalorder %s37, %s38
    %p52 = scmp.eq.s32.totalorder %s16, 1
    %p53 = por %p51, %p52
    %p55 = scmp.ne.s32.totalorder %s38, %s54
    %p56 = scmp.eq.s32.totalorder %s16, 0
    %p57 = por %p55, %p56
    %s59 = sadd.s32 %s58, 1
    %p62 = scmp.eq.s32.totalorder %s10, 1
    %p63 = scmp.ne.s32.totalorder %s58, %s60
    %p64 = scmp.eq.s32.totalorder %s10, 0
    %p65 = por %p63, %p64
    %p66 = scmp.ne.s32.totalorder %s58, %s60
    %p67 = scmp.eq.s32.totalorder %s15, 1
    %p68 = por %p66, %p67
    %p69 = scmp.ne.s32.totalorder %s60, %s61
    %p70 = scmp.eq.s32.totalorder %s15, 0
    %p71 = por %p69, %p70
    %p72 = scmp.ne.s32.totalorder %s60, %s61
    %p73 = scmp.eq.s32.totalorder %s16, 1
    %p74 = por %p72, %p73
    %p76 = scmp.ne.s32.totalorder %s61, %s75
    %p77 = scmp.eq.s32.totalorder %s16, 0
    %p78 = por %p76, %p77
    %s80 = sadd.s32 %s79, 1
    %p83 = scmp.eq.s32.totalorder %s10, 1
    %p84 = scmp.ne.s32.totalorder %s79, %s81
    %p85 = scmp.eq.s32.totalorder %s10, 0
    %p86 = por %p84, %p85
    %p87 = scmp.ne.s32.totalorder %s79, %s81
    %p88 = scmp.eq.s32.totalorder %s15, 1
    %p89 = por %p87, %p88
    %p90 = scmp.ne.s32.totalorder %s81, %s82
    %p91 = scmp.eq.s32.totalorder %s15, 0
    %p92 = por %p90, %p91
    %p93 = scmp.ne.s32.totalorder %s81, %s82
    %p94 = scmp.eq.s32.totalorder %s16, 1
    %p95 = por %p93, %p94
    %p97 = scmp.ne.s32.totalorder %s82, %s96
    %p98 = scmp.eq.s32.totalorder %s16, 0
    %p99 = por %p97, %p98
    %s101 = sadd.s32 %s100, 1
    %p104 = scmp.eq.s32.totalorder %s10, 1
    %p105 = scmp.ne.s32.totalorder %s100, %s102
    %p106 = scmp.eq.s32.totalorder %s10, 0
    %p107 = por %p105, %p106
    %p108 = scmp.ne.s32.totalorder %s100, %s102
    %p109 = scmp.eq.s32.totalorder %s15, 1
    %p110 = por %p108, %p109
    %p111 = scmp.ne.s32.totalorder %s102, %s103
    %p112 = scmp.eq.s32.totalorder %s15, 0
    %p113 = por %p111, %p112
    %p114 = scmp.ne.s32.totalorder %s102, %s103
    %p115 = scmp.eq.s32.totalorder %s16, 1
    %p116 = por %p114, %p115
    %p118 = scmp.ne.s32.totalorder %s103, %s117
    %p119 = scmp.eq.s32.totalorder %s16, 0
    %p120 = por %p118, %p119
    %s121 = ssub.s32 %s17, %s29
    %p122 = scmp.eq.s32.totalorder %s121, 0
    %s124 = sadd.s32 %s123, 1
    %s125 = scalar_select %p122, %s123, %s124
    %p128 = pneg %p122
    %p129 = scmp.eq.s32.totalorder %s10, 1
    %p130 = por %p128, %p129
    %p131 = scmp.ne.s32.totalorder %s123, %s126
    %p132 = scmp.eq.s32.totalorder %s10, 0
    %p133 = por %p131, %p132
    %p134 = scmp.ne.s32.totalorder %s123, %s126
    %p135 = scmp.eq.s32.totalorder %s15, 1
    %p136 = por %p134, %p135
    %p137 = scmp.ne.s32.totalorder %s126, %s127
    %p138 = scmp.eq.s32.totalorder %s15, 0
    %p139 = por %p137, %p138
    %p140 = scmp.ne.s32.totalorder %s126, %s127
    %p141 = scmp.eq.s32.totalorder %s16, 1
    %p142 = por %p140, %p141
    %p144 = scmp.ne.s32.totalorder %s127, %s143
    %p145 = scmp.eq.s32.totalorder %s16, 0
    %p146 = por %p144, %p145
    %p147 = scmp.le.s32.totalorder 1, %s10
    %p148 = scmp.lt.s32.totalorder %s10, 3
    %p149 = pnand %p147, %p148
    %p150 = pneg %p149
    // Predicated region
    $region9: #{gcn_forward.4} parent=5 // pred_check
      _
    $region10: #{gcn_forward.4} parent=5 // pred_check_branch
      %152 = sbr.rel (%p149) target = $region12
    $region11: #{gcn_forward.4} parent=5 // pred_region
      %s153 = ssub.s32 %s10, 1
      // Predicated region
      $region13: #{gcn_forward.4} parent=11 // pred_check
        %p154 = pneg %p71
      $region14: #{gcn_forward.4} parent=11 // pred_check_branch
        %156 = sbr.rel (%p154) target = $region16
      $region15: #{gcn_forward.4} parent=11 // pred_region
        _
      $region16: #{gcn_forward.4} parent=11 // pred_fallthru
        _
      // Predicated region
      $region17: #{gcn_forward.4} parent=11 // pred_check
        %p157 = pneg %p92
      $region18: #{gcn_forward.4} parent=11 // pred_check_branch
        %159 = sbr.rel (%p157) target = $region20
      $region19: #{gcn_forward.4} parent=11 // pred_region
        _
      $region20: #{gcn_forward.4} parent=11 // pred_fallthru
        _
      // Predicated region
      $region21: #{gcn_forward.4} parent=11 // pred_check
        %p160 = pneg %p113
      $region22: #{gcn_forward.4} parent=11 // pred_check_branch
        %162 = sbr.rel (%p160) target = $region24
      $region23: #{gcn_forward.4} parent=11 // pred_region
        _
      $region24: #{gcn_forward.4} parent=11 // pred_fallthru
        _
    $region12: #{gcn_forward.4} parent=5 // pred_fallthru
      _
    %p163 = scmp.lt.s32.totalorder %s10, 2
    // Predicated region
    $region25: #{gcn_forward.4} parent=5 // pred_check
      %p164 = pneg %p163
    $region26: #{gcn_forward.4} parent=5 // pred_check_branch
      %166 = sbr.rel (%p164) target = $region28
    $region27: #{gcn_forward.4} parent=5 // pred_region
      // Predicated region
      $region29: #{gcn_forward.4} parent=27 // pred_check
        %p167 = pneg %p44
      $region30: #{gcn_forward.4} parent=27 // pred_check_branch
        %169 = sbr.rel (%p167) target = $region32
      $region31: #{gcn_forward.4} parent=27 // pred_region
        %s170 = smul.u32 32, %s17
        %s171 = smul.u32 4, %s18
        %p172 = scmp.lt.s32.totalorder %s170, 63
        %s173 = scalar_select %p172, %s170, 63
        %p174 = scmp.lt.s32.totalorder %s171, 3
        %s175 = scalar_select %p174, %s171, 3
        %s176 = smul.addr %s173, 4
        %s177 = sadd.s32 %s175, %s176
        %s178 = smul.addr %s177, 4
        %s179 = scalar_lea.vmem %s0, %s178
        %s180 = smul.u32 32, %s17
        %s181 = smul.u32 4, %s18
      $region32: #{gcn_forward.4} parent=27 // pred_fallthru
        _
    $region28: #{gcn_forward.4} parent=5 // pred_fallthru
      _
    %p182 = scmp.le.s32.totalorder 1, %s10
    %p183 = scmp.lt.s32.totalorder %s10, 3
    %p184 = pnand %p182, %p183
    %p185 = pneg %p184
    // Predicated region
    $region33: #{gcn_forward.4} parent=5 // pred_check
      _
    $region34: #{gcn_forward.4} parent=5 // pred_check_branch
      %187 = sbr.rel (%p184) target = $region36
    $region35: #{gcn_forward.4} parent=5 // pred_region
      %s188 = ssub.s32 %s10, 1
      %s189 = smul.u32 32, %s19
      %s190 = smul.u32 4, %s20
      %p191 = scmp.lt.s32.totalorder %s189, 63
      %s192 = scalar_select %p191, %s189, 63
      %p193 = scmp.lt.s32.totalorder %s190, 3
      %s194 = scalar_select %p193, %s190, 3
      %s195 = smul.addr %s192, 4
      %s196 = sadd.s32 %s194, %s195
      %s197 = smul.addr %s196, 4
      %s198 = scalar_lea.vmem %s0, %s197
      %p199 = pneg %p50
      %p200 = pneg %p47
      %p201 = pneg %p71
      %p202 = pneg %p68
      %p203 = pneg %p92
      %p204 = pneg %p89
      %p205 = pneg %p113
      %p206 = pneg %p110
      %p207 = pneg %p139
      %p208 = pneg %p136
      %s209 = smul.u32 32, %s19
      %p210 = scmp.lt.s32.totalorder %s209, 63
      %s211 = scalar_select %p210, %s209, 63
      %s212 = smul.addr %s211, 4
      %s213 = scalar_lea.vmem %s4, %s212
      %s214 = smul.u32 32, %s19
      %s215 = smul.u32 4, %s20
      %p216 = scmp.lt.s32.totalorder %s214, 63
      %s217 = scalar_select %p216, %s214, 63
      %p218 = scmp.lt.s32.totalorder %s215, 3
      %s219 = scalar_select %p218, %s215, 3
      %s220 = smul.addr %s217, 4
      %s221 = sadd.s32 %s219, %s220
      %s222 = smul.addr %s221, 4
      %s223 = scalar_lea.vmem %s0, %s222
      %s224 = smul.u32 32, %s19
      %s225 = smul.u32 4, %s20
      %s226 = smul.u32 32, %s19
      %p227 = scmp.lt.s32.totalorder %s226, 63
      %s228 = scalar_select %p227, %s226, 63
      %s229 = smul.addr %s228, 4
      %s230 = scalar_lea.vmem %s4, %s229
      %s231 = smul.u32 32, %s19
      %s232 = smul.u32 %s20, 512
      %v233 = vld [vmem:[%s223] sm:$0xff]
      %v234 = vld [vmem:[%s223 + $0x8] sm:$0xff]
      %v235 = vld [vmem:[%s223 + $0x10] sm:$0xff]
      %v236 = vld [vmem:[%s223 + $0x18] sm:$0xff]
      %v237 = vld [vmem:[%s223 + $0x20] sm:$0xff]
      %v238 = vld [vmem:[%s223 + $0x28] sm:$0xff]
      %v239 = vld [vmem:[%s223 + $0x30] sm:$0xff]
      %v240 = vld [vmem:[%s223 + $0x38] sm:$0xff]
      %v241 = vld [vmem:[%s223 + $0x40] sm:$0xff]
      %v242 = vld [vmem:[%s223 + $0x48] sm:$0xff]
      %v243 = vld [vmem:[%s223 + $0x50] sm:$0xff]
      %v244 = vld [vmem:[%s223 + $0x58] sm:$0xff]
      %v245 = vld [vmem:[%s223 + $0x60] sm:$0xff]
      %v246 = vld [vmem:[%s223 + $0x68] sm:$0xff]
      %v247 = vld [vmem:[%s223 + $0x70] sm:$0xff]
      %v248 = vld [vmem:[%s223 + $0x78] sm:$0xff]
      %v249 = vld [vmem:[%s223 + $0x80] sm:$0xff]
      %v250 = vld [vmem:[%s223 + $0x88] sm:$0xff]
      %v251 = vld [vmem:[%s223 + $0x90] sm:$0xff]
      %v252 = vld [vmem:[%s223 + $0x98] sm:$0xff]
      %v253 = vld [vmem:[%s223 + $0xa0] sm:$0xff]
      %v254 = vld [vmem:[%s223 + $0xa8] sm:$0xff]
      %v255 = vld [vmem:[%s223 + $0xb0] sm:$0xff]
      %v256 = vld [vmem:[%s223 + $0xb8] sm:$0xff]
      %v257 = vld [vmem:[%s223 + $0xc0] sm:$0xff]
      %v258 = vld [vmem:[%s223 + $0xc8] sm:$0xff]
      %v259 = vld [vmem:[%s223 + $0xd0] sm:$0xff]
      %v260 = vld [vmem:[%s223 + $0xd8] sm:$0xff]
      %v261 = vld [vmem:[%s223 + $0xe0] sm:$0xff]
      %v262 = vld [vmem:[%s223 + $0xe8] sm:$0xff]
      %v263 = vld [vmem:[%s223 + $0xf0] sm:$0xff]
      %v264 = vld [vmem:[%s223 + $0xf8] sm:$0xff]
      %v265 = vld [vmem:[%s223 + $0x100] sm:$0xff]
      %v266 = vld [vmem:[%s223 + $0x108] sm:$0xff]
      %v267 = vld [vmem:[%s223 + $0x110] sm:$0xff]
      %v268 = vld [vmem:[%s223 + $0x118] sm:$0xff]
      %v269 = vld [vmem:[%s223 + $0x120] sm:$0xff]
      %v270 = vld [vmem:[%s223 + $0x128] sm:$0xff]
      %v271 = vld [vmem:[%s223 + $0x130] sm:$0xff]
      %v272 = vld [vmem:[%s223 + $0x138] sm:$0xff]
      %v273 = vld [vmem:[%s223 + $0x140] sm:$0xff]
      %v274 = vld [vmem:[%s223 + $0x148] sm:$0xff]
      %v275 = vld [vmem:[%s223 + $0x150] sm:$0xff]
      %v276 = vld [vmem:[%s223 + $0x158] sm:$0xff]
      %v277 = vld [vmem:[%s223 + $0x160] sm:$0xff]
      %v278 = vld [vmem:[%s223 + $0x168] sm:$0xff]
      %v279 = vld [vmem:[%s223 + $0x170] sm:$0xff]
      %v280 = vld [vmem:[%s223 + $0x178] sm:$0xff]
      %v281 = vld [vmem:[%s223 + $0x180] sm:$0xff]
      %v282 = vld [vmem:[%s223 + $0x188] sm:$0xff]
      %v283 = vld [vmem:[%s223 + $0x190] sm:$0xff]
      %v284 = vld [vmem:[%s223 + $0x198] sm:$0xff]
      %v285 = vld [vmem:[%s223 + $0x1a0] sm:$0xff]
      %v286 = vld [vmem:[%s223 + $0x1a8] sm:$0xff]
      %v287 = vld [vmem:[%s223 + $0x1b0] sm:$0xff]
      %v288 = vld [vmem:[%s223 + $0x1b8] sm:$0xff]
      %v289 = vld [vmem:[%s223 + $0x1c0] sm:$0xff]
      %v290 = vld [vmem:[%s223 + $0x1c8] sm:$0xff]
      %v291 = vld [vmem:[%s223 + $0x1d0] sm:$0xff]
      %v292 = vld [vmem:[%s223 + $0x1d8] sm:$0xff]
      %v293 = vld [vmem:[%s223 + $0x1e0] sm:$0xff]
      %v294 = vld [vmem:[%s223 + $0x1e8] sm:$0xff]
      %v295 = vld [vmem:[%s223 + $0x1f0] sm:$0xff]
      %v296 = vld [vmem:[%s223 + $0x1f8] sm:$0xff]
      %s297 = sshra.s32 %s232, 3
      %s298 = sand.u32 %s232, 7
      %s299 = smul.addr %s297, 4
      %s300 = scalar_lea.vmem %s1, %s299
      %v301 = vld [vmem:[%s300] sm:$0xf]
      %v302 = vld [vmem:[%s300 + $0x4] sm:$0xf]
      %v303 = vld [vmem:[%s300 + $0x8] sm:$0xf]
      %v304 = vld [vmem:[%s300 + $0xc] sm:$0xf]
      %v305 = vld [vmem:[%s300 + $0x10] sm:$0xf]
      %v306 = vld [vmem:[%s300 + $0x14] sm:$0xf]
      %v307 = vld [vmem:[%s300 + $0x18] sm:$0xf]
      %v308 = vld [vmem:[%s300 + $0x1c] sm:$0xf]
      %v309 = vld [vmem:[%s300 + $0x20] sm:$0xf]
      %v310 = vld [vmem:[%s300 + $0x24] sm:$0xf]
      %v311 = vld [vmem:[%s300 + $0x28] sm:$0xf]
      %v312 = vld [vmem:[%s300 + $0x2c] sm:$0xf]
      %v313 = vld [vmem:[%s300 + $0x30] sm:$0xf]
      %v314 = vld [vmem:[%s300 + $0x34] sm:$0xf]
      %v315 = vld [vmem:[%s300 + $0x38] sm:$0xf]
      %v316 = vld [vmem:[%s300 + $0x3c] sm:$0xf]
      %v317 = vld [vmem:[%s300 + $0x40] sm:$0xf]
      %v318 = vld [vmem:[%s300 + $0x44] sm:$0xf]
      %v319 = vld [vmem:[%s300 + $0x48] sm:$0xf]
      %v320 = vld [vmem:[%s300 + $0x4c] sm:$0xf]
      %v321 = vld [vmem:[%s300 + $0x50] sm:$0xf]
      %v322 = vld [vmem:[%s300 + $0x54] sm:$0xf]
      %v323 = vld [vmem:[%s300 + $0x58] sm:$0xf]
      %v324 = vld [vmem:[%s300 + $0x5c] sm:$0xf]
      %v325 = vld [vmem:[%s300 + $0x60] sm:$0xf]
      %v326 = vld [vmem:[%s300 + $0x64] sm:$0xf]
      %v327 = vld [vmem:[%s300 + $0x68] sm:$0xf]
      %v328 = vld [vmem:[%s300 + $0x6c] sm:$0xf]
      %v329 = vld [vmem:[%s300 + $0x70] sm:$0xf]
      %v330 = vld [vmem:[%s300 + $0x74] sm:$0xf]
      %v331 = vld [vmem:[%s300 + $0x78] sm:$0xf]
      %v332 = vld [vmem:[%s300 + $0x7c] sm:$0xf]
      %v333 = vld [vmem:[%s300 + $0x80] sm:$0xf]
      %v334 = vld [vmem:[%s300 + $0x84] sm:$0xf]
      %v335 = vld [vmem:[%s300 + $0x88] sm:$0xf]
      %v336 = vld [vmem:[%s300 + $0x8c] sm:$0xf]
      %v337 = vld [vmem:[%s300 + $0x90] sm:$0xf]
      %v338 = vld [vmem:[%s300 + $0x94] sm:$0xf]
      %v339 = vld [vmem:[%s300 + $0x98] sm:$0xf]
      %v340 = vld [vmem:[%s300 + $0x9c] sm:$0xf]
      %v341 = vld [vmem:[%s300 + $0xa0] sm:$0xf]
      %v342 = vld [vmem:[%s300 + $0xa4] sm:$0xf]
      %v343 = vld [vmem:[%s300 + $0xa8] sm:$0xf]
      %v344 = vld [vmem:[%s300 + $0xac] sm:$0xf]
      %v345 = vld [vmem:[%s300 + $0xb0] sm:$0xf]
      %v346 = vld [vmem:[%s300 + $0xb4] sm:$0xf]
      %v347 = vld [vmem:[%s300 + $0xb8] sm:$0xf]
      %v348 = vld [vmem:[%s300 + $0xbc] sm:$0xf]
      %v349 = vld [vmem:[%s300 + $0xc0] sm:$0xf]
      %v350 = vld [vmem:[%s300 + $0xc4] sm:$0xf]
      %v351 = vld [vmem:[%s300 + $0xc8] sm:$0xf]
      %v352 = vld [vmem:[%s300 + $0xcc] sm:$0xf]
      %v353 = vld [vmem:[%s300 + $0xd0] sm:$0xf]
      %v354 = vld [vmem:[%s300 + $0xd4] sm:$0xf]
      %v355 = vld [vmem:[%s300 + $0xd8] sm:$0xf]
      %v356 = vld [vmem:[%s300 + $0xdc] sm:$0xf]
      %v357 = vld [vmem:[%s300 + $0xe0] sm:$0xf]
      %v358 = vld [vmem:[%s300 + $0xe4] sm:$0xf]
      %v359 = vld [vmem:[%s300 + $0xe8] sm:$0xf]
      %v360 = vld [vmem:[%s300 + $0xec] sm:$0xf]
      %v361 = vld [vmem:[%s300 + $0xf0] sm:$0xf]
      %v362 = vld [vmem:[%s300 + $0xf4] sm:$0xf]
      %v363 = vld [vmem:[%s300 + $0xf8] sm:$0xf]
      %v364 = vld [vmem:[%s300 + $0xfc] sm:$0xf]
      %v429 = vunpack.c.l.b16 %v233
      %v430 = vunpack.c.h.b16 %v233
      %v431 = vunpack.c.l.b16 %v234
      %v432 = vunpack.c.h.b16 %v234
      %v433 = vunpack.c.l.b16 %v235
      %v434 = vunpack.c.h.b16 %v235
      %v435 = vunpack.c.l.b16 %v236
      %v436 = vunpack.c.h.b16 %v236
      %v437 = vunpack.c.l.b16 %v237
      %v438 = vunpack.c.h.b16 %v237
      %v439 = vunpack.c.l.b16 %v238
      %v440 = vunpack.c.h.b16 %v238
      %v441 = vunpack.c.l.b16 %v239
      %v442 = vunpack.c.h.b16 %v239
      %v443 = vunpack.c.l.b16 %v240
      %v444 = vunpack.c.h.b16 %v240
      %v445 = vunpack.c.l.b16 %v241
      %v446 = vunpack.c.h.b16 %v241
      %v447 = vunpack.c.l.b16 %v242
      %v448 = vunpack.c.h.b16 %v242
      %v449 = vunpack.c.l.b16 %v243
      %v450 = vunpack.c.h.b16 %v243
      %v451 = vunpack.c.l.b16 %v244
      %v452 = vunpack.c.h.b16 %v244
      %v453 = vunpack.c.l.b16 %v245
      %v454 = vunpack.c.h.b16 %v245
      %v455 = vunpack.c.l.b16 %v246
      %v456 = vunpack.c.h.b16 %v246
      %v457 = vunpack.c.l.b16 %v247
      %v458 = vunpack.c.h.b16 %v247
      %v459 = vunpack.c.l.b16 %v248
      %v460 = vunpack.c.h.b16 %v248
      %v461 = vunpack.c.l.b16 %v249
      %v462 = vunpack.c.h.b16 %v249
      %v463 = vunpack.c.l.b16 %v250
      %v464 = vunpack.c.h.b16 %v250
      %v465 = vunpack.c.l.b16 %v251
      %v466 = vunpack.c.h.b16 %v251
      %v467 = vunpack.c.l.b16 %v252
      %v468 = vunpack.c.h.b16 %v252
      %v469 = vunpack.c.l.b16 %v253
      %v470 = vunpack.c.h.b16 %v253
      %v471 = vunpack.c.l.b16 %v254
      %v472 = vunpack.c.h.b16 %v254
      %v473 = vunpack.c.l.b16 %v255
      %v474 = vunpack.c.h.b16 %v255
      %v475 = vunpack.c.l.b16 %v256
      %v476 = vunpack.c.h.b16 %v256
      %v477 = vunpack.c.l.b16 %v257
      %v478 = vunpack.c.h.b16 %v257
      %v479 = vunpack.c.l.b16 %v258
      %v480 = vunpack.c.h.b16 %v258
      %v481 = vunpack.c.l.b16 %v259
      %v482 = vunpack.c.h.b16 %v259
      %v483 = vunpack.c.l.b16 %v260
      %v484 = vunpack.c.h.b16 %v260
      %v485 = vunpack.c.l.b16 %v261
      %v486 = vunpack.c.h.b16 %v261
      %v487 = vunpack.c.l.b16 %v262
      %v488 = vunpack.c.h.b16 %v262
      %v489 = vunpack.c.l.b16 %v263
      %v490 = vunpack.c.h.b16 %v263
      %v491 = vunpack.c.l.b16 %v264
      %v492 = vunpack.c.h.b16 %v264
      %v493 = vunpack.c.l.b16 %v265
      %v494 = vunpack.c.h.b16 %v265
      %v495 = vunpack.c.l.b16 %v266
      %v496 = vunpack.c.h.b16 %v266
      %v497 = vunpack.c.l.b16 %v267
      %v498 = vunpack.c.h.b16 %v267
      %v499 = vunpack.c.l.b16 %v268
      %v500 = vunpack.c.h.b16 %v268
      %v501 = vunpack.c.l.b16 %v269
      %v502 = vunpack.c.h.b16 %v269
      %v503 = vunpack.c.l.b16 %v270
      %v504 = vunpack.c.h.b16 %v270
      %v505 = vunpack.c.l.b16 %v271
      %v506 = vunpack.c.h.b16 %v271
      %v507 = vunpack.c.l.b16 %v272
      %v508 = vunpack.c.h.b16 %v272
      %v509 = vunpack.c.l.b16 %v273
      %v510 = vunpack.c.h.b16 %v273
      %v511 = vunpack.c.l.b16 %v274
      %v512 = vunpack.c.h.b16 %v274
      %v513 = vunpack.c.l.b16 %v275
      %v514 = vunpack.c.h.b16 %v275
      %v515 = vunpack.c.l.b16 %v276
      %v516 = vunpack.c.h.b16 %v276
      %v517 = vunpack.c.l.b16 %v277
      %v518 = vunpack.c.h.b16 %v277
      %v519 = vunpack.c.l.b16 %v278
      %v520 = vunpack.c.h.b16 %v278
      %v521 = vunpack.c.l.b16 %v279
      %v522 = vunpack.c.h.b16 %v279
      %v523 = vunpack.c.l.b16 %v280
      %v524 = vunpack.c.h.b16 %v280
      %v525 = vunpack.c.l.b16 %v281
      %v526 = vunpack.c.h.b16 %v281
      %v527 = vunpack.c.l.b16 %v282
      %v528 = vunpack.c.h.b16 %v282
      %v529 = vunpack.c.l.b16 %v283
      %v530 = vunpack.c.h.b16 %v283
      %v531 = vunpack.c.l.b16 %v284
      %v532 = vunpack.c.h.b16 %v284
      %v533 = vunpack.c.l.b16 %v285
      %v534 = vunpack.c.h.b16 %v285
      %v535 = vunpack.c.l.b16 %v286
      %v536 = vunpack.c.h.b16 %v286
      %v537 = vunpack.c.l.b16 %v287
      %v538 = vunpack.c.h.b16 %v287
      %v539 = vunpack.c.l.b16 %v288
      %v540 = vunpack.c.h.b16 %v288
      %v541 = vunpack.c.l.b16 %v289
      %v542 = vunpack.c.h.b16 %v289
      %v543 = vunpack.c.l.b16 %v290
      %v544 = vunpack.c.h.b16 %v290
      %v545 = vunpack.c.l.b16 %v291
      %v546 = vunpack.c.h.b16 %v291
      %v547 = vunpack.c.l.b16 %v292
      %v548 = vunpack.c.h.b16 %v292
      %v549 = vunpack.c.l.b16 %v293
      %v550 = vunpack.c.h.b16 %v293
      %v551 = vunpack.c.l.b16 %v294
      %v552 = vunpack.c.h.b16 %v294
      %v553 = vunpack.c.l.b16 %v295
      %v554 = vunpack.c.h.b16 %v295
      %v555 = vunpack.c.l.b16 %v296
      %v556 = vunpack.c.h.b16 %v296
      %v557 = vpack.c.b16 %v433, %v429
      %v558 = vpack.c.b16 %v434, %v430
      %v559 = vpack.c.b16 %v435, %v431
      %v560 = vpack.c.b16 %v436, %v432
      %v561 = vpack.c.b16 %v441, %v437
      %v562 = vpack.c.b16 %v442, %v438
      %v563 = vpack.c.b16 %v443, %v439
      %v564 = vpack.c.b16 %v444, %v440
      %v565 = vpack.c.b16 %v449, %v445
      %v566 = vpack.c.b16 %v450, %v446
      %v567 = vpack.c.b16 %v451, %v447
      %v568 = vpack.c.b16 %v452, %v448
      %v569 = vpack.c.b16 %v457, %v453
      %v570 = vpack.c.b16 %v458, %v454
      %v571 = vpack.c.b16 %v459, %v455
      %v572 = vpack.c.b16 %v460, %v456
      %v573 = vpack.c.b16 %v465, %v461
      %v574 = vpack.c.b16 %v466, %v462
      %v575 = vpack.c.b16 %v467, %v463
      %v576 = vpack.c.b16 %v468, %v464
      %v577 = vpack.c.b16 %v473, %v469
      %v578 = vpack.c.b16 %v474, %v470
      %v579 = vpack.c.b16 %v475, %v471
      %v580 = vpack.c.b16 %v476, %v472
      %v581 = vpack.c.b16 %v481, %v477
      %v582 = vpack.c.b16 %v482, %v478
      %v583 = vpack.c.b16 %v483, %v479
      %v584 = vpack.c.b16 %v484, %v480
      %v585 = vpack.c.b16 %v489, %v485
      %v586 = vpack.c.b16 %v490, %v486
      %v587 = vpack.c.b16 %v491, %v487
      %v588 = vpack.c.b16 %v492, %v488
      %v589 = vpack.c.b16 %v497, %v493
      %v590 = vpack.c.b16 %v498, %v494
      %v591 = vpack.c.b16 %v499, %v495
      %v592 = vpack.c.b16 %v500, %v496
      %v593 = vpack.c.b16 %v505, %v501
      %v594 = vpack.c.b16 %v506, %v502
      %v595 = vpack.c.b16 %v507, %v503
      %v596 = vpack.c.b16 %v508, %v504
      %v597 = vpack.c.b16 %v513, %v509
      %v598 = vpack.c.b16 %v514, %v510
      %v599 = vpack.c.b16 %v515, %v511
      %v600 = vpack.c.b16 %v516, %v512
      %v601 = vpack.c.b16 %v521, %v517
      %v602 = vpack.c.b16 %v522, %v518
      %v603 = vpack.c.b16 %v523, %v519
      %v604 = vpack.c.b16 %v524, %v520
      %v605 = vpack.c.b16 %v529, %v525
      %v606 = vpack.c.b16 %v530, %v526
      %v607 = vpack.c.b16 %v531, %v527
      %v608 = vpack.c.b16 %v532, %v528
      %v609 = vpack.c.b16 %v537, %v533
      %v610 = vpack.c.b16 %v538, %v534
      %v611 = vpack.c.b16 %v539, %v535
      %v612 = vpack.c.b16 %v540, %v536
      %v613 = vpack.c.b16 %v545, %v541
      %v614 = vpack.c.b16 %v546, %v542
      %v615 = vpack.c.b16 %v547, %v543
      %v616 = vpack.c.b16 %v548, %v544
      %v617 = vpack.c.b16 %v553, %v549
      %v618 = vpack.c.b16 %v554, %v550
      %v619 = vpack.c.b16 %v555, %v551
      %v620 = vpack.c.b16 %v556, %v552
      %v749 = vunpack.c.l.b16 %v301
      %v750 = vunpack.c.l.b16 %v302
      %v751 = vunpack.c.l.b16 %v303
      %v752 = vunpack.c.l.b16 %v304
      %v753 = vunpack.c.l.b16 %v305
      %v754 = vunpack.c.l.b16 %v306
      %v755 = vunpack.c.l.b16 %v307
      %v756 = vunpack.c.l.b16 %v308
      %v757 = vunpack.c.l.b16 %v309
      %v758 = vunpack.c.l.b16 %v310
      %v759 = vunpack.c.l.b16 %v311
      %v760 = vunpack.c.l.b16 %v312
      %v761 = vunpack.c.l.b16 %v313
      %v762 = vunpack.c.l.b16 %v314
      %v763 = vunpack.c.l.b16 %v315
      %v764 = vunpack.c.l.b16 %v316
      %v765 = vunpack.c.l.b16 %v317
      %v766 = vunpack.c.l.b16 %v318
      %v767 = vunpack.c.l.b16 %v319
      %v768 = vunpack.c.l.b16 %v320
      %v769 = vunpack.c.l.b16 %v321
      %v770 = vunpack.c.l.b16 %v322
      %v771 = vunpack.c.l.b16 %v323
      %v772 = vunpack.c.l.b16 %v324
      %v773 = vunpack.c.l.b16 %v325
      %v774 = vunpack.c.l.b16 %v326
      %v775 = vunpack.c.l.b16 %v327
      %v776 = vunpack.c.l.b16 %v328
      %v777 = vunpack.c.l.b16 %v329
      %v778 = vunpack.c.l.b16 %v330
      %v779 = vunpack.c.l.b16 %v331
      %v780 = vunpack.c.l.b16 %v332
      %v781 = vunpack.c.l.b16 %v333
      %v782 = vunpack.c.l.b16 %v334
      %v783 = vunpack.c.l.b16 %v335
      %v784 = vunpack.c.l.b16 %v336
      %v785 = vunpack.c.l.b16 %v337
      %v786 = vunpack.c.l.b16 %v338
      %v787 = vunpack.c.l.b16 %v339
      %v788 = vunpack.c.l.b16 %v340
      %v789 = vunpack.c.l.b16 %v341
      %v790 = vunpack.c.l.b16 %v342
      %v791 = vunpack.c.l.b16 %v343
      %v792 = vunpack.c.l.b16 %v344
      %v793 = vunpack.c.l.b16 %v345
      %v794 = vunpack.c.l.b16 %v346
      %v795 = vunpack.c.l.b16 %v347
      %v796 = vunpack.c.l.b16 %v348
      %v797 = vunpack.c.l.b16 %v349
      %v798 = vunpack.c.l.b16 %v350
      %v799 = vunpack.c.l.b16 %v351
      %v800 = vunpack.c.l.b16 %v352
      %v801 = vunpack.c.l.b16 %v353
      %v802 = vunpack.c.l.b16 %v354
      %v803 = vunpack.c.l.b16 %v355
      %v804 = vunpack.c.l.b16 %v356
      %v805 = vunpack.c.l.b16 %v357
      %v806 = vunpack.c.l.b16 %v358
      %v807 = vunpack.c.l.b16 %v359
      %v808 = vunpack.c.l.b16 %v360
      %v809 = vunpack.c.l.b16 %v361
      %v810 = vunpack.c.l.b16 %v362
      %v811 = vunpack.c.l.b16 %v363
      %v812 = vunpack.c.l.b16 %v364
      %v813 = vpack.c.b16 %v750, %v749
      %v814 = vpack.c.b16 %v752, %v751
      %v815 = vpack.c.b16 %v754, %v753
      %v816 = vpack.c.b16 %v756, %v755
      %v817 = vpack.c.b16 %v758, %v757
      %v818 = vpack.c.b16 %v760, %v759
      %v819 = vpack.c.b16 %v762, %v761
      %v820 = vpack.c.b16 %v764, %v763
      %v821 = vpack.c.b16 %v766, %v765
      %v822 = vpack.c.b16 %v768, %v767
      %v823 = vpack.c.b16 %v770, %v769
      %v824 = vpack.c.b16 %v772, %v771
      %v825 = vpack.c.b16 %v774, %v773
      %v826 = vpack.c.b16 %v776, %v775
      %v827 = vpack.c.b16 %v778, %v777
      %v828 = vpack.c.b16 %v780, %v779
      %v829 = vpack.c.b16 %v782, %v781
      %v830 = vpack.c.b16 %v784, %v783
      %v831 = vpack.c.b16 %v786, %v785
      %v832 = vpack.c.b16 %v788, %v787
      %v833 = vpack.c.b16 %v790, %v789
      %v834 = vpack.c.b16 %v792, %v791
      %v835 = vpack.c.b16 %v794, %v793
      %v836 = vpack.c.b16 %v796, %v795
      %v837 = vpack.c.b16 %v798, %v797
      %v838 = vpack.c.b16 %v800, %v799
      %v839 = vpack.c.b16 %v802, %v801
      %v840 = vpack.c.b16 %v804, %v803
      %v841 = vpack.c.b16 %v806, %v805
      %v842 = vpack.c.b16 %v808, %v807
      %v843 = vpack.c.b16 %v810, %v809
      %v844 = vpack.c.b16 %v812, %v811
      %877 = vmatpush.bf16.msra.mxu0 %v820
      %878 = vmatpush.bf16.msra.mxu0 %v819
      %879 = vmatpush.bf16.msra.mxu0 %v818
      %880 = vmatpush.bf16.msra.mxu0 %v817
      %881 = vmatpush.bf16.msra.mxu0 %v816
      %882 = vmatpush.bf16.msra.mxu0 %v815
      %883 = vmatpush.bf16.msra.mxu0 %v814
      %884 = vmatpush.bf16.msra.mxu0 %v813
      %885 = vmatmul.bf16.gmra.mxu0 %v557
      %v886 = vpop.f32.mrf.mxu0
      %v887 = vadd.f32 0.0, %v886
      %v888 = vpop.f32.mrf.mxu0
      %v889 = vadd.f32 0.0, %v888
      %890 = vmatmul.bf16.gmra.mxu0 %v561
      %v891 = vpop.f32.mrf.mxu0
      %v892 = vadd.f32 0.0, %v891
      %v893 = vpop.f32.mrf.mxu0
      %v894 = vadd.f32 0.0, %v893
      %895 = vmatmul.bf16.gmra.mxu0 %v565
      %v896 = vpop.f32.mrf.mxu0
      %v897 = vadd.f32 0.0, %v896
      %v898 = vpop.f32.mrf.mxu0
      %v899 = vadd.f32 0.0, %v898
      %900 = vmatmul.bf16.gmra.mxu0 %v569
      %v901 = vpop.f32.mrf.mxu0
      %v902 = vadd.f32 0.0, %v901
      %v903 = vpop.f32.mrf.mxu0
      %v904 = vadd.f32 0.0, %v903
      %905 = vmatmul.bf16.gmra.mxu0 %v573
      %v906 = vpop.f32.mrf.mxu0
      %v907 = vadd.f32 0.0, %v906
      %v908 = vpop.f32.mrf.mxu0
      %v909 = vadd.f32 0.0, %v908
      %910 = vmatmul.bf16.gmra.mxu0 %v577
      %v911 = vpop.f32.mrf.mxu0
      %v912 = vadd.f32 0.0, %v911
      %v913 = vpop.f32.mrf.mxu0
      %v914 = vadd.f32 0.0, %v913
      %915 = vmatmul.bf16.gmra.mxu0 %v581
      %v916 = vpop.f32.mrf.mxu0
      %v917 = vadd.f32 0.0, %v916
      %v918 = vpop.f32.mrf.mxu0
      %v919 = vadd.f32 0.0, %v918
      %920 = vmatmul.bf16.gmra.mxu0 %v585
      %v921 = vpop.f32.mrf.mxu0
      %v922 = vadd.f32 0.0, %v921
      %v923 = vpop.f32.mrf.mxu0
      %v924 = vadd.f32 0.0, %v923
      %925 = vmatmul.bf16.gmra.mxu0 %v589
      %v926 = vpop.f32.mrf.mxu0
      %v927 = vadd.f32 0.0, %v926
      %v928 = vpop.f32.mrf.mxu0
      %v929 = vadd.f32 0.0, %v928
      %930 = vmatmul.bf16.gmra.mxu0 %v593
      %v931 = vpop.f32.mrf.mxu0
      %v932 = vadd.f32 0.0, %v931
      %v933 = vpop.f32.mrf.mxu0
      %v934 = vadd.f32 0.0, %v933
      %935 = vmatmul.bf16.gmra.mxu0 %v597
      %v936 = vpop.f32.mrf.mxu0
      %v937 = vadd.f32 0.0, %v936
      %v938 = vpop.f32.mrf.mxu0
      %v939 = vadd.f32 0.0, %v938
      %940 = vmatmul.bf16.gmra.mxu0 %v601
      %v941 = vpop.f32.mrf.mxu0
      %v942 = vadd.f32 0.0, %v941
      %v943 = vpop.f32.mrf.mxu0
      %v944 = vadd.f32 0.0, %v943
      %945 = vmatmul.bf16.gmra.mxu0 %v605
      %v946 = vpop.f32.mrf.mxu0
      %v947 = vadd.f32 0.0, %v946
      %v948 = vpop.f32.mrf.mxu0
      %v949 = vadd.f32 0.0, %v948
      %950 = vmatmul.bf16.gmra.mxu0 %v609
      %v951 = vpop.f32.mrf.mxu0
      %v952 = vadd.f32 0.0, %v951
      %v953 = vpop.f32.mrf.mxu0
      %v954 = vadd.f32 0.0, %v953
      %955 = vmatmul.bf16.gmra.mxu0 %v613
      %v956 = vpop.f32.mrf.mxu0
      %v957 = vadd.f32 0.0, %v956
      %v958 = vpop.f32.mrf.mxu0
      %v959 = vadd.f32 0.0, %v958
      %960 = vmatmul.bf16.gmra.mxu0 %v617
      %v961 = vpop.f32.mrf.mxu0
      %v962 = vadd.f32 0.0, %v961
      %v963 = vpop.f32.mrf.mxu0
      %v964 = vadd.f32 0.0, %v963
      %965 = vdwg.mxu0
      %966 = vmatpush.bf16.msra.mxu0 %v828
      %967 = vmatpush.bf16.msra.mxu0 %v827
      %968 = vmatpush.bf16.msra.mxu0 %v826
      %969 = vmatpush.bf16.msra.mxu0 %v825
      %970 = vmatpush.bf16.msra.mxu0 %v824
      %971 = vmatpush.bf16.msra.mxu0 %v823
      %972 = vmatpush.bf16.msra.mxu0 %v822
      %973 = vmatpush.bf16.msra.mxu0 %v821
      %974 = vmatmul.bf16.gmra.mxu0 %v558
      %v975 = vpop.f32.mrf.mxu0
      %v976 = vadd.f32 %v887, %v975
      %v977 = vpop.f32.mrf.mxu0
      %v978 = vadd.f32 %v889, %v977
      %979 = vmatmul.bf16.gmra.mxu0 %v562
      %v980 = vpop.f32.mrf.mxu0
      %v981 = vadd.f32 %v892, %v980
      %v982 = vpop.f32.mrf.mxu0
      %v983 = vadd.f32 %v894, %v982
      %984 = vmatmul.bf16.gmra.mxu0 %v566
      %v985 = vpop.f32.mrf.mxu0
      %v986 = vadd.f32 %v897, %v985
      %v987 = vpop.f32.mrf.mxu0
      %v988 = vadd.f32 %v899, %v987
      %989 = vmatmul.bf16.gmra.mxu0 %v570
      %v990 = vpop.f32.mrf.mxu0
      %v991 = vadd.f32 %v902, %v990
      %v992 = vpop.f32.mrf.mxu0
      %v993 = vadd.f32 %v904, %v992
      %994 = vmatmul.bf16.gmra.mxu0 %v574
      %v995 = vpop.f32.mrf.mxu0
      %v996 = vadd.f32 %v907, %v995
      %v997 = vpop.f32.mrf.mxu0
      %v998 = vadd.f32 %v909, %v997
      %999 = vmatmul.bf16.gmra.mxu0 %v578
      %v1000 = vpop.f32.mrf.mxu0
      %v1001 = vadd.f32 %v912, %v1000
      %v1002 = vpop.f32.mrf.mxu0
      %v1003 = vadd.f32 %v914, %v1002
      %1004 = vmatmul.bf16.gmra.mxu0 %v582
      %v1005 = vpop.f32.mrf.mxu0
      %v1006 = vadd.f32 %v917, %v1005
      %v1007 = vpop.f32.mrf.mxu0
      %v1008 = vadd.f32 %v919, %v1007
      %1009 = vmatmul.bf16.gmra.mxu0 %v586
      %v1010 = vpop.f32.mrf.mxu0
      %v1011 = vadd.f32 %v922, %v1010
      %v1012 = vpop.f32.mrf.mxu0
      %v1013 = vadd.f32 %v924, %v1012
      %1014 = vmatmul.bf16.gmra.mxu0 %v590
      %v1015 = vpop.f32.mrf.mxu0
      %v1016 = vadd.f32 %v927, %v1015
      %v1017 = vpop.f32.mrf.mxu0
      %v1018 = vadd.f32 %v929, %v1017
      %1019 = vmatmul.bf16.gmra.mxu0 %v594
      %v1020 = vpop.f32.mrf.mxu0
      %v1021 = vadd.f32 %v932, %v1020
      %v1022 = vpop.f32.mrf.mxu0
      %v1023 = vadd.f32 %v934, %v1022
      %1024 = vmatmul.bf16.gmra.mxu0 %v598
      %v1025 = vpop.f32.mrf.mxu0
      %v1026 = vadd.f32 %v937, %v1025
      %v1027 = vpop.f32.mrf.mxu0
      %v1028 = vadd.f32 %v939, %v1027
      %1029 = vmatmul.bf16.gmra.mxu0 %v602
      %v1030 = vpop.f32.mrf.mxu0
      %v1031 = vadd.f32 %v942, %v1030
      %v1032 = vpop.f32.mrf.mxu0
      %v1033 = vadd.f32 %v944, %v1032
      %1034 = vmatmul.bf16.gmra.mxu0 %v606
      %v1035 = vpop.f32.mrf.mxu0
      %v1036 = vadd.f32 %v947, %v1035
      %v1037 = vpop.f32.mrf.mxu0
      %v1038 = vadd.f32 %v949, %v1037
      %1039 = vmatmul.bf16.gmra.mxu0 %v610
      %v1040 = vpop.f32.mrf.mxu0
      %v1041 = vadd.f32 %v952, %v1040
      %v1042 = vpop.f32.mrf.mxu0
      %v1043 = vadd.f32 %v954, %v1042
      %1044 = vmatmul.bf16.gmra.mxu0 %v614
      %v1045 = vpop.f32.mrf.mxu0
      %v1046 = vadd.f32 %v957, %v1045
      %v1047 = vpop.f32.mrf.mxu0
      %v1048 = vadd.f32 %v959, %v1047
      %1049 = vmatmul.bf16.gmra.mxu0 %v618
      %v1050 = vpop.f32.mrf.mxu0
      %v1051 = vadd.f32 %v962, %v1050
      %v1052 = vpop.f32.mrf.mxu0
      %v1053 = vadd.f32 %v964, %v1052
      %1054 = vdwg.mxu0
      %1055 = vmatpush.bf16.msra.mxu0 %v836
      %1056 = vmatpush.bf16.msra.mxu0 %v835
      %1057 = vmatpush.bf16.msra.mxu0 %v834
      %1058 = vmatpush.bf16.msra.mxu0 %v833
      %1059 = vmatpush.bf16.msra.mxu0 %v832
      %1060 = vmatpush.bf16.msra.mxu0 %v831
      %1061 = vmatpush.bf16.msra.mxu0 %v830
      %1062 = vmatpush.bf16.msra.mxu0 %v829
      %1063 = vmatmul.bf16.gmra.mxu0 %v559
      %v1064 = vpop.f32.mrf.mxu0
      %v1065 = vadd.f32 %v976, %v1064
      %v1066 = vpop.f32.mrf.mxu0
      %v1067 = vadd.f32 %v978, %v1066
      %1068 = vmatmul.bf16.gmra.mxu0 %v563
      %v1069 = vpop.f32.mrf.mxu0
      %v1070 = vadd.f32 %v981, %v1069
      %v1071 = vpop.f32.mrf.mxu0
      %v1072 = vadd.f32 %v983, %v1071
      %1073 = vmatmul.bf16.gmra.mxu0 %v567
      %v1074 = vpop.f32.mrf.mxu0
      %v1075 = vadd.f32 %v986, %v1074
      %v1076 = vpop.f32.mrf.mxu0
      %v1077 = vadd.f32 %v988, %v1076
      %1078 = vmatmul.bf16.gmra.mxu0 %v571
      %v1079 = vpop.f32.mrf.mxu0
      %v1080 = vadd.f32 %v991, %v1079
      %v1081 = vpop.f32.mrf.mxu0
      %v1082 = vadd.f32 %v993, %v1081
      %1083 = vmatmul.bf16.gmra.mxu0 %v575
      %v1084 = vpop.f32.mrf.mxu0
      %v1085 = vadd.f32 %v996, %v1084
      %v1086 = vpop.f32.mrf.mxu0
      %v1087 = vadd.f32 %v998, %v1086
      %1088 = vmatmul.bf16.gmra.mxu0 %v579
      %v1089 = vpop.f32.mrf.mxu0
      %v1090 = vadd.f32 %v1001, %v1089
      %v1091 = vpop.f32.mrf.mxu0
      %v1092 = vadd.f32 %v1003, %v1091
      %1093 = vmatmul.bf16.gmra.mxu0 %v583
      %v1094 = vpop.f32.mrf.mxu0
      %v1095 = vadd.f32 %v1006, %v1094
      %v1096 = vpop.f32.mrf.mxu0
      %v1097 = vadd.f32 %v1008, %v1096
      %1098 = vmatmul.bf16.gmra.mxu0 %v587
      %v1099 = vpop.f32.mrf.mxu0
      %v1100 = vadd.f32 %v1011, %v1099
      %v1101 = vpop.f32.mrf.mxu0
      %v1102 = vadd.f32 %v1013, %v1101
      %1103 = vmatmul.bf16.gmra.mxu0 %v591
      %v1104 = vpop.f32.mrf.mxu0
      %v1105 = vadd.f32 %v1016, %v1104
      %v1106 = vpop.f32.mrf.mxu0
      %v1107 = vadd.f32 %v1018, %v1106
      %1108 = vmatmul.bf16.gmra.mxu0 %v595
      %v1109 = vpop.f32.mrf.mxu0
      %v1110 = vadd.f32 %v1021, %v1109
      %v1111 = vpop.f32.mrf.mxu0
      %v1112 = vadd.f32 %v1023, %v1111
      %1113 = vmatmul.bf16.gmra.mxu0 %v599
      %v1114 = vpop.f32.mrf.mxu0
      %v1115 = vadd.f32 %v1026, %v1114
      %v1116 = vpop.f32.mrf.mxu0
      %v1117 = vadd.f32 %v1028, %v1116
      %1118 = vmatmul.bf16.gmra.mxu0 %v603
      %v1119 = vpop.f32.mrf.mxu0
      %v1120 = vadd.f32 %v1031, %v1119
      %v1121 = vpop.f32.mrf.mxu0
      %v1122 = vadd.f32 %v1033, %v1121
      %1123 = vmatmul.bf16.gmra.mxu0 %v607
      %v1124 = vpop.f32.mrf.mxu0
      %v1125 = vadd.f32 %v1036, %v1124
      %v1126 = vpop.f32.mrf.mxu0
      %v1127 = vadd.f32 %v1038, %v1126
      %1128 = vmatmul.bf16.gmra.mxu0 %v611
      %v1129 = vpop.f32.mrf.mxu0
      %v1130 = vadd.f32 %v1041, %v1129
      %v1131 = vpop.f32.mrf.mxu0
      %v1132 = vadd.f32 %v1043, %v1131
      %1133 = vmatmul.bf16.gmra.mxu0 %v615
      %v1134 = vpop.f32.mrf.mxu0
      %v1135 = vadd.f32 %v1046, %v1134
      %v1136 = vpop.f32.mrf.mxu0
      %v1137 = vadd.f32 %v1048, %v1136
      %1138 = vmatmul.bf16.gmra.mxu0 %v619
      %v1139 = vpop.f32.mrf.mxu0
      %v1140 = vadd.f32 %v1051, %v1139
      %v1141 = vpop.f32.mrf.mxu0
      %v1142 = vadd.f32 %v1053, %v1141
      %1143 = vdwg.mxu0
      %1144 = vmatpush.bf16.msra.mxu0 %v844
      %1145 = vmatpush.bf16.msra.mxu0 %v843
      %1146 = vmatpush.bf16.msra.mxu0 %v842
      %1147 = vmatpush.bf16.msra.mxu0 %v841
      %1148 = vmatpush.bf16.msra.mxu0 %v840
      %1149 = vmatpush.bf16.msra.mxu0 %v839
      %1150 = vmatpush.bf16.msra.mxu0 %v838
      %1151 = vmatpush.bf16.msra.mxu0 %v837
      %1152 = vmatmul.bf16.gmra.mxu0 %v560
      %v1153 = vpop.f32.mrf.mxu0
      %v1154 = vadd.f32 %v1065, %v1153
      %v1155 = vpop.f32.mrf.mxu0
      %v1156 = vadd.f32 %v1067, %v1155
      %1157 = vmatmul.bf16.gmra.mxu0 %v564
      %v1158 = vpop.f32.mrf.mxu0
      %v1159 = vadd.f32 %v1070, %v1158
      %v1160 = vpop.f32.mrf.mxu0
      %v1161 = vadd.f32 %v1072, %v1160
      %1162 = vmatmul.bf16.gmra.mxu0 %v568
      %v1163 = vpop.f32.mrf.mxu0
      %v1164 = vadd.f32 %v1075, %v1163
      %v1165 = vpop.f32.mrf.mxu0
      %v1166 = vadd.f32 %v1077, %v1165
      %1167 = vmatmul.bf16.gmra.mxu0 %v572
      %v1168 = vpop.f32.mrf.mxu0
      %v1169 = vadd.f32 %v1080, %v1168
      %v1170 = vpop.f32.mrf.mxu0
      %v1171 = vadd.f32 %v1082, %v1170
      %1172 = vmatmul.bf16.gmra.mxu0 %v576
      %v1173 = vpop.f32.mrf.mxu0
      %v1174 = vadd.f32 %v1085, %v1173
      %v1175 = vpop.f32.mrf.mxu0
      %v1176 = vadd.f32 %v1087, %v1175
      %1177 = vmatmul.bf16.gmra.mxu0 %v580
      %v1178 = vpop.f32.mrf.mxu0
      %v1179 = vadd.f32 %v1090, %v1178
      %v1180 = vpop.f32.mrf.mxu0
      %v1181 = vadd.f32 %v1092, %v1180
      %1182 = vmatmul.bf16.gmra.mxu0 %v584
      %v1183 = vpop.f32.mrf.mxu0
      %v1184 = vadd.f32 %v1095, %v1183
      %v1185 = vpop.f32.mrf.mxu0
      %v1186 = vadd.f32 %v1097, %v1185
      %1187 = vmatmul.bf16.gmra.mxu0 %v588
      %v1188 = vpop.f32.mrf.mxu0
      %v1189 = vadd.f32 %v1100, %v1188
      %v1190 = vpop.f32.mrf.mxu0
      %v1191 = vadd.f32 %v1102, %v1190
      %1192 = vmatmul.bf16.gmra.mxu0 %v592
      %v1193 = vpop.f32.mrf.mxu0
      %v1194 = vadd.f32 %v1105, %v1193
      %v1195 = vpop.f32.mrf.mxu0
      %v1196 = vadd.f32 %v1107, %v1195
      %1197 = vmatmul.bf16.gmra.mxu0 %v596
      %v1198 = vpop.f32.mrf.mxu0
      %v1199 = vadd.f32 %v1110, %v1198
      %v1200 = vpop.f32.mrf.mxu0
      %v1201 = vadd.f32 %v1112, %v1200
      %1202 = vmatmul.bf16.gmra.mxu0 %v600
      %v1203 = vpop.f32.mrf.mxu0
      %v1204 = vadd.f32 %v1115, %v1203
      %v1205 = vpop.f32.mrf.mxu0
      %v1206 = vadd.f32 %v1117, %v1205
      %1207 = vmatmul.bf16.gmra.mxu0 %v604
      %v1208 = vpop.f32.mrf.mxu0
      %v1209 = vadd.f32 %v1120, %v1208
      %v1210 = vpop.f32.mrf.mxu0
      %v1211 = vadd.f32 %v1122, %v1210
      %1212 = vmatmul.bf16.gmra.mxu0 %v608
      %v1213 = vpop.f32.mrf.mxu0
      %v1214 = vadd.f32 %v1125, %v1213
      %v1215 = vpop.f32.mrf.mxu0
      %v1216 = vadd.f32 %v1127, %v1215
      %1217 = vmatmul.bf16.gmra.mxu0 %v612
      %v1218 = vpop.f32.mrf.mxu0
      %v1219 = vadd.f32 %v1130, %v1218
      %v1220 = vpop.f32.mrf.mxu0
      %v1221 = vadd.f32 %v1132, %v1220
      %1222 = vmatmul.bf16.gmra.mxu0 %v616
      %v1223 = vpop.f32.mrf.mxu0
      %v1224 = vadd.f32 %v1135, %v1223
      %v1225 = vpop.f32.mrf.mxu0
      %v1226 = vadd.f32 %v1137, %v1225
      %1227 = vmatmul.bf16.gmra.mxu0 %v620
      %v1228 = vpop.f32.mrf.mxu0
      %v1229 = vadd.f32 %v1140, %v1228
      %v1230 = vpop.f32.mrf.mxu0
      %v1231 = vadd.f32 %v1142, %v1230
      %1232 = vdwg.mxu0
      %p1233 = scmp.eq.s32.totalorder %s20, 0
      // Predicated region
      $region37: #{gcn_forward.4} parent=35 // pred_check
        %p1234 = pneg %p1233
      $region38: #{gcn_forward.4} parent=35 // pred_check_branch
        %1236 = sbr.rel (%p1234) target = $region40
      $region39: #{gcn_forward.4} parent=35 // pred_region
        %1237 = vst [vmem:[#allocation2] sm:$0xff] %v1154
        %1238 = vst [vmem:[#allocation2 + $0x8] sm:$0xff] %v1156
        %1239 = vst [vmem:[#allocation2 + $0x10] sm:$0xff] %v1159
        %1240 = vst [vmem:[#allocation2 + $0x18] sm:$0xff] %v1161
        %1241 = vst [vmem:[#allocation2 + $0x20] sm:$0xff] %v1164
        %1242 = vst [vmem:[#allocation2 + $0x28] sm:$0xff] %v1166
        %1243 = vst [vmem:[#allocation2 + $0x30] sm:$0xff] %v1169
        %1244 = vst [vmem:[#allocation2 + $0x38] sm:$0xff] %v1171
        %1245 = vst [vmem:[#allocation2 + $0x40] sm:$0xff] %v1174
        %1246 = vst [vmem:[#allocation2 + $0x48] sm:$0xff] %v1176
        %1247 = vst [vmem:[#allocation2 + $0x50] sm:$0xff] %v1179
        %1248 = vst [vmem:[#allocation2 + $0x58] sm:$0xff] %v1181
        %1249 = vst [vmem:[#allocation2 + $0x60] sm:$0xff] %v1184
        %1250 = vst [vmem:[#allocation2 + $0x68] sm:$0xff] %v1186
        %1251 = vst [vmem:[#allocation2 + $0x70] sm:$0xff] %v1189
        %1252 = vst [vmem:[#allocation2 + $0x78] sm:$0xff] %v1191
        %1253 = vst [vmem:[#allocation2 + $0x80] sm:$0xff] %v1194
        %1254 = vst [vmem:[#allocation2 + $0x88] sm:$0xff] %v1196
        %1255 = vst [vmem:[#allocation2 + $0x90] sm:$0xff] %v1199
        %1256 = vst [vmem:[#allocation2 + $0x98] sm:$0xff] %v1201
        %1257 = vst [vmem:[#allocation2 + $0xa0] sm:$0xff] %v1204
        %1258 = vst [vmem:[#allocation2 + $0xa8] sm:$0xff] %v1206
        %1259 = vst [vmem:[#allocation2 + $0xb0] sm:$0xff] %v1209
        %1260 = vst [vmem:[#allocation2 + $0xb8] sm:$0xff] %v1211
        %1261 = vst [vmem:[#allocation2 + $0xc0] sm:$0xff] %v1214
        %1262 = vst [vmem:[#allocation2 + $0xc8] sm:$0xff] %v1216
        %1263 = vst [vmem:[#allocation2 + $0xd0] sm:$0xff] %v1219
        %1264 = vst [vmem:[#allocation2 + $0xd8] sm:$0xff] %v1221
        %1265 = vst [vmem:[#allocation2 + $0xe0] sm:$0xff] %v1224
        %1266 = vst [vmem:[#allocation2 + $0xe8] sm:$0xff] %v1226
        %1267 = vst [vmem:[#allocation2 + $0xf0] sm:$0xff] %v1229
        %1268 = vst [vmem:[#allocation2 + $0xf8] sm:$0xff] %v1231
      $region40: #{gcn_forward.4} parent=35 // pred_fallthru
        _
      %p1269 = scmp.ne.s32.totalorder %s20, 0
      // Predicated region
      $region41: #{gcn_forward.4} parent=35 // pred_check
        %p1270 = pneg %p1269
      $region42: #{gcn_forward.4} parent=35 // pred_check_branch
        %1272 = sbr.rel (%p1270) target = $region44
      $region43: #{gcn_forward.4} parent=35 // pred_region
        %v1273 = vld [vmem:[#allocation2] sm:$0xff]
        %v1274 = vld [vmem:[#allocation2 + $0x8] sm:$0xff]
        %v1275 = vld [vmem:[#allocation2 + $0x10] sm:$0xff]
        %v1276 = vld [vmem:[#allocation2 + $0x18] sm:$0xff]
        %v1277 = vld [vmem:[#allocation2 + $0x20] sm:$0xff]
        %v1278 = vld [vmem:[#allocation2 + $0x28] sm:$0xff]
        %v1279 = vld [vmem:[#allocation2 + $0x30] sm:$0xff]
        %v1280 = vld [vmem:[#allocation2 + $0x38] sm:$0xff]
        %v1281 = vld [vmem:[#allocation2 + $0x40] sm:$0xff]
        %v1282 = vld [vmem:[#allocation2 + $0x48] sm:$0xff]
        %v1283 = vld [vmem:[#allocation2 + $0x50] sm:$0xff]
        %v1284 = vld [vmem:[#allocation2 + $0x58] sm:$0xff]
        %v1285 = vld [vmem:[#allocation2 + $0x60] sm:$0xff]
        %v1286 = vld [vmem:[#allocation2 + $0x68] sm:$0xff]
        %v1287 = vld [vmem:[#allocation2 + $0x70] sm:$0xff]
        %v1288 = vld [vmem:[#allocation2 + $0x78] sm:$0xff]
        %v1289 = vld [vmem:[#allocation2 + $0x80] sm:$0xff]
        %v1290 = vld [vmem:[#allocation2 + $0x88] sm:$0xff]
        %v1291 = vld [vmem:[#allocation2 + $0x90] sm:$0xff]
        %v1292 = vld [vmem:[#allocation2 + $0x98] sm:$0xff]
        %v1293 = vld [vmem:[#allocation2 + $0xa0] sm:$0xff]
        %v1294 = vld [vmem:[#allocation2 + $0xa8] sm:$0xff]
        %v1295 = vld [vmem:[#allocation2 + $0xb0] sm:$0xff]
        %v1296 = vld [vmem:[#allocation2 + $0xb8] sm:$0xff]
        %v1297 = vld [vmem:[#allocation2 + $0xc0] sm:$0xff]
        %v1298 = vld [vmem:[#allocation2 + $0xc8] sm:$0xff]
        %v1299 = vld [vmem:[#allocation2 + $0xd0] sm:$0xff]
        %v1300 = vld [vmem:[#allocation2 + $0xd8] sm:$0xff]
        %v1301 = vld [vmem:[#allocation2 + $0xe0] sm:$0xff]
        %v1302 = vld [vmem:[#allocation2 + $0xe8] sm:$0xff]
        %v1303 = vld [vmem:[#allocation2 + $0xf0] sm:$0xff]
        %v1304 = vld [vmem:[#allocation2 + $0xf8] sm:$0xff]
        %v1305 = vadd.f32 %v1273, %v1154
        %v1306 = vadd.f32 %v1274, %v1156
        %v1307 = vadd.f32 %v1275, %v1159
        %v1308 = vadd.f32 %v1276, %v1161
        %v1309 = vadd.f32 %v1277, %v1164
        %v1310 = vadd.f32 %v1278, %v1166
        %v1311 = vadd.f32 %v1279, %v1169
        %v1312 = vadd.f32 %v1280, %v1171
        %v1313 = vadd.f32 %v1281, %v1174
        %v1314 = vadd.f32 %v1282, %v1176
        %v1315 = vadd.f32 %v1283, %v1179
        %v1316 = vadd.f32 %v1284, %v1181
        %v1317 = vadd.f32 %v1285, %v1184
        %v1318 = vadd.f32 %v1286, %v1186
        %v1319 = vadd.f32 %v1287, %v1189
        %v1320 = vadd.f32 %v1288, %v1191
        %v1321 = vadd.f32 %v1289, %v1194
        %v1322 = vadd.f32 %v1290, %v1196
        %v1323 = vadd.f32 %v1291, %v1199
        %v1324 = vadd.f32 %v1292, %v1201
        %v1325 = vadd.f32 %v1293, %v1204
        %v1326 = vadd.f32 %v1294, %v1206
        %v1327 = vadd.f32 %v1295, %v1209
        %v1328 = vadd.f32 %v1296, %v1211
        %v1329 = vadd.f32 %v1297, %v1214
        %v1330 = vadd.f32 %v1298, %v1216
        %v1331 = vadd.f32 %v1299, %v1219
        %v1332 = vadd.f32 %v1300, %v1221
        %v1333 = vadd.f32 %v1301, %v1224
        %v1334 = vadd.f32 %v1302, %v1226
        %v1335 = vadd.f32 %v1303, %v1229
        %v1336 = vadd.f32 %v1304, %v1231
        %1337 = vst [vmem:[#allocation2] sm:$0xff] %v1305
        %1338 = vst [vmem:[#allocation2 + $0x8] sm:$0xff] %v1306
        %1339 = vst [vmem:[#allocation2 + $0x10] sm:$0xff] %v1307
        %1340 = vst [vmem:[#allocation2 + $0x18] sm:$0xff] %v1308
        %1341 = vst [vmem:[#allocation2 + $0x20] sm:$0xff] %v1309
        %1342 = vst [vmem:[#allocation2 + $0x28] sm:$0xff] %v1310
        %1343 = vst [vmem:[#allocation2 + $0x30] sm:$0xff] %v1311
        %1344 = vst [vmem:[#allocation2 + $0x38] sm:$0xff] %v1312
        %1345 = vst [vmem:[#allocation2 + $0x40] sm:$0xff] %v1313
        %1346 = vst [vmem:[#allocation2 + $0x48] sm:$0xff] %v1314
        %1347 = vst [vmem:[#allocation2 + $0x50] sm:$0xff] %v1315
        %1348 = vst [vmem:[#allocation2 + $0x58] sm:$0xff] %v1316
        %1349 = vst [vmem:[#allocation2 + $0x60] sm:$0xff] %v1317
        %1350 = vst [vmem:[#allocation2 + $0x68] sm:$0xff] %v1318
        %1351 = vst [vmem:[#allocation2 + $0x70] sm:$0xff] %v1319
        %1352 = vst [vmem:[#allocation2 + $0x78] sm:$0xff] %v1320
        %1353 = vst [vmem:[#allocation2 + $0x80] sm:$0xff] %v1321
        %1354 = vst [vmem:[#allocation2 + $0x88] sm:$0xff] %v1322
        %1355 = vst [vmem:[#allocation2 + $0x90] sm:$0xff] %v1323
        %1356 = vst [vmem:[#allocation2 + $0x98] sm:$0xff] %v1324
        %1357 = vst [vmem:[#allocation2 + $0xa0] sm:$0xff] %v1325
        %1358 = vst [vmem:[#allocation2 + $0xa8] sm:$0xff] %v1326
        %1359 = vst [vmem:[#allocation2 + $0xb0] sm:$0xff] %v1327
        %1360 = vst [vmem:[#allocation2 + $0xb8] sm:$0xff] %v1328
        %1361 = vst [vmem:[#allocation2 + $0xc0] sm:$0xff] %v1329
        %1362 = vst [vmem:[#allocation2 + $0xc8] sm:$0xff] %v1330
        %1363 = vst [vmem:[#allocation2 + $0xd0] sm:$0xff] %v1331
        %1364 = vst [vmem:[#allocation2 + $0xd8] sm:$0xff] %v1332
        %1365 = vst [vmem:[#allocation2 + $0xe0] sm:$0xff] %v1333
        %1366 = vst [vmem:[#allocation2 + $0xe8] sm:$0xff] %v1334
        %1367 = vst [vmem:[#allocation2 + $0xf0] sm:$0xff] %v1335
        %1368 = vst [vmem:[#allocation2 + $0xf8] sm:$0xff] %v1336
      $region44: #{gcn_forward.4} parent=35 // pred_fallthru
        _
      // Predicated region
      $region45: #{gcn_forward.4} parent=35 // pred_check
        %p1369 = pneg %p1233
      $region46: #{gcn_forward.4} parent=35 // pred_check_branch
        %1371 = sbr.rel (%p1369) target = $region48
      $region47: #{gcn_forward.4} parent=35 // pred_region
        %v1372 = vld [vmem:[#allocation2] sm:$0xff]
        %v1373 = vld [vmem:[#allocation2 + $0x8] sm:$0xff]
        %v1374 = vld [vmem:[#allocation2 + $0x10] sm:$0xff]
        %v1375 = vld [vmem:[#allocation2 + $0x18] sm:$0xff]
        %v1376 = vld [vmem:[#allocation2 + $0x20] sm:$0xff]
        %v1377 = vld [vmem:[#allocation2 + $0x28] sm:$0xff]
        %v1378 = vld [vmem:[#allocation2 + $0x30] sm:$0xff]
        %v1379 = vld [vmem:[#allocation2 + $0x38] sm:$0xff]
        %v1380 = vld [vmem:[#allocation2 + $0x40] sm:$0xff]
        %v1381 = vld [vmem:[#allocation2 + $0x48] sm:$0xff]
        %v1382 = vld [vmem:[#allocation2 + $0x50] sm:$0xff]
        %v1383 = vld [vmem:[#allocation2 + $0x58] sm:$0xff]
        %v1384 = vld [vmem:[#allocation2 + $0x60] sm:$0xff]
        %v1385 = vld [vmem:[#allocation2 + $0x68] sm:$0xff]
        %v1386 = vld [vmem:[#allocation2 + $0x70] sm:$0xff]
        %v1387 = vld [vmem:[#allocation2 + $0x78] sm:$0xff]
        %v1388 = vld [vmem:[#allocation2 + $0x80] sm:$0xff]
        %v1389 = vld [vmem:[#allocation2 + $0x88] sm:$0xff]
        %v1390 = vld [vmem:[#allocation2 + $0x90] sm:$0xff]
        %v1391 = vld [vmem:[#allocation2 + $0x98] sm:$0xff]
        %v1392 = vld [vmem:[#allocation2 + $0xa0] sm:$0xff]
        %v1393 = vld [vmem:[#allocation2 + $0xa8] sm:$0xff]
        %v1394 = vld [vmem:[#allocation2 + $0xb0] sm:$0xff]
        %v1395 = vld [vmem:[#allocation2 + $0xb8] sm:$0xff]
        %v1396 = vld [vmem:[#allocation2 + $0xc0] sm:$0xff]
        %v1397 = vld [vmem:[#allocation2 + $0xc8] sm:$0xff]
        %v1398 = vld [vmem:[#allocation2 + $0xd0] sm:$0xff]
        %v1399 = vld [vmem:[#allocation2 + $0xd8] sm:$0xff]
        %v1400 = vld [vmem:[#allocation2 + $0xe0] sm:$0xff]
        %v1401 = vld [vmem:[#allocation2 + $0xe8] sm:$0xff]
        %v1402 = vld [vmem:[#allocation2 + $0xf0] sm:$0xff]
        %v1403 = vld [vmem:[#allocation2 + $0xf8] sm:$0xff]
        %v1404 = vld [vmem:[%s2] sm:$0x1]
        %v1406 = vperm.slane %v1404, 0
        %v1408 = vadd.f32 %v1372, %v1406
        %v1409 = vadd.f32 %v1373, %v1406
        %v1410 = vadd.f32 %v1374, %v1406
        %v1411 = vadd.f32 %v1375, %v1406
        %v1412 = vadd.f32 %v1376, %v1406
        %v1413 = vadd.f32 %v1377, %v1406
        %v1414 = vadd.f32 %v1378, %v1406
        %v1415 = vadd.f32 %v1379, %v1406
        %v1416 = vadd.f32 %v1380, %v1406
        %v1417 = vadd.f32 %v1381, %v1406
        %v1418 = vadd.f32 %v1382, %v1406
        %v1419 = vadd.f32 %v1383, %v1406
        %v1420 = vadd.f32 %v1384, %v1406
        %v1421 = vadd.f32 %v1385, %v1406
        %v1422 = vadd.f32 %v1386, %v1406
        %v1423 = vadd.f32 %v1387, %v1406
        %v1424 = vadd.f32 %v1388, %v1406
        %v1425 = vadd.f32 %v1389, %v1406
        %v1426 = vadd.f32 %v1390, %v1406
        %v1427 = vadd.f32 %v1391, %v1406
        %v1428 = vadd.f32 %v1392, %v1406
        %v1429 = vadd.f32 %v1393, %v1406
        %v1430 = vadd.f32 %v1394, %v1406
        %v1431 = vadd.f32 %v1395, %v1406
        %v1432 = vadd.f32 %v1396, %v1406
        %v1433 = vadd.f32 %v1397, %v1406
        %v1434 = vadd.f32 %v1398, %v1406
        %v1435 = vadd.f32 %v1399, %v1406
        %v1436 = vadd.f32 %v1400, %v1406
        %v1437 = vadd.f32 %v1401, %v1406
        %v1438 = vadd.f32 %v1402, %v1406
        %v1439 = vadd.f32 %v1403, %v1406
        %v1440 = vmax.f32 %v1408, 0.0
        %v1441 = vmax.f32 %v1409, 0.0
        %v1442 = vmax.f32 %v1410, 0.0
        %v1443 = vmax.f32 %v1411, 0.0
        %v1444 = vmax.f32 %v1412, 0.0
        %v1445 = vmax.f32 %v1413, 0.0
        %v1446 = vmax.f32 %v1414, 0.0
        %v1447 = vmax.f32 %v1415, 0.0
        %v1448 = vmax.f32 %v1416, 0.0
        %v1449 = vmax.f32 %v1417, 0.0
        %v1450 = vmax.f32 %v1418, 0.0
        %v1451 = vmax.f32 %v1419, 0.0
        %v1452 = vmax.f32 %v1420, 0.0
        %v1453 = vmax.f32 %v1421, 0.0
        %v1454 = vmax.f32 %v1422, 0.0
        %v1455 = vmax.f32 %v1423, 0.0
        %v1456 = vmax.f32 %v1424, 0.0
        %v1457 = vmax.f32 %v1425, 0.0
        %v1458 = vmax.f32 %v1426, 0.0
        %v1459 = vmax.f32 %v1427, 0.0
        %v1460 = vmax.f32 %v1428, 0.0
        %v1461 = vmax.f32 %v1429, 0.0
        %v1462 = vmax.f32 %v1430, 0.0
        %v1463 = vmax.f32 %v1431, 0.0
        %v1464 = vmax.f32 %v1432, 0.0
        %v1465 = vmax.f32 %v1433, 0.0
        %v1466 = vmax.f32 %v1434, 0.0
        %v1467 = vmax.f32 %v1435, 0.0
        %v1468 = vmax.f32 %v1436, 0.0
        %v1469 = vmax.f32 %v1437, 0.0
        %v1470 = vmax.f32 %v1438, 0.0
        %v1471 = vmax.f32 %v1439, 0.0
        %v1472 = vpack.c.bf16 %v1441, %v1440
        %v1473 = vpack.c.bf16 %v1443, %v1442
        %v1474 = vpack.c.bf16 %v1445, %v1444
        %v1475 = vpack.c.bf16 %v1447, %v1446
        %v1476 = vpack.c.bf16 %v1449, %v1448
        %v1477 = vpack.c.bf16 %v1451, %v1450
        %v1478 = vpack.c.bf16 %v1453, %v1452
        %v1479 = vpack.c.bf16 %v1455, %v1454
        %v1480 = vpack.c.bf16 %v1457, %v1456
        %v1481 = vpack.c.bf16 %v1459, %v1458
        %v1482 = vpack.c.bf16 %v1461, %v1460
        %v1483 = vpack.c.bf16 %v1463, %v1462
        %v1484 = vpack.c.bf16 %v1465, %v1464
        %v1485 = vpack.c.bf16 %v1467, %v1466
        %v1486 = vpack.c.bf16 %v1469, %v1468
        %v1487 = vpack.c.bf16 %v1471, %v1470
        %v1488 = vld [vmem:[%s3] sm:$0xf]
        %v1489 = vld [vmem:[%s3 + $0x4] sm:$0xf]
        %v1490 = vld [vmem:[%s3 + $0x8] sm:$0xf]
        %v1491 = vld [vmem:[%s3 + $0xc] sm:$0xf]
        %v1492 = vld [vmem:[%s3 + $0x10] sm:$0xf]
        %v1493 = vld [vmem:[%s3 + $0x14] sm:$0xf]
        %v1494 = vld [vmem:[%s3 + $0x18] sm:$0xf]
        %v1495 = vld [vmem:[%s3 + $0x1c] sm:$0xf]
        %v1496 = vld [vmem:[%s3 + $0x20] sm:$0xf]
        %v1497 = vld [vmem:[%s3 + $0x24] sm:$0xf]
        %v1498 = vld [vmem:[%s3 + $0x28] sm:$0xf]
        %v1499 = vld [vmem:[%s3 + $0x2c] sm:$0xf]
        %v1500 = vld [vmem:[%s3 + $0x30] sm:$0xf]
        %v1501 = vld [vmem:[%s3 + $0x34] sm:$0xf]
        %v1502 = vld [vmem:[%s3 + $0x38] sm:$0xf]
        %v1503 = vld [vmem:[%s3 + $0x3c] sm:$0xf]
        %v1520 = vunpack.c.l.b16 %v1488
        %v1521 = vunpack.c.l.b16 %v1489
        %v1522 = vunpack.c.l.b16 %v1490
        %v1523 = vunpack.c.l.b16 %v1491
        %v1524 = vunpack.c.l.b16 %v1492
        %v1525 = vunpack.c.l.b16 %v1493
        %v1526 = vunpack.c.l.b16 %v1494
        %v1527 = vunpack.c.l.b16 %v1495
        %v1528 = vunpack.c.l.b16 %v1496
        %v1529 = vunpack.c.l.b16 %v1497
        %v1530 = vunpack.c.l.b16 %v1498
        %v1531 = vunpack.c.l.b16 %v1499
        %v1532 = vunpack.c.l.b16 %v1500
        %v1533 = vunpack.c.l.b16 %v1501
        %v1534 = vunpack.c.l.b16 %v1502
        %v1535 = vunpack.c.l.b16 %v1503
        %v1536 = vpack.c.b16 %v1521, %v1520
        %v1537 = vpack.c.b16 %v1523, %v1522
        %v1538 = vpack.c.b16 %v1525, %v1524
        %v1539 = vpack.c.b16 %v1527, %v1526
        %v1540 = vpack.c.b16 %v1529, %v1528
        %v1541 = vpack.c.b16 %v1531, %v1530
        %v1542 = vpack.c.b16 %v1533, %v1532
        %v1543 = vpack.c.b16 %v1535, %v1534
        %1552 = vmatpush.bf16.msra.mxu0 %v1543
        %1553 = vmatpush.bf16.msra.mxu0 %v1542
        %1554 = vmatpush.bf16.msra.mxu0 %v1541
        %1555 = vmatpush.bf16.msra.mxu0 %v1540
        %1556 = vmatpush.bf16.msra.mxu0 %v1539
        %1557 = vmatpush.bf16.msra.mxu0 %v1538
        %1558 = vmatpush.bf16.msra.mxu0 %v1537
        %1559 = vmatpush.bf16.msra.mxu0 %v1536
        %1560 = vmatmul.bf16.gmra.mxu0 %v1472
        %v1561 = vpop.f32.mrf.mxu0
        %v1562 = vadd.f32 0.0, %v1561
        %v1563 = vpop.f32.mrf.mxu0
        %v1564 = vadd.f32 0.0, %v1563
        %1565 = vmatmul.bf16.gmra.mxu0 %v1473
        %v1566 = vpop.f32.mrf.mxu0
        %v1567 = vadd.f32 0.0, %v1566
        %v1568 = vpop.f32.mrf.mxu0
        %v1569 = vadd.f32 0.0, %v1568
        %1570 = vmatmul.bf16.gmra.mxu0 %v1474
        %v1571 = vpop.f32.mrf.mxu0
        %v1572 = vadd.f32 0.0, %v1571
        %v1573 = vpop.f32.mrf.mxu0
        %v1574 = vadd.f32 0.0, %v1573
        %1575 = vmatmul.bf16.gmra.mxu0 %v1475
        %v1576 = vpop.f32.mrf.mxu0
        %v1577 = vadd.f32 0.0, %v1576
        %v1578 = vpop.f32.mrf.mxu0
        %v1579 = vadd.f32 0.0, %v1578
        %1580 = vmatmul.bf16.gmra.mxu0 %v1476
        %v1581 = vpop.f32.mrf.mxu0
        %v1582 = vadd.f32 0.0, %v1581
        %v1583 = vpop.f32.mrf.mxu0
        %v1584 = vadd.f32 0.0, %v1583
        %1585 = vmatmul.bf16.gmra.mxu0 %v1477
        %v1586 = vpop.f32.mrf.mxu0
        %v1587 = vadd.f32 0.0, %v1586
        %v1588 = vpop.f32.mrf.mxu0
        %v1589 = vadd.f32 0.0, %v1588
        %1590 = vmatmul.bf16.gmra.mxu0 %v1478
        %v1591 = vpop.f32.mrf.mxu0
        %v1592 = vadd.f32 0.0, %v1591
        %v1593 = vpop.f32.mrf.mxu0
        %v1594 = vadd.f32 0.0, %v1593
        %1595 = vmatmul.bf16.gmra.mxu0 %v1479
        %v1596 = vpop.f32.mrf.mxu0
        %v1597 = vadd.f32 0.0, %v1596
        %v1598 = vpop.f32.mrf.mxu0
        %v1599 = vadd.f32 0.0, %v1598
        %1600 = vmatmul.bf16.gmra.mxu0 %v1480
        %v1601 = vpop.f32.mrf.mxu0
        %v1602 = vadd.f32 0.0, %v1601
        %v1603 = vpop.f32.mrf.mxu0
        %v1604 = vadd.f32 0.0, %v1603
        %1605 = vmatmul.bf16.gmra.mxu0 %v1481
        %v1606 = vpop.f32.mrf.mxu0
        %v1607 = vadd.f32 0.0, %v1606
        %v1608 = vpop.f32.mrf.mxu0
        %v1609 = vadd.f32 0.0, %v1608
        %1610 = vmatmul.bf16.gmra.mxu0 %v1482
        %v1611 = vpop.f32.mrf.mxu0
        %v1612 = vadd.f32 0.0, %v1611
        %v1613 = vpop.f32.mrf.mxu0
        %v1614 = vadd.f32 0.0, %v1613
        %1615 = vmatmul.bf16.gmra.mxu0 %v1483
        %v1616 = vpop.f32.mrf.mxu0
        %v1617 = vadd.f32 0.0, %v1616
        %v1618 = vpop.f32.mrf.mxu0
        %v1619 = vadd.f32 0.0, %v1618
        %1620 = vmatmul.bf16.gmra.mxu0 %v1484
        %v1621 = vpop.f32.mrf.mxu0
        %v1622 = vadd.f32 0.0, %v1621
        %v1623 = vpop.f32.mrf.mxu0
        %v1624 = vadd.f32 0.0, %v1623
        %1625 = vmatmul.bf16.gmra.mxu0 %v1485
        %v1626 = vpop.f32.mrf.mxu0
        %v1627 = vadd.f32 0.0, %v1626
        %v1628 = vpop.f32.mrf.mxu0
        %v1629 = vadd.f32 0.0, %v1628
        %1630 = vmatmul.bf16.gmra.mxu0 %v1486
        %v1631 = vpop.f32.mrf.mxu0
        %v1632 = vadd.f32 0.0, %v1631
        %v1633 = vpop.f32.mrf.mxu0
        %v1634 = vadd.f32 0.0, %v1633
        %1635 = vmatmul.bf16.gmra.mxu0 %v1487
        %v1636 = vpop.f32.mrf.mxu0
        %v1637 = vadd.f32 0.0, %v1636
        %v1638 = vpop.f32.mrf.mxu0
        %v1639 = vadd.f32 0.0, %v1638
        %1640 = vdwg.mxu0
        %v1641 = vpack.c.bf16 %v1562, %v1562
        %v1642 = vpack.c.bf16 %v1564, %v1564
        %v1643 = vpack.c.bf16 %v1567, %v1567
        %v1644 = vpack.c.bf16 %v1569, %v1569
        %v1645 = vpack.c.bf16 %v1572, %v1572
        %v1646 = vpack.c.bf16 %v1574, %v1574
        %v1647 = vpack.c.bf16 %v1577, %v1577
        %v1648 = vpack.c.bf16 %v1579, %v1579
        %v1649 = vpack.c.bf16 %v1582, %v1582
        %v1650 = vpack.c.bf16 %v1584, %v1584
        %v1651 = vpack.c.bf16 %v1587, %v1587
        %v1652 = vpack.c.bf16 %v1589, %v1589
        %v1653 = vpack.c.bf16 %v1592, %v1592
        %v1654 = vpack.c.bf16 %v1594, %v1594
        %v1655 = vpack.c.bf16 %v1597, %v1597
        %v1656 = vpack.c.bf16 %v1599, %v1599
        %v1657 = vpack.c.bf16 %v1602, %v1602
        %v1658 = vpack.c.bf16 %v1604, %v1604
        %v1659 = vpack.c.bf16 %v1607, %v1607
        %v1660 = vpack.c.bf16 %v1609, %v1609
        %v1661 = vpack.c.bf16 %v1612, %v1612
        %v1662 = vpack.c.bf16 %v1614, %v1614
        %v1663 = vpack.c.bf16 %v1617, %v1617
        %v1664 = vpack.c.bf16 %v1619, %v1619
        %v1665 = vpack.c.bf16 %v1622, %v1622
        %v1666 = vpack.c.bf16 %v1624, %v1624
        %v1667 = vpack.c.bf16 %v1627, %v1627
        %v1668 = vpack.c.bf16 %v1629, %v1629
        %v1669 = vpack.c.bf16 %v1632, %v1632
        %v1670 = vpack.c.bf16 %v1634, %v1634
        %v1671 = vpack.c.bf16 %v1637, %v1637
        %v1672 = vpack.c.bf16 %v1639, %v1639
        %1673 = vst [vmem:[%s230] sm:$0xf] %v1641
        %1674 = vst [vmem:[%s230 + $0x4] sm:$0xf] %v1642
        %1675 = vst [vmem:[%s230 + $0x8] sm:$0xf] %v1643
        %1676 = vst [vmem:[%s230 + $0xc] sm:$0xf] %v1644
        %1677 = vst [vmem:[%s230 + $0x10] sm:$0xf] %v1645
        %1678 = vst [vmem:[%s230 + $0x14] sm:$0xf] %v1646
        %1679 = vst [vmem:[%s230 + $0x18] sm:$0xf] %v1647
        %1680 = vst [vmem:[%s230 + $0x1c] sm:$0xf] %v1648
        %1681 = vst [vmem:[%s230 + $0x20] sm:$0xf] %v1649
        %1682 = vst [vmem:[%s230 + $0x24] sm:$0xf] %v1650
        %1683 = vst [vmem:[%s230 + $0x28] sm:$0xf] %v1651
        %1684 = vst [vmem:[%s230 + $0x2c] sm:$0xf] %v1652
        %1685 = vst [vmem:[%s230 + $0x30] sm:$0xf] %v1653
        %1686 = vst [vmem:[%s230 + $0x34] sm:$0xf] %v1654
        %1687 = vst [vmem:[%s230 + $0x38] sm:$0xf] %v1655
        %1688 = vst [vmem:[%s230 + $0x3c] sm:$0xf] %v1656
        %1689 = vst [vmem:[%s230 + $0x40] sm:$0xf] %v1657
        %1690 = vst [vmem:[%s230 + $0x44] sm:$0xf] %v1658
        %1691 = vst [vmem:[%s230 + $0x48] sm:$0xf] %v1659
        %1692 = vst [vmem:[%s230 + $0x4c] sm:$0xf] %v1660
        %1693 = vst [vmem:[%s230 + $0x50] sm:$0xf] %v1661
        %1694 = vst [vmem:[%s230 + $0x54] sm:$0xf] %v1662
        %1695 = vst [vmem:[%s230 + $0x58] sm:$0xf] %v1663
        %1696 = vst [vmem:[%s230 + $0x5c] sm:$0xf] %v1664
        %1697 = vst [vmem:[%s230 + $0x60] sm:$0xf] %v1665
        %1698 = vst [vmem:[%s230 + $0x64] sm:$0xf] %v1666
        %1699 = vst [vmem:[%s230 + $0x68] sm:$0xf] %v1667
        %1700 = vst [vmem:[%s230 + $0x6c] sm:$0xf] %v1668
        %1701 = vst [vmem:[%s230 + $0x70] sm:$0xf] %v1669
        %1702 = vst [vmem:[%s230 + $0x74] sm:$0xf] %v1670
        %1703 = vst [vmem:[%s230 + $0x78] sm:$0xf] %v1671
        %1704 = vst [vmem:[%s230 + $0x7c] sm:$0xf] %v1672
      $region48: #{gcn_forward.4} parent=35 // pred_fallthru
        _
      %s1705 = smul.u32 32, %s19
      %p1706 = scmp.lt.s32.totalorder %s1705, 63
      %s1707 = scalar_select %p1706, %s1705, 63
      %s1708 = smul.addr %s1707, 4
      %s1709 = scalar_lea.vmem %s4, %s1708
      // Predicated region
      $region49: #{gcn_forward.4} parent=35 // pred_check
        %p1710 = pneg %p136
      $region50: #{gcn_forward.4} parent=35 // pred_check_branch
        %1712 = sbr.rel (%p1710) target = $region52
      $region51: #{gcn_forward.4} parent=35 // pred_region
        %s1713 = smul.u32 32, %s19
      $region52: #{gcn_forward.4} parent=35 // pred_fallthru
        _
    $region36: #{gcn_forward.4} parent=5 // pred_fallthru
      _
    %p1714 = scmp.le.s32.totalorder 2, %s10
    // Predicated region
    $region53: #{gcn_forward.4} parent=5 // pred_check
      %p1715 = pneg %p1714
    $region54: #{gcn_forward.4} parent=5 // pred_check_branch
      %1717 = sbr.rel (%p1715) target = $region56
    $region55: #{gcn_forward.4} parent=5 // pred_region
      %s1718 = ssub.s32 %s10, 2
      // Predicated region
      $region57: #{gcn_forward.4} parent=55 // pred_check
        %p1719 = pneg %p142
      $region58: #{gcn_forward.4} parent=55 // pred_check_branch
        %1721 = sbr.rel (%p1719) target = $region60
      $region59: #{gcn_forward.4} parent=55 // pred_region
        %s1722 = smul.u32 32, %s21
        %p1723 = scmp.lt.s32.totalorder %s1722, 63
        %s1724 = scalar_select %p1723, %s1722, 63
        %s1725 = smul.addr %s1724, 4
        %s1726 = scalar_lea.vmem %s4, %s1725
      $region60: #{gcn_forward.4} parent=55 // pred_fallthru
        _
    $region56: #{gcn_forward.4} parent=5 // pred_fallthru
      _
  $region6: #{gcn_forward.4} parent=0 // loop_footer
    %s14 = sadd.s32 1, %s10
  $region7: #{gcn_forward.4} parent=0 // loop_footer_branch
    %9 = sbr.rel target = $region3
  $region8: #{gcn_forward.4} parent=0 // loop_exit
    _

// kernel: gcn_forward.5
$region0: #{gcn_forward.5}
  #allocation0 [shape = 'u32[]', space=smem, size = 0x4, offset = 0x4, fixed_abs, tag = 'smem constant byte address 0x4 - core index']
  #allocation1 [shape = 'u32[72,128]{1,0:T(1,128)}', space=vmem, size = 0x9000, scoped, tag = 'internal scratch']
  #allocation2 [shape = 'f32[256,128]{1,0:T(8,128)}', space=vmem, size = 0x20000, scoped, tag = 'scratch operand']
  %s0 = inlined_call_operand.vmem [shape: bf16[512,512], index: 0, kind: input, shape index: {}]
  %s1 = inlined_call_operand.vmem [shape: bf16[512,128], index: 1, kind: input, shape index: {}]
  %s2 = inlined_call_operand.vmem [shape: f32[1,128], index: 2, kind: input, shape index: {}]
  %s3 = inlined_call_operand.vmem [shape: f32[512,128], index: 3, kind: output, shape index: {}]
  %s4 = sld [smem:[#allocation0]]
  $region57: #{gcn_forward.5} parent=0
    _
  %s6 = ssub.s32 1, %s4
  %s7 = scalar_select 0, %s6, %s4
  loop: start=0, step=1, limit=4
  $region2: #{gcn_forward.5} parent=0 // loop_pre_header
    _
  $region3: #{gcn_forward.5} parent=0 // loop_header
    %s9 = sphi 0, %s13
    %p10 = scmp.ge.s32.totalorder %s9, 4
    %s16 = sphi 0, %s28
    %s17 = sphi 0, %s24
    %s18 = sphi 0, %s16
    %s19 = sphi 0, %s17
    %s20 = sphi 0, %s18
    %s21 = sphi 0, %s19
    %s33 = sphi 0, %s35
    %s36 = sphi 0, %s33
    %s37 = sphi 0, %s36
    %s53 = sphi 0, %s37
    %s57 = sphi 0, %s57
    %s59 = sphi 0, %s57
    %s60 = sphi 0, %s59
    %s74 = sphi 0, %s60
    %s78 = sphi 0, %s78
    %s80 = sphi 0, %s78
    %s81 = sphi 0, %s80
    %s95 = sphi 0, %s81
    %s101 = sphi 0, %s103
    %s104 = sphi 0, %s101
    %s105 = sphi 0, %s104
    %s121 = sphi 0, %s105
  $region4: #{gcn_forward.5} parent=0 // loop_header_branch
    %12 = sbr.rel (%p10) target = $region8
  $region5: #{gcn_forward.5} parent=0 // loop_body
    %s14 = ssub.s32 %s9, 1
    %s15 = ssub.s32 %s9, 2
    %s22 = sadd.s32 1, %s17
    %p23 = scmp.ge.s32.totalorder %s22, 1
    %s24 = scalar_select %p23, 0, %s22
    %s25 = sadd.s32 1, %s16
    %s26 = scalar_select %p23, %s25, %s16
    %p27 = scmp.ge.s32.totalorder %s26, 2
    %s28 = scalar_select %p27, 0, %s26
    %s29 = ssub.s32 %s16, %s28
    %s30 = ssub.s32 %s17, %s24
    %s31 = sor.u32 %s29, %s30
    %p32 = scmp.eq.s32.totalorder %s31, 0
    %s34 = sadd.s32 %s33, 1
    %s35 = scalar_select %p32, %s33, %s34
    %p38 = pneg %p32
    %p39 = scmp.eq.s32.totalorder %s9, 1
    %p40 = por %p38, %p39
    %p41 = scmp.ne.s32.totalorder %s33, %s36
    %p42 = scmp.eq.s32.totalorder %s9, 0
    %p43 = por %p41, %p42
    %p44 = scmp.ne.s32.totalorder %s33, %s36
    %p45 = scmp.eq.s32.totalorder %s14, 1
    %p46 = por %p44, %p45
    %p47 = scmp.ne.s32.totalorder %s36, %s37
    %p48 = scmp.eq.s32.totalorder %s14, 0
    %p49 = por %p47, %p48
    %p50 = scmp.ne.s32.totalorder %s36, %s37
    %p51 = scmp.eq.s32.totalorder %s15, 1
    %p52 = por %p50, %p51
    %p54 = scmp.ne.s32.totalorder %s37, %s53
    %p55 = scmp.eq.s32.totalorder %s15, 0
    %p56 = por %p54, %p55
    %s58 = sadd.s32 %s57, 1
    %p61 = scmp.eq.s32.totalorder %s9, 1
    %p62 = scmp.ne.s32.totalorder %s57, %s59
    %p63 = scmp.eq.s32.totalorder %s9, 0
    %p64 = por %p62, %p63
    %p65 = scmp.ne.s32.totalorder %s57, %s59
    %p66 = scmp.eq.s32.totalorder %s14, 1
    %p67 = por %p65, %p66
    %p68 = scmp.ne.s32.totalorder %s59, %s60
    %p69 = scmp.eq.s32.totalorder %s14, 0
    %p70 = por %p68, %p69
    %p71 = scmp.ne.s32.totalorder %s59, %s60
    %p72 = scmp.eq.s32.totalorder %s15, 1
    %p73 = por %p71, %p72
    %p75 = scmp.ne.s32.totalorder %s60, %s74
    %p76 = scmp.eq.s32.totalorder %s15, 0
    %p77 = por %p75, %p76
    %s79 = sadd.s32 %s78, 1
    %p82 = scmp.eq.s32.totalorder %s9, 1
    %p83 = scmp.ne.s32.totalorder %s78, %s80
    %p84 = scmp.eq.s32.totalorder %s9, 0
    %p85 = por %p83, %p84
    %p86 = scmp.ne.s32.totalorder %s78, %s80
    %p87 = scmp.eq.s32.totalorder %s14, 1
    %p88 = por %p86, %p87
    %p89 = scmp.ne.s32.totalorder %s80, %s81
    %p90 = scmp.eq.s32.totalorder %s14, 0
    %p91 = por %p89, %p90
    %p92 = scmp.ne.s32.totalorder %s80, %s81
    %p93 = scmp.eq.s32.totalorder %s15, 1
    %p94 = por %p92, %p93
    %p96 = scmp.ne.s32.totalorder %s81, %s95
    %p97 = scmp.eq.s32.totalorder %s15, 0
    %p98 = por %p96, %p97
    %s99 = ssub.s32 %s16, %s28
    %p100 = scmp.eq.s32.totalorder %s99, 0
    %s102 = sadd.s32 %s101, 1
    %s103 = scalar_select %p100, %s101, %s102
    %p106 = pneg %p100
    %p107 = scmp.eq.s32.totalorder %s9, 1
    %p108 = por %p106, %p107
    %p109 = scmp.ne.s32.totalorder %s101, %s104
    %p110 = scmp.eq.s32.totalorder %s9, 0
    %p111 = por %p109, %p110
    %p112 = scmp.ne.s32.totalorder %s101, %s104
    %p113 = scmp.eq.s32.totalorder %s14, 1
    %p114 = por %p112, %p113
    %p115 = scmp.ne.s32.totalorder %s104, %s105
    %p116 = scmp.eq.s32.totalorder %s14, 0
    %p117 = por %p115, %p116
    %p118 = scmp.ne.s32.totalorder %s104, %s105
    %p119 = scmp.eq.s32.totalorder %s15, 1
    %p120 = por %p118, %p119
    %p122 = scmp.ne.s32.totalorder %s105, %s121
    %p123 = scmp.eq.s32.totalorder %s15, 0
    %p124 = por %p122, %p123
    %p125 = scmp.le.s32.totalorder 1, %s9
    %p126 = scmp.lt.s32.totalorder %s9, 3
    %p127 = pnand %p125, %p126
    %p128 = pneg %p127
    // Predicated region
    $region9: #{gcn_forward.5} parent=5 // pred_check
      _
    $region10: #{gcn_forward.5} parent=5 // pred_check_branch
      %130 = sbr.rel (%p127) target = $region12
    $region11: #{gcn_forward.5} parent=5 // pred_region
      %s131 = ssub.s32 %s9, 1
      // Predicated region
      $region13: #{gcn_forward.5} parent=11 // pred_check
        %p132 = pneg %p70
      $region14: #{gcn_forward.5} parent=11 // pred_check_branch
        %134 = sbr.rel (%p132) target = $region16
      $region15: #{gcn_forward.5} parent=11 // pred_region
        _
      $region16: #{gcn_forward.5} parent=11 // pred_fallthru
        _
      // Predicated region
      $region17: #{gcn_forward.5} parent=11 // pred_check
        %p135 = pneg %p91
      $region18: #{gcn_forward.5} parent=11 // pred_check_branch
        %137 = sbr.rel (%p135) target = $region20
      $region19: #{gcn_forward.5} parent=11 // pred_region
        _
      $region20: #{gcn_forward.5} parent=11 // pred_fallthru
        _
    $region12: #{gcn_forward.5} parent=5 // pred_fallthru
      _
    %p138 = scmp.lt.s32.totalorder %s9, 2
    // Predicated region
    $region21: #{gcn_forward.5} parent=5 // pred_check
      %p139 = pneg %p138
    $region22: #{gcn_forward.5} parent=5 // pred_check_branch
      %141 = sbr.rel (%p139) target = $region24
    $region23: #{gcn_forward.5} parent=5 // pred_region
      // Predicated region
      $region25: #{gcn_forward.5} parent=23 // pred_check
        %p142 = pneg %p43
      $region26: #{gcn_forward.5} parent=23 // pred_check_branch
        %144 = sbr.rel (%p142) target = $region28
      $region27: #{gcn_forward.5} parent=23 // pred_region
        %s145 = smul.u32 32, %s16
        %s146 = smul.u32 4, %s17
        %p147 = scmp.lt.s32.totalorder %s145, 63
        %s148 = scalar_select %p147, %s145, 63
        %p149 = scmp.lt.s32.totalorder %s146, 3
        %s150 = scalar_select %p149, %s146, 3
        %s151 = smul.addr %s148, 4
        %s152 = sadd.s32 %s150, %s151
        %s153 = smul.addr %s152, 4
        %s154 = scalar_lea.vmem %s0, %s153
        %s155 = smul.u32 32, %s16
        %s156 = smul.u32 4, %s17
      $region28: #{gcn_forward.5} parent=23 // pred_fallthru
        _
    $region24: #{gcn_forward.5} parent=5 // pred_fallthru
      _
    %p157 = scmp.le.s32.totalorder 1, %s9
    %p158 = scmp.lt.s32.totalorder %s9, 3
    %p159 = pnand %p157, %p158
    %p160 = pneg %p159
    // Predicated region
    $region29: #{gcn_forward.5} parent=5 // pred_check
      _
    $region30: #{gcn_forward.5} parent=5 // pred_check_branch
      %162 = sbr.rel (%p159) target = $region32
    $region31: #{gcn_forward.5} parent=5 // pred_region
      %s163 = ssub.s32 %s9, 1
      %s164 = smul.u32 32, %s18
      %s165 = smul.u32 4, %s19
      %p166 = scmp.lt.s32.totalorder %s164, 63
      %s167 = scalar_select %p166, %s164, 63
      %p168 = scmp.lt.s32.totalorder %s165, 3
      %s169 = scalar_select %p168, %s165, 3
      %s170 = smul.addr %s167, 4
      %s171 = sadd.s32 %s169, %s170
      %s172 = smul.addr %s171, 4
      %s173 = scalar_lea.vmem %s0, %s172
      %p174 = pneg %p49
      %p175 = pneg %p46
      %p176 = pneg %p70
      %p177 = pneg %p67
      %p178 = pneg %p91
      %p179 = pneg %p88
      %p180 = pneg %p117
      %p181 = pneg %p114
      %s182 = smul.u32 32, %s18
      %p183 = scmp.lt.s32.totalorder %s182, 63
      %s184 = scalar_select %p183, %s182, 63
      %s185 = smul.addr %s184, 8
      %s186 = scalar_lea.vmem %s3, %s185
      %s187 = smul.u32 32, %s18
      %s188 = smul.u32 4, %s19
      %p189 = scmp.lt.s32.totalorder %s187, 63
      %s190 = scalar_select %p189, %s187, 63
      %p191 = scmp.lt.s32.totalorder %s188, 3
      %s192 = scalar_select %p191, %s188, 3
      %s193 = smul.addr %s190, 4
      %s194 = sadd.s32 %s192, %s193
      %s195 = smul.addr %s194, 4
      %s196 = scalar_lea.vmem %s0, %s195
      %s197 = smul.u32 32, %s18
      %s198 = smul.u32 4, %s19
      %s199 = smul.u32 32, %s18
      %p200 = scmp.lt.s32.totalorder %s199, 63
      %s201 = scalar_select %p200, %s199, 63
      %s202 = smul.addr %s201, 8
      %s203 = scalar_lea.vmem %s3, %s202
      %s204 = smul.u32 32, %s18
      %s205 = smul.u32 %s19, 512
      %v206 = vld [vmem:[%s196] sm:$0xff]
      %v207 = vld [vmem:[%s196 + $0x8] sm:$0xff]
      %v208 = vld [vmem:[%s196 + $0x10] sm:$0xff]
      %v209 = vld [vmem:[%s196 + $0x18] sm:$0xff]
      %v210 = vld [vmem:[%s196 + $0x20] sm:$0xff]
      %v211 = vld [vmem:[%s196 + $0x28] sm:$0xff]
      %v212 = vld [vmem:[%s196 + $0x30] sm:$0xff]
      %v213 = vld [vmem:[%s196 + $0x38] sm:$0xff]
      %v214 = vld [vmem:[%s196 + $0x40] sm:$0xff]
      %v215 = vld [vmem:[%s196 + $0x48] sm:$0xff]
      %v216 = vld [vmem:[%s196 + $0x50] sm:$0xff]
      %v217 = vld [vmem:[%s196 + $0x58] sm:$0xff]
      %v218 = vld [vmem:[%s196 + $0x60] sm:$0xff]
      %v219 = vld [vmem:[%s196 + $0x68] sm:$0xff]
      %v220 = vld [vmem:[%s196 + $0x70] sm:$0xff]
      %v221 = vld [vmem:[%s196 + $0x78] sm:$0xff]
      %v222 = vld [vmem:[%s196 + $0x80] sm:$0xff]
      %v223 = vld [vmem:[%s196 + $0x88] sm:$0xff]
      %v224 = vld [vmem:[%s196 + $0x90] sm:$0xff]
      %v225 = vld [vmem:[%s196 + $0x98] sm:$0xff]
      %v226 = vld [vmem:[%s196 + $0xa0] sm:$0xff]
      %v227 = vld [vmem:[%s196 + $0xa8] sm:$0xff]
      %v228 = vld [vmem:[%s196 + $0xb0] sm:$0xff]
      %v229 = vld [vmem:[%s196 + $0xb8] sm:$0xff]
      %v230 = vld [vmem:[%s196 + $0xc0] sm:$0xff]
      %v231 = vld [vmem:[%s196 + $0xc8] sm:$0xff]
      %v232 = vld [vmem:[%s196 + $0xd0] sm:$0xff]
      %v233 = vld [vmem:[%s196 + $0xd8] sm:$0xff]
      %v234 = vld [vmem:[%s196 + $0xe0] sm:$0xff]
      %v235 = vld [vmem:[%s196 + $0xe8] sm:$0xff]
      %v236 = vld [vmem:[%s196 + $0xf0] sm:$0xff]
      %v237 = vld [vmem:[%s196 + $0xf8] sm:$0xff]
      %v238 = vld [vmem:[%s196 + $0x100] sm:$0xff]
      %v239 = vld [vmem:[%s196 + $0x108] sm:$0xff]
      %v240 = vld [vmem:[%s196 + $0x110] sm:$0xff]
      %v241 = vld [vmem:[%s196 + $0x118] sm:$0xff]
      %v242 = vld [vmem:[%s196 + $0x120] sm:$0xff]
      %v243 = vld [vmem:[%s196 + $0x128] sm:$0xff]
      %v244 = vld [vmem:[%s196 + $0x130] sm:$0xff]
      %v245 = vld [vmem:[%s196 + $0x138] sm:$0xff]
      %v246 = vld [vmem:[%s196 + $0x140] sm:$0xff]
      %v247 = vld [vmem:[%s196 + $0x148] sm:$0xff]
      %v248 = vld [vmem:[%s196 + $0x150] sm:$0xff]
      %v249 = vld [vmem:[%s196 + $0x158] sm:$0xff]
      %v250 = vld [vmem:[%s196 + $0x160] sm:$0xff]
      %v251 = vld [vmem:[%s196 + $0x168] sm:$0xff]
      %v252 = vld [vmem:[%s196 + $0x170] sm:$0xff]
      %v253 = vld [vmem:[%s196 + $0x178] sm:$0xff]
      %v254 = vld [vmem:[%s196 + $0x180] sm:$0xff]
      %v255 = vld [vmem:[%s196 + $0x188] sm:$0xff]
      %v256 = vld [vmem:[%s196 + $0x190] sm:$0xff]
      %v257 = vld [vmem:[%s196 + $0x198] sm:$0xff]
      %v258 = vld [vmem:[%s196 + $0x1a0] sm:$0xff]
      %v259 = vld [vmem:[%s196 + $0x1a8] sm:$0xff]
      %v260 = vld [vmem:[%s196 + $0x1b0] sm:$0xff]
      %v261 = vld [vmem:[%s196 + $0x1b8] sm:$0xff]
      %v262 = vld [vmem:[%s196 + $0x1c0] sm:$0xff]
      %v263 = vld [vmem:[%s196 + $0x1c8] sm:$0xff]
      %v264 = vld [vmem:[%s196 + $0x1d0] sm:$0xff]
      %v265 = vld [vmem:[%s196 + $0x1d8] sm:$0xff]
      %v266 = vld [vmem:[%s196 + $0x1e0] sm:$0xff]
      %v267 = vld [vmem:[%s196 + $0x1e8] sm:$0xff]
      %v268 = vld [vmem:[%s196 + $0x1f0] sm:$0xff]
      %v269 = vld [vmem:[%s196 + $0x1f8] sm:$0xff]
      %s270 = sshra.s32 %s205, 3
      %s271 = sand.u32 %s205, 7
      %s272 = smul.addr %s270, 4
      %s273 = scalar_lea.vmem %s1, %s272
      %v274 = vld [vmem:[%s273] sm:$0xf]
      %v275 = vld [vmem:[%s273 + $0x4] sm:$0xf]
      %v276 = vld [vmem:[%s273 + $0x8] sm:$0xf]
      %v277 = vld [vmem:[%s273 + $0xc] sm:$0xf]
      %v278 = vld [vmem:[%s273 + $0x10] sm:$0xf]
      %v279 = vld [vmem:[%s273 + $0x14] sm:$0xf]
      %v280 = vld [vmem:[%s273 + $0x18] sm:$0xf]
      %v281 = vld [vmem:[%s273 + $0x1c] sm:$0xf]
      %v282 = vld [vmem:[%s273 + $0x20] sm:$0xf]
      %v283 = vld [vmem:[%s273 + $0x24] sm:$0xf]
      %v284 = vld [vmem:[%s273 + $0x28] sm:$0xf]
      %v285 = vld [vmem:[%s273 + $0x2c] sm:$0xf]
      %v286 = vld [vmem:[%s273 + $0x30] sm:$0xf]
      %v287 = vld [vmem:[%s273 + $0x34] sm:$0xf]
      %v288 = vld [vmem:[%s273 + $0x38] sm:$0xf]
      %v289 = vld [vmem:[%s273 + $0x3c] sm:$0xf]
      %v290 = vld [vmem:[%s273 + $0x40] sm:$0xf]
      %v291 = vld [vmem:[%s273 + $0x44] sm:$0xf]
      %v292 = vld [vmem:[%s273 + $0x48] sm:$0xf]
      %v293 = vld [vmem:[%s273 + $0x4c] sm:$0xf]
      %v294 = vld [vmem:[%s273 + $0x50] sm:$0xf]
      %v295 = vld [vmem:[%s273 + $0x54] sm:$0xf]
      %v296 = vld [vmem:[%s273 + $0x58] sm:$0xf]
      %v297 = vld [vmem:[%s273 + $0x5c] sm:$0xf]
      %v298 = vld [vmem:[%s273 + $0x60] sm:$0xf]
      %v299 = vld [vmem:[%s273 + $0x64] sm:$0xf]
      %v300 = vld [vmem:[%s273 + $0x68] sm:$0xf]
      %v301 = vld [vmem:[%s273 + $0x6c] sm:$0xf]
      %v302 = vld [vmem:[%s273 + $0x70] sm:$0xf]
      %v303 = vld [vmem:[%s273 + $0x74] sm:$0xf]
      %v304 = vld [vmem:[%s273 + $0x78] sm:$0xf]
      %v305 = vld [vmem:[%s273 + $0x7c] sm:$0xf]
      %v306 = vld [vmem:[%s273 + $0x80] sm:$0xf]
      %v307 = vld [vmem:[%s273 + $0x84] sm:$0xf]
      %v308 = vld [vmem:[%s273 + $0x88] sm:$0xf]
      %v309 = vld [vmem:[%s273 + $0x8c] sm:$0xf]
      %v310 = vld [vmem:[%s273 + $0x90] sm:$0xf]
      %v311 = vld [vmem:[%s273 + $0x94] sm:$0xf]
      %v312 = vld [vmem:[%s273 + $0x98] sm:$0xf]
      %v313 = vld [vmem:[%s273 + $0x9c] sm:$0xf]
      %v314 = vld [vmem:[%s273 + $0xa0] sm:$0xf]
      %v315 = vld [vmem:[%s273 + $0xa4] sm:$0xf]
      %v316 = vld [vmem:[%s273 + $0xa8] sm:$0xf]
      %v317 = vld [vmem:[%s273 + $0xac] sm:$0xf]
      %v318 = vld [vmem:[%s273 + $0xb0] sm:$0xf]
      %v319 = vld [vmem:[%s273 + $0xb4] sm:$0xf]
      %v320 = vld [vmem:[%s273 + $0xb8] sm:$0xf]
      %v321 = vld [vmem:[%s273 + $0xbc] sm:$0xf]
      %v322 = vld [vmem:[%s273 + $0xc0] sm:$0xf]
      %v323 = vld [vmem:[%s273 + $0xc4] sm:$0xf]
      %v324 = vld [vmem:[%s273 + $0xc8] sm:$0xf]
      %v325 = vld [vmem:[%s273 + $0xcc] sm:$0xf]
      %v326 = vld [vmem:[%s273 + $0xd0] sm:$0xf]
      %v327 = vld [vmem:[%s273 + $0xd4] sm:$0xf]
      %v328 = vld [vmem:[%s273 + $0xd8] sm:$0xf]
      %v329 = vld [vmem:[%s273 + $0xdc] sm:$0xf]
      %v330 = vld [vmem:[%s273 + $0xe0] sm:$0xf]
      %v331 = vld [vmem:[%s273 + $0xe4] sm:$0xf]
      %v332 = vld [vmem:[%s273 + $0xe8] sm:$0xf]
      %v333 = vld [vmem:[%s273 + $0xec] sm:$0xf]
      %v334 = vld [vmem:[%s273 + $0xf0] sm:$0xf]
      %v335 = vld [vmem:[%s273 + $0xf4] sm:$0xf]
      %v336 = vld [vmem:[%s273 + $0xf8] sm:$0xf]
      %v337 = vld [vmem:[%s273 + $0xfc] sm:$0xf]
      %v402 = vunpack.c.l.b16 %v206
      %v403 = vunpack.c.h.b16 %v206
      %v404 = vunpack.c.l.b16 %v207
      %v405 = vunpack.c.h.b16 %v207
      %v406 = vunpack.c.l.b16 %v208
      %v407 = vunpack.c.h.b16 %v208
      %v408 = vunpack.c.l.b16 %v209
      %v409 = vunpack.c.h.b16 %v209
      %v410 = vunpack.c.l.b16 %v210
      %v411 = vunpack.c.h.b16 %v210
      %v412 = vunpack.c.l.b16 %v211
      %v413 = vunpack.c.h.b16 %v211
      %v414 = vunpack.c.l.b16 %v212
      %v415 = vunpack.c.h.b16 %v212
      %v416 = vunpack.c.l.b16 %v213
      %v417 = vunpack.c.h.b16 %v213
      %v418 = vunpack.c.l.b16 %v214
      %v419 = vunpack.c.h.b16 %v214
      %v420 = vunpack.c.l.b16 %v215
      %v421 = vunpack.c.h.b16 %v215
      %v422 = vunpack.c.l.b16 %v216
      %v423 = vunpack.c.h.b16 %v216
      %v424 = vunpack.c.l.b16 %v217
      %v425 = vunpack.c.h.b16 %v217
      %v426 = vunpack.c.l.b16 %v218
      %v427 = vunpack.c.h.b16 %v218
      %v428 = vunpack.c.l.b16 %v219
      %v429 = vunpack.c.h.b16 %v219
      %v430 = vunpack.c.l.b16 %v220
      %v431 = vunpack.c.h.b16 %v220
      %v432 = vunpack.c.l.b16 %v221
      %v433 = vunpack.c.h.b16 %v221
      %v434 = vunpack.c.l.b16 %v222
      %v435 = vunpack.c.h.b16 %v222
      %v436 = vunpack.c.l.b16 %v223
      %v437 = vunpack.c.h.b16 %v223
      %v438 = vunpack.c.l.b16 %v224
      %v439 = vunpack.c.h.b16 %v224
      %v440 = vunpack.c.l.b16 %v225
      %v441 = vunpack.c.h.b16 %v225
      %v442 = vunpack.c.l.b16 %v226
      %v443 = vunpack.c.h.b16 %v226
      %v444 = vunpack.c.l.b16 %v227
      %v445 = vunpack.c.h.b16 %v227
      %v446 = vunpack.c.l.b16 %v228
      %v447 = vunpack.c.h.b16 %v228
      %v448 = vunpack.c.l.b16 %v229
      %v449 = vunpack.c.h.b16 %v229
      %v450 = vunpack.c.l.b16 %v230
      %v451 = vunpack.c.h.b16 %v230
      %v452 = vunpack.c.l.b16 %v231
      %v453 = vunpack.c.h.b16 %v231
      %v454 = vunpack.c.l.b16 %v232
      %v455 = vunpack.c.h.b16 %v232
      %v456 = vunpack.c.l.b16 %v233
      %v457 = vunpack.c.h.b16 %v233
      %v458 = vunpack.c.l.b16 %v234
      %v459 = vunpack.c.h.b16 %v234
      %v460 = vunpack.c.l.b16 %v235
      %v461 = vunpack.c.h.b16 %v235
      %v462 = vunpack.c.l.b16 %v236
      %v463 = vunpack.c.h.b16 %v236
      %v464 = vunpack.c.l.b16 %v237
      %v465 = vunpack.c.h.b16 %v237
      %v466 = vunpack.c.l.b16 %v238
      %v467 = vunpack.c.h.b16 %v238
      %v468 = vunpack.c.l.b16 %v239
      %v469 = vunpack.c.h.b16 %v239
      %v470 = vunpack.c.l.b16 %v240
      %v471 = vunpack.c.h.b16 %v240
      %v472 = vunpack.c.l.b16 %v241
      %v473 = vunpack.c.h.b16 %v241
      %v474 = vunpack.c.l.b16 %v242
      %v475 = vunpack.c.h.b16 %v242
      %v476 = vunpack.c.l.b16 %v243
      %v477 = vunpack.c.h.b16 %v243
      %v478 = vunpack.c.l.b16 %v244
      %v479 = vunpack.c.h.b16 %v244
      %v480 = vunpack.c.l.b16 %v245
      %v481 = vunpack.c.h.b16 %v245
      %v482 = vunpack.c.l.b16 %v246
      %v483 = vunpack.c.h.b16 %v246
      %v484 = vunpack.c.l.b16 %v247
      %v485 = vunpack.c.h.b16 %v247
      %v486 = vunpack.c.l.b16 %v248
      %v487 = vunpack.c.h.b16 %v248
      %v488 = vunpack.c.l.b16 %v249
      %v489 = vunpack.c.h.b16 %v249
      %v490 = vunpack.c.l.b16 %v250
      %v491 = vunpack.c.h.b16 %v250
      %v492 = vunpack.c.l.b16 %v251
      %v493 = vunpack.c.h.b16 %v251
      %v494 = vunpack.c.l.b16 %v252
      %v495 = vunpack.c.h.b16 %v252
      %v496 = vunpack.c.l.b16 %v253
      %v497 = vunpack.c.h.b16 %v253
      %v498 = vunpack.c.l.b16 %v254
      %v499 = vunpack.c.h.b16 %v254
      %v500 = vunpack.c.l.b16 %v255
      %v501 = vunpack.c.h.b16 %v255
      %v502 = vunpack.c.l.b16 %v256
      %v503 = vunpack.c.h.b16 %v256
      %v504 = vunpack.c.l.b16 %v257
      %v505 = vunpack.c.h.b16 %v257
      %v506 = vunpack.c.l.b16 %v258
      %v507 = vunpack.c.h.b16 %v258
      %v508 = vunpack.c.l.b16 %v259
      %v509 = vunpack.c.h.b16 %v259
      %v510 = vunpack.c.l.b16 %v260
      %v511 = vunpack.c.h.b16 %v260
      %v512 = vunpack.c.l.b16 %v261
      %v513 = vunpack.c.h.b16 %v261
      %v514 = vunpack.c.l.b16 %v262
      %v515 = vunpack.c.h.b16 %v262
      %v516 = vunpack.c.l.b16 %v263
      %v517 = vunpack.c.h.b16 %v263
      %v518 = vunpack.c.l.b16 %v264
      %v519 = vunpack.c.h.b16 %v264
      %v520 = vunpack.c.l.b16 %v265
      %v521 = vunpack.c.h.b16 %v265
      %v522 = vunpack.c.l.b16 %v266
      %v523 = vunpack.c.h.b16 %v266
      %v524 = vunpack.c.l.b16 %v267
      %v525 = vunpack.c.h.b16 %v267
      %v526 = vunpack.c.l.b16 %v268
      %v527 = vunpack.c.h.b16 %v268
      %v528 = vunpack.c.l.b16 %v269
      %v529 = vunpack.c.h.b16 %v269
      %v530 = vpack.c.b16 %v406, %v402
      %v531 = vpack.c.b16 %v407, %v403
      %v532 = vpack.c.b16 %v408, %v404
      %v533 = vpack.c.b16 %v409, %v405
      %v534 = vpack.c.b16 %v414, %v410
      %v535 = vpack.c.b16 %v415, %v411
      %v536 = vpack.c.b16 %v416, %v412
      %v537 = vpack.c.b16 %v417, %v413
      %v538 = vpack.c.b16 %v422, %v418
      %v539 = vpack.c.b16 %v423, %v419
      %v540 = vpack.c.b16 %v424, %v420
      %v541 = vpack.c.b16 %v425, %v421
      %v542 = vpack.c.b16 %v430, %v426
      %v543 = vpack.c.b16 %v431, %v427
      %v544 = vpack.c.b16 %v432, %v428
      %v545 = vpack.c.b16 %v433, %v429
      %v546 = vpack.c.b16 %v438, %v434
      %v547 = vpack.c.b16 %v439, %v435
      %v548 = vpack.c.b16 %v440, %v436
      %v549 = vpack.c.b16 %v441, %v437
      %v550 = vpack.c.b16 %v446, %v442
      %v551 = vpack.c.b16 %v447, %v443
      %v552 = vpack.c.b16 %v448, %v444
      %v553 = vpack.c.b16 %v449, %v445
      %v554 = vpack.c.b16 %v454, %v450
      %v555 = vpack.c.b16 %v455, %v451
      %v556 = vpack.c.b16 %v456, %v452
      %v557 = vpack.c.b16 %v457, %v453
      %v558 = vpack.c.b16 %v462, %v458
      %v559 = vpack.c.b16 %v463, %v459
      %v560 = vpack.c.b16 %v464, %v460
      %v561 = vpack.c.b16 %v465, %v461
      %v562 = vpack.c.b16 %v470, %v466
      %v563 = vpack.c.b16 %v471, %v467
      %v564 = vpack.c.b16 %v472, %v468
      %v565 = vpack.c.b16 %v473, %v469
      %v566 = vpack.c.b16 %v478, %v474
      %v567 = vpack.c.b16 %v479, %v475
      %v568 = vpack.c.b16 %v480, %v476
      %v569 = vpack.c.b16 %v481, %v477
      %v570 = vpack.c.b16 %v486, %v482
      %v571 = vpack.c.b16 %v487, %v483
      %v572 = vpack.c.b16 %v488, %v484
      %v573 = vpack.c.b16 %v489, %v485
      %v574 = vpack.c.b16 %v494, %v490
      %v575 = vpack.c.b16 %v495, %v491
      %v576 = vpack.c.b16 %v496, %v492
      %v577 = vpack.c.b16 %v497, %v493
      %v578 = vpack.c.b16 %v502, %v498
      %v579 = vpack.c.b16 %v503, %v499
      %v580 = vpack.c.b16 %v504, %v500
      %v581 = vpack.c.b16 %v505, %v501
      %v582 = vpack.c.b16 %v510, %v506
      %v583 = vpack.c.b16 %v511, %v507
      %v584 = vpack.c.b16 %v512, %v508
      %v585 = vpack.c.b16 %v513, %v509
      %v586 = vpack.c.b16 %v518, %v514
      %v587 = vpack.c.b16 %v519, %v515
      %v588 = vpack.c.b16 %v520, %v516
      %v589 = vpack.c.b16 %v521, %v517
      %v590 = vpack.c.b16 %v526, %v522
      %v591 = vpack.c.b16 %v527, %v523
      %v592 = vpack.c.b16 %v528, %v524
      %v593 = vpack.c.b16 %v529, %v525
      %v722 = vunpack.c.l.b16 %v274
      %v723 = vunpack.c.l.b16 %v275
      %v724 = vunpack.c.l.b16 %v276
      %v725 = vunpack.c.l.b16 %v277
      %v726 = vunpack.c.l.b16 %v278
      %v727 = vunpack.c.l.b16 %v279
      %v728 = vunpack.c.l.b16 %v280
      %v729 = vunpack.c.l.b16 %v281
      %v730 = vunpack.c.l.b16 %v282
      %v731 = vunpack.c.l.b16 %v283
      %v732 = vunpack.c.l.b16 %v284
      %v733 = vunpack.c.l.b16 %v285
      %v734 = vunpack.c.l.b16 %v286
      %v735 = vunpack.c.l.b16 %v287
      %v736 = vunpack.c.l.b16 %v288
      %v737 = vunpack.c.l.b16 %v289
      %v738 = vunpack.c.l.b16 %v290
      %v739 = vunpack.c.l.b16 %v291
      %v740 = vunpack.c.l.b16 %v292
      %v741 = vunpack.c.l.b16 %v293
      %v742 = vunpack.c.l.b16 %v294
      %v743 = vunpack.c.l.b16 %v295
      %v744 = vunpack.c.l.b16 %v296
      %v745 = vunpack.c.l.b16 %v297
      %v746 = vunpack.c.l.b16 %v298
      %v747 = vunpack.c.l.b16 %v299
      %v748 = vunpack.c.l.b16 %v300
      %v749 = vunpack.c.l.b16 %v301
      %v750 = vunpack.c.l.b16 %v302
      %v751 = vunpack.c.l.b16 %v303
      %v752 = vunpack.c.l.b16 %v304
      %v753 = vunpack.c.l.b16 %v305
      %v754 = vunpack.c.l.b16 %v306
      %v755 = vunpack.c.l.b16 %v307
      %v756 = vunpack.c.l.b16 %v308
      %v757 = vunpack.c.l.b16 %v309
      %v758 = vunpack.c.l.b16 %v310
      %v759 = vunpack.c.l.b16 %v311
      %v760 = vunpack.c.l.b16 %v312
      %v761 = vunpack.c.l.b16 %v313
      %v762 = vunpack.c.l.b16 %v314
      %v763 = vunpack.c.l.b16 %v315
      %v764 = vunpack.c.l.b16 %v316
      %v765 = vunpack.c.l.b16 %v317
      %v766 = vunpack.c.l.b16 %v318
      %v767 = vunpack.c.l.b16 %v319
      %v768 = vunpack.c.l.b16 %v320
      %v769 = vunpack.c.l.b16 %v321
      %v770 = vunpack.c.l.b16 %v322
      %v771 = vunpack.c.l.b16 %v323
      %v772 = vunpack.c.l.b16 %v324
      %v773 = vunpack.c.l.b16 %v325
      %v774 = vunpack.c.l.b16 %v326
      %v775 = vunpack.c.l.b16 %v327
      %v776 = vunpack.c.l.b16 %v328
      %v777 = vunpack.c.l.b16 %v329
      %v778 = vunpack.c.l.b16 %v330
      %v779 = vunpack.c.l.b16 %v331
      %v780 = vunpack.c.l.b16 %v332
      %v781 = vunpack.c.l.b16 %v333
      %v782 = vunpack.c.l.b16 %v334
      %v783 = vunpack.c.l.b16 %v335
      %v784 = vunpack.c.l.b16 %v336
      %v785 = vunpack.c.l.b16 %v337
      %v786 = vpack.c.b16 %v723, %v722
      %v787 = vpack.c.b16 %v725, %v724
      %v788 = vpack.c.b16 %v727, %v726
      %v789 = vpack.c.b16 %v729, %v728
      %v790 = vpack.c.b16 %v731, %v730
      %v791 = vpack.c.b16 %v733, %v732
      %v792 = vpack.c.b16 %v735, %v734
      %v793 = vpack.c.b16 %v737, %v736
      %v794 = vpack.c.b16 %v739, %v738
      %v795 = vpack.c.b16 %v741, %v740
      %v796 = vpack.c.b16 %v743, %v742
      %v797 = vpack.c.b16 %v745, %v744
      %v798 = vpack.c.b16 %v747, %v746
      %v799 = vpack.c.b16 %v749, %v748
      %v800 = vpack.c.b16 %v751, %v750
      %v801 = vpack.c.b16 %v753, %v752
      %v802 = vpack.c.b16 %v755, %v754
      %v803 = vpack.c.b16 %v757, %v756
      %v804 = vpack.c.b16 %v759, %v758
      %v805 = vpack.c.b16 %v761, %v760
      %v806 = vpack.c.b16 %v763, %v762
      %v807 = vpack.c.b16 %v765, %v764
      %v808 = vpack.c.b16 %v767, %v766
      %v809 = vpack.c.b16 %v769, %v768
      %v810 = vpack.c.b16 %v771, %v770
      %v811 = vpack.c.b16 %v773, %v772
      %v812 = vpack.c.b16 %v775, %v774
      %v813 = vpack.c.b16 %v777, %v776
      %v814 = vpack.c.b16 %v779, %v778
      %v815 = vpack.c.b16 %v781, %v780
      %v816 = vpack.c.b16 %v783, %v782
      %v817 = vpack.c.b16 %v785, %v784
      %850 = vmatpush.bf16.msra.mxu0 %v793
      %851 = vmatpush.bf16.msra.mxu0 %v792
      %852 = vmatpush.bf16.msra.mxu0 %v791
      %853 = vmatpush.bf16.msra.mxu0 %v790
      %854 = vmatpush.bf16.msra.mxu0 %v789
      %855 = vmatpush.bf16.msra.mxu0 %v788
      %856 = vmatpush.bf16.msra.mxu0 %v787
      %857 = vmatpush.bf16.msra.mxu0 %v786
      %858 = vmatmul.bf16.gmra.mxu0 %v530
      %v859 = vpop.f32.mrf.mxu0
      %v860 = vadd.f32 0.0, %v859
      %v861 = vpop.f32.mrf.mxu0
      %v862 = vadd.f32 0.0, %v861
      %863 = vmatmul.bf16.gmra.mxu0 %v534
      %v864 = vpop.f32.mrf.mxu0
      %v865 = vadd.f32 0.0, %v864
      %v866 = vpop.f32.mrf.mxu0
      %v867 = vadd.f32 0.0, %v866
      %868 = vmatmul.bf16.gmra.mxu0 %v538
      %v869 = vpop.f32.mrf.mxu0
      %v870 = vadd.f32 0.0, %v869
      %v871 = vpop.f32.mrf.mxu0
      %v872 = vadd.f32 0.0, %v871
      %873 = vmatmul.bf16.gmra.mxu0 %v542
      %v874 = vpop.f32.mrf.mxu0
      %v875 = vadd.f32 0.0, %v874
      %v876 = vpop.f32.mrf.mxu0
      %v877 = vadd.f32 0.0, %v876
      %878 = vmatmul.bf16.gmra.mxu0 %v546
      %v879 = vpop.f32.mrf.mxu0
      %v880 = vadd.f32 0.0, %v879
      %v881 = vpop.f32.mrf.mxu0
      %v882 = vadd.f32 0.0, %v881
      %883 = vmatmul.bf16.gmra.mxu0 %v550
      %v884 = vpop.f32.mrf.mxu0
      %v885 = vadd.f32 0.0, %v884
      %v886 = vpop.f32.mrf.mxu0
      %v887 = vadd.f32 0.0, %v886
      %888 = vmatmul.bf16.gmra.mxu0 %v554
      %v889 = vpop.f32.mrf.mxu0
      %v890 = vadd.f32 0.0, %v889
      %v891 = vpop.f32.mrf.mxu0
      %v892 = vadd.f32 0.0, %v891
      %893 = vmatmul.bf16.gmra.mxu0 %v558
      %v894 = vpop.f32.mrf.mxu0
      %v895 = vadd.f32 0.0, %v894
      %v896 = vpop.f32.mrf.mxu0
      %v897 = vadd.f32 0.0, %v896
      %898 = vmatmul.bf16.gmra.mxu0 %v562
      %v899 = vpop.f32.mrf.mxu0
      %v900 = vadd.f32 0.0, %v899
      %v901 = vpop.f32.mrf.mxu0
      %v902 = vadd.f32 0.0, %v901
      %903 = vmatmul.bf16.gmra.mxu0 %v566
      %v904 = vpop.f32.mrf.mxu0
      %v905 = vadd.f32 0.0, %v904
      %v906 = vpop.f32.mrf.mxu0
      %v907 = vadd.f32 0.0, %v906
      %908 = vmatmul.bf16.gmra.mxu0 %v570
      %v909 = vpop.f32.mrf.mxu0
      %v910 = vadd.f32 0.0, %v909
      %v911 = vpop.f32.mrf.mxu0
      %v912 = vadd.f32 0.0, %v911
      %913 = vmatmul.bf16.gmra.mxu0 %v574
      %v914 = vpop.f32.mrf.mxu0
      %v915 = vadd.f32 0.0, %v914
      %v916 = vpop.f32.mrf.mxu0
      %v917 = vadd.f32 0.0, %v916
      %918 = vmatmul.bf16.gmra.mxu0 %v578
      %v919 = vpop.f32.mrf.mxu0
      %v920 = vadd.f32 0.0, %v919
      %v921 = vpop.f32.mrf.mxu0
      %v922 = vadd.f32 0.0, %v921
      %923 = vmatmul.bf16.gmra.mxu0 %v582
      %v924 = vpop.f32.mrf.mxu0
      %v925 = vadd.f32 0.0, %v924
      %v926 = vpop.f32.mrf.mxu0
      %v927 = vadd.f32 0.0, %v926
      %928 = vmatmul.bf16.gmra.mxu0 %v586
      %v929 = vpop.f32.mrf.mxu0
      %v930 = vadd.f32 0.0, %v929
      %v931 = vpop.f32.mrf.mxu0
      %v932 = vadd.f32 0.0, %v931
      %933 = vmatmul.bf16.gmra.mxu0 %v590
      %v934 = vpop.f32.mrf.mxu0
      %v935 = vadd.f32 0.0, %v934
      %v936 = vpop.f32.mrf.mxu0
      %v937 = vadd.f32 0.0, %v936
      %938 = vdwg.mxu0
      %939 = vmatpush.bf16.msra.mxu0 %v801
      %940 = vmatpush.bf16.msra.mxu0 %v800
      %941 = vmatpush.bf16.msra.mxu0 %v799
      %942 = vmatpush.bf16.msra.mxu0 %v798
      %943 = vmatpush.bf16.msra.mxu0 %v797
      %944 = vmatpush.bf16.msra.mxu0 %v796
      %945 = vmatpush.bf16.msra.mxu0 %v795
      %946 = vmatpush.bf16.msra.mxu0 %v794
      %947 = vmatmul.bf16.gmra.mxu0 %v531
      %v948 = vpop.f32.mrf.mxu0
      %v949 = vadd.f32 %v860, %v948
      %v950 = vpop.f32.mrf.mxu0
      %v951 = vadd.f32 %v862, %v950
      %952 = vmatmul.bf16.gmra.mxu0 %v535
      %v953 = vpop.f32.mrf.mxu0
      %v954 = vadd.f32 %v865, %v953
      %v955 = vpop.f32.mrf.mxu0
      %v956 = vadd.f32 %v867, %v955
      %957 = vmatmul.bf16.gmra.mxu0 %v539
      %v958 = vpop.f32.mrf.mxu0
      %v959 = vadd.f32 %v870, %v958
      %v960 = vpop.f32.mrf.mxu0
      %v961 = vadd.f32 %v872, %v960
      %962 = vmatmul.bf16.gmra.mxu0 %v543
      %v963 = vpop.f32.mrf.mxu0
      %v964 = vadd.f32 %v875, %v963
      %v965 = vpop.f32.mrf.mxu0
      %v966 = vadd.f32 %v877, %v965
      %967 = vmatmul.bf16.gmra.mxu0 %v547
      %v968 = vpop.f32.mrf.mxu0
      %v969 = vadd.f32 %v880, %v968
      %v970 = vpop.f32.mrf.mxu0
      %v971 = vadd.f32 %v882, %v970
      %972 = vmatmul.bf16.gmra.mxu0 %v551
      %v973 = vpop.f32.mrf.mxu0
      %v974 = vadd.f32 %v885, %v973
      %v975 = vpop.f32.mrf.mxu0
      %v976 = vadd.f32 %v887, %v975
      %977 = vmatmul.bf16.gmra.mxu0 %v555
      %v978 = vpop.f32.mrf.mxu0
      %v979 = vadd.f32 %v890, %v978
      %v980 = vpop.f32.mrf.mxu0
      %v981 = vadd.f32 %v892, %v980
      %982 = vmatmul.bf16.gmra.mxu0 %v559
      %v983 = vpop.f32.mrf.mxu0
      %v984 = vadd.f32 %v895, %v983
      %v985 = vpop.f32.mrf.mxu0
      %v986 = vadd.f32 %v897, %v985
      %987 = vmatmul.bf16.gmra.mxu0 %v563
      %v988 = vpop.f32.mrf.mxu0
      %v989 = vadd.f32 %v900, %v988
      %v990 = vpop.f32.mrf.mxu0
      %v991 = vadd.f32 %v902, %v990
      %992 = vmatmul.bf16.gmra.mxu0 %v567
      %v993 = vpop.f32.mrf.mxu0
      %v994 = vadd.f32 %v905, %v993
      %v995 = vpop.f32.mrf.mxu0
      %v996 = vadd.f32 %v907, %v995
      %997 = vmatmul.bf16.gmra.mxu0 %v571
      %v998 = vpop.f32.mrf.mxu0
      %v999 = vadd.f32 %v910, %v998
      %v1000 = vpop.f32.mrf.mxu0
      %v1001 = vadd.f32 %v912, %v1000
      %1002 = vmatmul.bf16.gmra.mxu0 %v575
      %v1003 = vpop.f32.mrf.mxu0
      %v1004 = vadd.f32 %v915, %v1003
      %v1005 = vpop.f32.mrf.mxu0
      %v1006 = vadd.f32 %v917, %v1005
      %1007 = vmatmul.bf16.gmra.mxu0 %v579
      %v1008 = vpop.f32.mrf.mxu0
      %v1009 = vadd.f32 %v920, %v1008
      %v1010 = vpop.f32.mrf.mxu0
      %v1011 = vadd.f32 %v922, %v1010
      %1012 = vmatmul.bf16.gmra.mxu0 %v583
      %v1013 = vpop.f32.mrf.mxu0
      %v1014 = vadd.f32 %v925, %v1013
      %v1015 = vpop.f32.mrf.mxu0
      %v1016 = vadd.f32 %v927, %v1015
      %1017 = vmatmul.bf16.gmra.mxu0 %v587
      %v1018 = vpop.f32.mrf.mxu0
      %v1019 = vadd.f32 %v930, %v1018
      %v1020 = vpop.f32.mrf.mxu0
      %v1021 = vadd.f32 %v932, %v1020
      %1022 = vmatmul.bf16.gmra.mxu0 %v591
      %v1023 = vpop.f32.mrf.mxu0
      %v1024 = vadd.f32 %v935, %v1023
      %v1025 = vpop.f32.mrf.mxu0
      %v1026 = vadd.f32 %v937, %v1025
      %1027 = vdwg.mxu0
      %1028 = vmatpush.bf16.msra.mxu0 %v809
      %1029 = vmatpush.bf16.msra.mxu0 %v808
      %1030 = vmatpush.bf16.msra.mxu0 %v807
      %1031 = vmatpush.bf16.msra.mxu0 %v806
      %1032 = vmatpush.bf16.msra.mxu0 %v805
      %1033 = vmatpush.bf16.msra.mxu0 %v804
      %1034 = vmatpush.bf16.msra.mxu0 %v803
      %1035 = vmatpush.bf16.msra.mxu0 %v802
      %1036 = vmatmul.bf16.gmra.mxu0 %v532
      %v1037 = vpop.f32.mrf.mxu0
      %v1038 = vadd.f32 %v949, %v1037
      %v1039 = vpop.f32.mrf.mxu0
      %v1040 = vadd.f32 %v951, %v1039
      %1041 = vmatmul.bf16.gmra.mxu0 %v536
      %v1042 = vpop.f32.mrf.mxu0
      %v1043 = vadd.f32 %v954, %v1042
      %v1044 = vpop.f32.mrf.mxu0
      %v1045 = vadd.f32 %v956, %v1044
      %1046 = vmatmul.bf16.gmra.mxu0 %v540
      %v1047 = vpop.f32.mrf.mxu0
      %v1048 = vadd.f32 %v959, %v1047
      %v1049 = vpop.f32.mrf.mxu0
      %v1050 = vadd.f32 %v961, %v1049
      %1051 = vmatmul.bf16.gmra.mxu0 %v544
      %v1052 = vpop.f32.mrf.mxu0
      %v1053 = vadd.f32 %v964, %v1052
      %v1054 = vpop.f32.mrf.mxu0
      %v1055 = vadd.f32 %v966, %v1054
      %1056 = vmatmul.bf16.gmra.mxu0 %v548
      %v1057 = vpop.f32.mrf.mxu0
      %v1058 = vadd.f32 %v969, %v1057
      %v1059 = vpop.f32.mrf.mxu0
      %v1060 = vadd.f32 %v971, %v1059
      %1061 = vmatmul.bf16.gmra.mxu0 %v552
      %v1062 = vpop.f32.mrf.mxu0
      %v1063 = vadd.f32 %v974, %v1062
      %v1064 = vpop.f32.mrf.mxu0
      %v1065 = vadd.f32 %v976, %v1064
      %1066 = vmatmul.bf16.gmra.mxu0 %v556
      %v1067 = vpop.f32.mrf.mxu0
      %v1068 = vadd.f32 %v979, %v1067
      %v1069 = vpop.f32.mrf.mxu0
      %v1070 = vadd.f32 %v981, %v1069
      %1071 = vmatmul.bf16.gmra.mxu0 %v560
      %v1072 = vpop.f32.mrf.mxu0
      %v1073 = vadd.f32 %v984, %v1072
      %v1074 = vpop.f32.mrf.mxu0
      %v1075 = vadd.f32 %v986, %v1074
      %1076 = vmatmul.bf16.gmra.mxu0 %v564
      %v1077 = vpop.f32.mrf.mxu0
      %v1078 = vadd.f32 %v989, %v1077
      %v1079 = vpop.f32.mrf.mxu0
      %v1080 = vadd.f32 %v991, %v1079
      %1081 = vmatmul.bf16.gmra.mxu0 %v568
      %v1082 = vpop.f32.mrf.mxu0
      %v1083 = vadd.f32 %v994, %v1082
      %v1084 = vpop.f32.mrf.mxu0
      %v1085 = vadd.f32 %v996, %v1084
      %1086 = vmatmul.bf16.gmra.mxu0 %v572
      %v1087 = vpop.f32.mrf.mxu0
      %v1088 = vadd.f32 %v999, %v1087
      %v1089 = vpop.f32.mrf.mxu0
      %v1090 = vadd.f32 %v1001, %v1089
      %1091 = vmatmul.bf16.gmra.mxu0 %v576
      %v1092 = vpop.f32.mrf.mxu0
      %v1093 = vadd.f32 %v1004, %v1092
      %v1094 = vpop.f32.mrf.mxu0
      %v1095 = vadd.f32 %v1006, %v1094
      %1096 = vmatmul.bf16.gmra.mxu0 %v580
      %v1097 = vpop.f32.mrf.mxu0
      %v1098 = vadd.f32 %v1009, %v1097
      %v1099 = vpop.f32.mrf.mxu0
      %v1100 = vadd.f32 %v1011, %v1099
      %1101 = vmatmul.bf16.gmra.mxu0 %v584
      %v1102 = vpop.f32.mrf.mxu0
      %v1103 = vadd.f32 %v1014, %v1102
      %v1104 = vpop.f32.mrf.mxu0
      %v1105 = vadd.f32 %v1016, %v1104
      %1106 = vmatmul.bf16.gmra.mxu0 %v588
      %v1107 = vpop.f32.mrf.mxu0
      %v1108 = vadd.f32 %v1019, %v1107
      %v1109 = vpop.f32.mrf.mxu0
      %v1110 = vadd.f32 %v1021, %v1109
      %1111 = vmatmul.bf16.gmra.mxu0 %v592
      %v1112 = vpop.f32.mrf.mxu0
      %v1113 = vadd.f32 %v1024, %v1112
      %v1114 = vpop.f32.mrf.mxu0
      %v1115 = vadd.f32 %v1026, %v1114
      %1116 = vdwg.mxu0
      %1117 = vmatpush.bf16.msra.mxu0 %v817
      %1118 = vmatpush.bf16.msra.mxu0 %v816
      %1119 = vmatpush.bf16.msra.mxu0 %v815
      %1120 = vmatpush.bf16.msra.mxu0 %v814
      %1121 = vmatpush.bf16.msra.mxu0 %v813
      %1122 = vmatpush.bf16.msra.mxu0 %v812
      %1123 = vmatpush.bf16.msra.mxu0 %v811
      %1124 = vmatpush.bf16.msra.mxu0 %v810
      %1125 = vmatmul.bf16.gmra.mxu0 %v533
      %v1126 = vpop.f32.mrf.mxu0
      %v1127 = vadd.f32 %v1038, %v1126
      %v1128 = vpop.f32.mrf.mxu0
      %v1129 = vadd.f32 %v1040, %v1128
      %1130 = vmatmul.bf16.gmra.mxu0 %v537
      %v1131 = vpop.f32.mrf.mxu0
      %v1132 = vadd.f32 %v1043, %v1131
      %v1133 = vpop.f32.mrf.mxu0
      %v1134 = vadd.f32 %v1045, %v1133
      %1135 = vmatmul.bf16.gmra.mxu0 %v541
      %v1136 = vpop.f32.mrf.mxu0
      %v1137 = vadd.f32 %v1048, %v1136
      %v1138 = vpop.f32.mrf.mxu0
      %v1139 = vadd.f32 %v1050, %v1138
      %1140 = vmatmul.bf16.gmra.mxu0 %v545
      %v1141 = vpop.f32.mrf.mxu0
      %v1142 = vadd.f32 %v1053, %v1141
      %v1143 = vpop.f32.mrf.mxu0
      %v1144 = vadd.f32 %v1055, %v1143
      %1145 = vmatmul.bf16.gmra.mxu0 %v549
      %v1146 = vpop.f32.mrf.mxu0
      %v1147 = vadd.f32 %v1058, %v1146
      %v1148 = vpop.f32.mrf.mxu0
      %v1149 = vadd.f32 %v1060, %v1148
      %1150 = vmatmul.bf16.gmra.mxu0 %v553
      %v1151 = vpop.f32.mrf.mxu0
      %v1152 = vadd.f32 %v1063, %v1151
      %v1153 = vpop.f32.mrf.mxu0
      %v1154 = vadd.f32 %v1065, %v1153
      %1155 = vmatmul.bf16.gmra.mxu0 %v557
      %v1156 = vpop.f32.mrf.mxu0
      %v1157 = vadd.f32 %v1068, %v1156
      %v1158 = vpop.f32.mrf.mxu0
      %v1159 = vadd.f32 %v1070, %v1158
      %1160 = vmatmul.bf16.gmra.mxu0 %v561
      %v1161 = vpop.f32.mrf.mxu0
      %v1162 = vadd.f32 %v1073, %v1161
      %v1163 = vpop.f32.mrf.mxu0
      %v1164 = vadd.f32 %v1075, %v1163
      %1165 = vmatmul.bf16.gmra.mxu0 %v565
      %v1166 = vpop.f32.mrf.mxu0
      %v1167 = vadd.f32 %v1078, %v1166
      %v1168 = vpop.f32.mrf.mxu0
      %v1169 = vadd.f32 %v1080, %v1168
      %1170 = vmatmul.bf16.gmra.mxu0 %v569
      %v1171 = vpop.f32.mrf.mxu0
      %v1172 = vadd.f32 %v1083, %v1171
      %v1173 = vpop.f32.mrf.mxu0
      %v1174 = vadd.f32 %v1085, %v1173
      %1175 = vmatmul.bf16.gmra.mxu0 %v573
      %v1176 = vpop.f32.mrf.mxu0
      %v1177 = vadd.f32 %v1088, %v1176
      %v1178 = vpop.f32.mrf.mxu0
      %v1179 = vadd.f32 %v1090, %v1178
      %1180 = vmatmul.bf16.gmra.mxu0 %v577
      %v1181 = vpop.f32.mrf.mxu0
      %v1182 = vadd.f32 %v1093, %v1181
      %v1183 = vpop.f32.mrf.mxu0
      %v1184 = vadd.f32 %v1095, %v1183
      %1185 = vmatmul.bf16.gmra.mxu0 %v581
      %v1186 = vpop.f32.mrf.mxu0
      %v1187 = vadd.f32 %v1098, %v1186
      %v1188 = vpop.f32.mrf.mxu0
      %v1189 = vadd.f32 %v1100, %v1188
      %1190 = vmatmul.bf16.gmra.mxu0 %v585
      %v1191 = vpop.f32.mrf.mxu0
      %v1192 = vadd.f32 %v1103, %v1191
      %v1193 = vpop.f32.mrf.mxu0
      %v1194 = vadd.f32 %v1105, %v1193
      %1195 = vmatmul.bf16.gmra.mxu0 %v589
      %v1196 = vpop.f32.mrf.mxu0
      %v1197 = vadd.f32 %v1108, %v1196
      %v1198 = vpop.f32.mrf.mxu0
      %v1199 = vadd.f32 %v1110, %v1198
      %1200 = vmatmul.bf16.gmra.mxu0 %v593
      %v1201 = vpop.f32.mrf.mxu0
      %v1202 = vadd.f32 %v1113, %v1201
      %v1203 = vpop.f32.mrf.mxu0
      %v1204 = vadd.f32 %v1115, %v1203
      %1205 = vdwg.mxu0
      %p1206 = scmp.eq.s32.totalorder %s19, 0
      // Predicated region
      $region33: #{gcn_forward.5} parent=31 // pred_check
        %p1207 = pneg %p1206
      $region34: #{gcn_forward.5} parent=31 // pred_check_branch
        %1209 = sbr.rel (%p1207) target = $region36
      $region35: #{gcn_forward.5} parent=31 // pred_region
        %1210 = vst [vmem:[#allocation2] sm:$0xff] %v1127
        %1211 = vst [vmem:[#allocation2 + $0x8] sm:$0xff] %v1129
        %1212 = vst [vmem:[#allocation2 + $0x10] sm:$0xff] %v1132
        %1213 = vst [vmem:[#allocation2 + $0x18] sm:$0xff] %v1134
        %1214 = vst [vmem:[#allocation2 + $0x20] sm:$0xff] %v1137
        %1215 = vst [vmem:[#allocation2 + $0x28] sm:$0xff] %v1139
        %1216 = vst [vmem:[#allocation2 + $0x30] sm:$0xff] %v1142
        %1217 = vst [vmem:[#allocation2 + $0x38] sm:$0xff] %v1144
        %1218 = vst [vmem:[#allocation2 + $0x40] sm:$0xff] %v1147
        %1219 = vst [vmem:[#allocation2 + $0x48] sm:$0xff] %v1149
        %1220 = vst [vmem:[#allocation2 + $0x50] sm:$0xff] %v1152
        %1221 = vst [vmem:[#allocation2 + $0x58] sm:$0xff] %v1154
        %1222 = vst [vmem:[#allocation2 + $0x60] sm:$0xff] %v1157
        %1223 = vst [vmem:[#allocation2 + $0x68] sm:$0xff] %v1159
        %1224 = vst [vmem:[#allocation2 + $0x70] sm:$0xff] %v1162
        %1225 = vst [vmem:[#allocation2 + $0x78] sm:$0xff] %v1164
        %1226 = vst [vmem:[#allocation2 + $0x80] sm:$0xff] %v1167
        %1227 = vst [vmem:[#allocation2 + $0x88] sm:$0xff] %v1169
        %1228 = vst [vmem:[#allocation2 + $0x90] sm:$0xff] %v1172
        %1229 = vst [vmem:[#allocation2 + $0x98] sm:$0xff] %v1174
        %1230 = vst [vmem:[#allocation2 + $0xa0] sm:$0xff] %v1177
        %1231 = vst [vmem:[#allocation2 + $0xa8] sm:$0xff] %v1179
        %1232 = vst [vmem:[#allocation2 + $0xb0] sm:$0xff] %v1182
        %1233 = vst [vmem:[#allocation2 + $0xb8] sm:$0xff] %v1184
        %1234 = vst [vmem:[#allocation2 + $0xc0] sm:$0xff] %v1187
        %1235 = vst [vmem:[#allocation2 + $0xc8] sm:$0xff] %v1189
        %1236 = vst [vmem:[#allocation2 + $0xd0] sm:$0xff] %v1192
        %1237 = vst [vmem:[#allocation2 + $0xd8] sm:$0xff] %v1194
        %1238 = vst [vmem:[#allocation2 + $0xe0] sm:$0xff] %v1197
        %1239 = vst [vmem:[#allocation2 + $0xe8] sm:$0xff] %v1199
        %1240 = vst [vmem:[#allocation2 + $0xf0] sm:$0xff] %v1202
        %1241 = vst [vmem:[#allocation2 + $0xf8] sm:$0xff] %v1204
      $region36: #{gcn_forward.5} parent=31 // pred_fallthru
        _
      %p1242 = scmp.ne.s32.totalorder %s19, 0
      // Predicated region
      $region37: #{gcn_forward.5} parent=31 // pred_check
        %p1243 = pneg %p1242
      $region38: #{gcn_forward.5} parent=31 // pred_check_branch
        %1245 = sbr.rel (%p1243) target = $region40
      $region39: #{gcn_forward.5} parent=31 // pred_region
        %v1246 = vld [vmem:[#allocation2] sm:$0xff]
        %v1247 = vld [vmem:[#allocation2 + $0x8] sm:$0xff]
        %v1248 = vld [vmem:[#allocation2 + $0x10] sm:$0xff]
        %v1249 = vld [vmem:[#allocation2 + $0x18] sm:$0xff]
        %v1250 = vld [vmem:[#allocation2 + $0x20] sm:$0xff]
        %v1251 = vld [vmem:[#allocation2 + $0x28] sm:$0xff]
        %v1252 = vld [vmem:[#allocation2 + $0x30] sm:$0xff]
        %v1253 = vld [vmem:[#allocation2 + $0x38] sm:$0xff]
        %v1254 = vld [vmem:[#allocation2 + $0x40] sm:$0xff]
        %v1255 = vld [vmem:[#allocation2 + $0x48] sm:$0xff]
        %v1256 = vld [vmem:[#allocation2 + $0x50] sm:$0xff]
        %v1257 = vld [vmem:[#allocation2 + $0x58] sm:$0xff]
        %v1258 = vld [vmem:[#allocation2 + $0x60] sm:$0xff]
        %v1259 = vld [vmem:[#allocation2 + $0x68] sm:$0xff]
        %v1260 = vld [vmem:[#allocation2 + $0x70] sm:$0xff]
        %v1261 = vld [vmem:[#allocation2 + $0x78] sm:$0xff]
        %v1262 = vld [vmem:[#allocation2 + $0x80] sm:$0xff]
        %v1263 = vld [vmem:[#allocation2 + $0x88] sm:$0xff]
        %v1264 = vld [vmem:[#allocation2 + $0x90] sm:$0xff]
        %v1265 = vld [vmem:[#allocation2 + $0x98] sm:$0xff]
        %v1266 = vld [vmem:[#allocation2 + $0xa0] sm:$0xff]
        %v1267 = vld [vmem:[#allocation2 + $0xa8] sm:$0xff]
        %v1268 = vld [vmem:[#allocation2 + $0xb0] sm:$0xff]
        %v1269 = vld [vmem:[#allocation2 + $0xb8] sm:$0xff]
        %v1270 = vld [vmem:[#allocation2 + $0xc0] sm:$0xff]
        %v1271 = vld [vmem:[#allocation2 + $0xc8] sm:$0xff]
        %v1272 = vld [vmem:[#allocation2 + $0xd0] sm:$0xff]
        %v1273 = vld [vmem:[#allocation2 + $0xd8] sm:$0xff]
        %v1274 = vld [vmem:[#allocation2 + $0xe0] sm:$0xff]
        %v1275 = vld [vmem:[#allocation2 + $0xe8] sm:$0xff]
        %v1276 = vld [vmem:[#allocation2 + $0xf0] sm:$0xff]
        %v1277 = vld [vmem:[#allocation2 + $0xf8] sm:$0xff]
        %v1278 = vadd.f32 %v1246, %v1127
        %v1279 = vadd.f32 %v1247, %v1129
        %v1280 = vadd.f32 %v1248, %v1132
        %v1281 = vadd.f32 %v1249, %v1134
        %v1282 = vadd.f32 %v1250, %v1137
        %v1283 = vadd.f32 %v1251, %v1139
        %v1284 = vadd.f32 %v1252, %v1142
        %v1285 = vadd.f32 %v1253, %v1144
        %v1286 = vadd.f32 %v1254, %v1147
        %v1287 = vadd.f32 %v1255, %v1149
        %v1288 = vadd.f32 %v1256, %v1152
        %v1289 = vadd.f32 %v1257, %v1154
        %v1290 = vadd.f32 %v1258, %v1157
        %v1291 = vadd.f32 %v1259, %v1159
        %v1292 = vadd.f32 %v1260, %v1162
        %v1293 = vadd.f32 %v1261, %v1164
        %v1294 = vadd.f32 %v1262, %v1167
        %v1295 = vadd.f32 %v1263, %v1169
        %v1296 = vadd.f32 %v1264, %v1172
        %v1297 = vadd.f32 %v1265, %v1174
        %v1298 = vadd.f32 %v1266, %v1177
        %v1299 = vadd.f32 %v1267, %v1179
        %v1300 = vadd.f32 %v1268, %v1182
        %v1301 = vadd.f32 %v1269, %v1184
        %v1302 = vadd.f32 %v1270, %v1187
        %v1303 = vadd.f32 %v1271, %v1189
        %v1304 = vadd.f32 %v1272, %v1192
        %v1305 = vadd.f32 %v1273, %v1194
        %v1306 = vadd.f32 %v1274, %v1197
        %v1307 = vadd.f32 %v1275, %v1199
        %v1308 = vadd.f32 %v1276, %v1202
        %v1309 = vadd.f32 %v1277, %v1204
        %1310 = vst [vmem:[#allocation2] sm:$0xff] %v1278
        %1311 = vst [vmem:[#allocation2 + $0x8] sm:$0xff] %v1279
        %1312 = vst [vmem:[#allocation2 + $0x10] sm:$0xff] %v1280
        %1313 = vst [vmem:[#allocation2 + $0x18] sm:$0xff] %v1281
        %1314 = vst [vmem:[#allocation2 + $0x20] sm:$0xff] %v1282
        %1315 = vst [vmem:[#allocation2 + $0x28] sm:$0xff] %v1283
        %1316 = vst [vmem:[#allocation2 + $0x30] sm:$0xff] %v1284
        %1317 = vst [vmem:[#allocation2 + $0x38] sm:$0xff] %v1285
        %1318 = vst [vmem:[#allocation2 + $0x40] sm:$0xff] %v1286
        %1319 = vst [vmem:[#allocation2 + $0x48] sm:$0xff] %v1287
        %1320 = vst [vmem:[#allocation2 + $0x50] sm:$0xff] %v1288
        %1321 = vst [vmem:[#allocation2 + $0x58] sm:$0xff] %v1289
        %1322 = vst [vmem:[#allocation2 + $0x60] sm:$0xff] %v1290
        %1323 = vst [vmem:[#allocation2 + $0x68] sm:$0xff] %v1291
        %1324 = vst [vmem:[#allocation2 + $0x70] sm:$0xff] %v1292
        %1325 = vst [vmem:[#allocation2 + $0x78] sm:$0xff] %v1293
        %1326 = vst [vmem:[#allocation2 + $0x80] sm:$0xff] %v1294
        %1327 = vst [vmem:[#allocation2 + $0x88] sm:$0xff] %v1295
        %1328 = vst [vmem:[#allocation2 + $0x90] sm:$0xff] %v1296
        %1329 = vst [vmem:[#allocation2 + $0x98] sm:$0xff] %v1297
        %1330 = vst [vmem:[#allocation2 + $0xa0] sm:$0xff] %v1298
        %1331 = vst [vmem:[#allocation2 + $0xa8] sm:$0xff] %v1299
        %1332 = vst [vmem:[#allocation2 + $0xb0] sm:$0xff] %v1300
        %1333 = vst [vmem:[#allocation2 + $0xb8] sm:$0xff] %v1301
        %1334 = vst [vmem:[#allocation2 + $0xc0] sm:$0xff] %v1302
        %1335 = vst [vmem:[#allocation2 + $0xc8] sm:$0xff] %v1303
        %1336 = vst [vmem:[#allocation2 + $0xd0] sm:$0xff] %v1304
        %1337 = vst [vmem:[#allocation2 + $0xd8] sm:$0xff] %v1305
        %1338 = vst [vmem:[#allocation2 + $0xe0] sm:$0xff] %v1306
        %1339 = vst [vmem:[#allocation2 + $0xe8] sm:$0xff] %v1307
        %1340 = vst [vmem:[#allocation2 + $0xf0] sm:$0xff] %v1308
        %1341 = vst [vmem:[#allocation2 + $0xf8] sm:$0xff] %v1309
      $region40: #{gcn_forward.5} parent=31 // pred_fallthru
        _
      // Predicated region
      $region41: #{gcn_forward.5} parent=31 // pred_check
        %p1342 = pneg %p1206
      $region42: #{gcn_forward.5} parent=31 // pred_check_branch
        %1344 = sbr.rel (%p1342) target = $region44
      $region43: #{gcn_forward.5} parent=31 // pred_region
        %v1345 = vld [vmem:[#allocation2] sm:$0xff]
        %v1346 = vld [vmem:[#allocation2 + $0x8] sm:$0xff]
        %v1347 = vld [vmem:[#allocation2 + $0x10] sm:$0xff]
        %v1348 = vld [vmem:[#allocation2 + $0x18] sm:$0xff]
        %v1349 = vld [vmem:[#allocation2 + $0x20] sm:$0xff]
        %v1350 = vld [vmem:[#allocation2 + $0x28] sm:$0xff]
        %v1351 = vld [vmem:[#allocation2 + $0x30] sm:$0xff]
        %v1352 = vld [vmem:[#allocation2 + $0x38] sm:$0xff]
        %v1353 = vld [vmem:[#allocation2 + $0x40] sm:$0xff]
        %v1354 = vld [vmem:[#allocation2 + $0x48] sm:$0xff]
        %v1355 = vld [vmem:[#allocation2 + $0x50] sm:$0xff]
        %v1356 = vld [vmem:[#allocation2 + $0x58] sm:$0xff]
        %v1357 = vld [vmem:[#allocation2 + $0x60] sm:$0xff]
        %v1358 = vld [vmem:[#allocation2 + $0x68] sm:$0xff]
        %v1359 = vld [vmem:[#allocation2 + $0x70] sm:$0xff]
        %v1360 = vld [vmem:[#allocation2 + $0x78] sm:$0xff]
        %v1361 = vld [vmem:[#allocation2 + $0x80] sm:$0xff]
        %v1362 = vld [vmem:[#allocation2 + $0x88] sm:$0xff]
        %v1363 = vld [vmem:[#allocation2 + $0x90] sm:$0xff]
        %v1364 = vld [vmem:[#allocation2 + $0x98] sm:$0xff]
        %v1365 = vld [vmem:[#allocation2 + $0xa0] sm:$0xff]
        %v1366 = vld [vmem:[#allocation2 + $0xa8] sm:$0xff]
        %v1367 = vld [vmem:[#allocation2 + $0xb0] sm:$0xff]
        %v1368 = vld [vmem:[#allocation2 + $0xb8] sm:$0xff]
        %v1369 = vld [vmem:[#allocation2 + $0xc0] sm:$0xff]
        %v1370 = vld [vmem:[#allocation2 + $0xc8] sm:$0xff]
        %v1371 = vld [vmem:[#allocation2 + $0xd0] sm:$0xff]
        %v1372 = vld [vmem:[#allocation2 + $0xd8] sm:$0xff]
        %v1373 = vld [vmem:[#allocation2 + $0xe0] sm:$0xff]
        %v1374 = vld [vmem:[#allocation2 + $0xe8] sm:$0xff]
        %v1375 = vld [vmem:[#allocation2 + $0xf0] sm:$0xff]
        %v1376 = vld [vmem:[#allocation2 + $0xf8] sm:$0xff]
        %v1377 = vld [vmem:[%s2] sm:$0x1]
        %v1379 = vperm.slane %v1377, 0
        %v1381 = vadd.f32 %v1345, %v1379
        %v1382 = vadd.f32 %v1346, %v1379
        %v1383 = vadd.f32 %v1347, %v1379
        %v1384 = vadd.f32 %v1348, %v1379
        %v1385 = vadd.f32 %v1349, %v1379
        %v1386 = vadd.f32 %v1350, %v1379
        %v1387 = vadd.f32 %v1351, %v1379
        %v1388 = vadd.f32 %v1352, %v1379
        %v1389 = vadd.f32 %v1353, %v1379
        %v1390 = vadd.f32 %v1354, %v1379
        %v1391 = vadd.f32 %v1355, %v1379
        %v1392 = vadd.f32 %v1356, %v1379
        %v1393 = vadd.f32 %v1357, %v1379
        %v1394 = vadd.f32 %v1358, %v1379
        %v1395 = vadd.f32 %v1359, %v1379
        %v1396 = vadd.f32 %v1360, %v1379
        %v1397 = vadd.f32 %v1361, %v1379
        %v1398 = vadd.f32 %v1362, %v1379
        %v1399 = vadd.f32 %v1363, %v1379
        %v1400 = vadd.f32 %v1364, %v1379
        %v1401 = vadd.f32 %v1365, %v1379
        %v1402 = vadd.f32 %v1366, %v1379
        %v1403 = vadd.f32 %v1367, %v1379
        %v1404 = vadd.f32 %v1368, %v1379
        %v1405 = vadd.f32 %v1369, %v1379
        %v1406 = vadd.f32 %v1370, %v1379
        %v1407 = vadd.f32 %v1371, %v1379
        %v1408 = vadd.f32 %v1372, %v1379
        %v1409 = vadd.f32 %v1373, %v1379
        %v1410 = vadd.f32 %v1374, %v1379
        %v1411 = vadd.f32 %v1375, %v1379
        %v1412 = vadd.f32 %v1376, %v1379
        %v1413 = vlaneseq
        %v1414 = vand.u32 %v1413, 127
        %vm1415 = vcmp.lt.s32.totalorder %v1414, 10
        %v1416 = vsel %vm1415, %v1381, -inf
        %v1417 = vsel %vm1415, %v1382, -inf
        %v1418 = vsel %vm1415, %v1383, -inf
        %v1419 = vsel %vm1415, %v1384, -inf
        %v1420 = vsel %vm1415, %v1385, -inf
        %v1421 = vsel %vm1415, %v1386, -inf
        %v1422 = vsel %vm1415, %v1387, -inf
        %v1423 = vsel %vm1415, %v1388, -inf
        %v1424 = vsel %vm1415, %v1389, -inf
        %v1425 = vsel %vm1415, %v1390, -inf
        %v1426 = vsel %vm1415, %v1391, -inf
        %v1427 = vsel %vm1415, %v1392, -inf
        %v1428 = vsel %vm1415, %v1393, -inf
        %v1429 = vsel %vm1415, %v1394, -inf
        %v1430 = vsel %vm1415, %v1395, -inf
        %v1431 = vsel %vm1415, %v1396, -inf
        %v1432 = vsel %vm1415, %v1397, -inf
        %v1433 = vsel %vm1415, %v1398, -inf
        %v1434 = vsel %vm1415, %v1399, -inf
        %v1435 = vsel %vm1415, %v1400, -inf
        %v1436 = vsel %vm1415, %v1401, -inf
        %v1437 = vsel %vm1415, %v1402, -inf
        %v1438 = vsel %vm1415, %v1403, -inf
        %v1439 = vsel %vm1415, %v1404, -inf
        %v1440 = vsel %vm1415, %v1405, -inf
        %v1441 = vsel %vm1415, %v1406, -inf
        %v1442 = vsel %vm1415, %v1407, -inf
        %v1443 = vsel %vm1415, %v1408, -inf
        %v1444 = vsel %vm1415, %v1409, -inf
        %v1445 = vsel %vm1415, %v1410, -inf
        %v1446 = vsel %vm1415, %v1411, -inf
        %v1447 = vsel %vm1415, %v1412, -inf
        %1448 = vmax.xlane.f32.xlu0 %v1416
        %v1449 = vpop.xlane.xlu0 %1448
        %1450 = vmax.xlane.f32.xlu0 %v1417
        %v1451 = vpop.xlane.xlu0 %1450
        %1452 = vmax.xlane.f32.xlu0 %v1418
        %v1453 = vpop.xlane.xlu0 %1452
        %1454 = vmax.xlane.f32.xlu0 %v1419
        %v1455 = vpop.xlane.xlu0 %1454
        %1456 = vmax.xlane.f32.xlu0 %v1420
        %v1457 = vpop.xlane.xlu0 %1456
        %1458 = vmax.xlane.f32.xlu0 %v1421
        %v1459 = vpop.xlane.xlu0 %1458
        %1460 = vmax.xlane.f32.xlu0 %v1422
        %v1461 = vpop.xlane.xlu0 %1460
        %1462 = vmax.xlane.f32.xlu0 %v1423
        %v1463 = vpop.xlane.xlu0 %1462
        %1464 = vmax.xlane.f32.xlu0 %v1424
        %v1465 = vpop.xlane.xlu0 %1464
        %1466 = vmax.xlane.f32.xlu0 %v1425
        %v1467 = vpop.xlane.xlu0 %1466
        %1468 = vmax.xlane.f32.xlu0 %v1426
        %v1469 = vpop.xlane.xlu0 %1468
        %1470 = vmax.xlane.f32.xlu0 %v1427
        %v1471 = vpop.xlane.xlu0 %1470
        %1472 = vmax.xlane.f32.xlu0 %v1428
        %v1473 = vpop.xlane.xlu0 %1472
        %1474 = vmax.xlane.f32.xlu0 %v1429
        %v1475 = vpop.xlane.xlu0 %1474
        %1476 = vmax.xlane.f32.xlu0 %v1430
        %v1477 = vpop.xlane.xlu0 %1476
        %1478 = vmax.xlane.f32.xlu0 %v1431
        %v1479 = vpop.xlane.xlu0 %1478
        %1480 = vmax.xlane.f32.xlu0 %v1432
        %v1481 = vpop.xlane.xlu0 %1480
        %1482 = vmax.xlane.f32.xlu0 %v1433
        %v1483 = vpop.xlane.xlu0 %1482
        %1484 = vmax.xlane.f32.xlu0 %v1434
        %v1485 = vpop.xlane.xlu0 %1484
        %1486 = vmax.xlane.f32.xlu0 %v1435
        %v1487 = vpop.xlane.xlu0 %1486
        %1488 = vmax.xlane.f32.xlu0 %v1436
        %v1489 = vpop.xlane.xlu0 %1488
        %1490 = vmax.xlane.f32.xlu0 %v1437
        %v1491 = vpop.xlane.xlu0 %1490
        %1492 = vmax.xlane.f32.xlu0 %v1438
        %v1493 = vpop.xlane.xlu0 %1492
        %1494 = vmax.xlane.f32.xlu0 %v1439
        %v1495 = vpop.xlane.xlu0 %1494
        %1496 = vmax.xlane.f32.xlu0 %v1440
        %v1497 = vpop.xlane.xlu0 %1496
        %1498 = vmax.xlane.f32.xlu0 %v1441
        %v1499 = vpop.xlane.xlu0 %1498
        %1500 = vmax.xlane.f32.xlu0 %v1442
        %v1501 = vpop.xlane.xlu0 %1500
        %1502 = vmax.xlane.f32.xlu0 %v1443
        %v1503 = vpop.xlane.xlu0 %1502
        %1504 = vmax.xlane.f32.xlu0 %v1444
        %v1505 = vpop.xlane.xlu0 %1504
        %1506 = vmax.xlane.f32.xlu0 %v1445
        %v1507 = vpop.xlane.xlu0 %1506
        %1508 = vmax.xlane.f32.xlu0 %v1446
        %v1509 = vpop.xlane.xlu0 %1508
        %1510 = vmax.xlane.f32.xlu0 %v1447
        %v1511 = vpop.xlane.xlu0 %1510
        %v1512 = vsub.f32 %v1416, %v1449
        %v1513 = vsub.f32 %v1417, %v1451
        %v1514 = vsub.f32 %v1418, %v1453
        %v1515 = vsub.f32 %v1419, %v1455
        %v1516 = vsub.f32 %v1420, %v1457
        %v1517 = vsub.f32 %v1421, %v1459
        %v1518 = vsub.f32 %v1422, %v1461
        %v1519 = vsub.f32 %v1423, %v1463
        %v1520 = vsub.f32 %v1424, %v1465
        %v1521 = vsub.f32 %v1425, %v1467
        %v1522 = vsub.f32 %v1426, %v1469
        %v1523 = vsub.f32 %v1427, %v1471
        %v1524 = vsub.f32 %v1428, %v1473
        %v1525 = vsub.f32 %v1429, %v1475
        %v1526 = vsub.f32 %v1430, %v1477
        %v1527 = vsub.f32 %v1431, %v1479
        %v1528 = vsub.f32 %v1432, %v1481
        %v1529 = vsub.f32 %v1433, %v1483
        %v1530 = vsub.f32 %v1434, %v1485
        %v1531 = vsub.f32 %v1435, %v1487
        %v1532 = vsub.f32 %v1436, %v1489
        %v1533 = vsub.f32 %v1437, %v1491
        %v1534 = vsub.f32 %v1438, %v1493
        %v1535 = vsub.f32 %v1439, %v1495
        %v1536 = vsub.f32 %v1440, %v1497
        %v1537 = vsub.f32 %v1441, %v1499
        %v1538 = vsub.f32 %v1442, %v1501
        %v1539 = vsub.f32 %v1443, %v1503
        %v1540 = vsub.f32 %v1444, %v1505
        %v1541 = vsub.f32 %v1445, %v1507
        %v1542 = vsub.f32 %v1446, %v1509
        %v1543 = vsub.f32 %v1447, %v1511
        %v1544 = vmul.f32 %v1512, 1.442695
        %v1545 = vpow.pop %v1544
        %v1546 = vmul.f32 %v1513, 1.442695
        %v1547 = vpow.pop %v1546
        %v1548 = vmul.f32 %v1514, 1.442695
        %v1549 = vpow.pop %v1548
        %v1550 = vmul.f32 %v1515, 1.442695
        %v1551 = vpow.pop %v1550
        %v1552 = vmul.f32 %v1516, 1.442695
        %v1553 = vpow.pop %v1552
        %v1554 = vmul.f32 %v1517, 1.442695
        %v1555 = vpow.pop %v1554
        %v1556 = vmul.f32 %v1518, 1.442695
        %v1557 = vpow.pop %v1556
        %v1558 = vmul.f32 %v1519, 1.442695
        %v1559 = vpow.pop %v1558
        %v1560 = vmul.f32 %v1520, 1.442695
        %v1561 = vpow.pop %v1560
        %v1562 = vmul.f32 %v1521, 1.442695
        %v1563 = vpow.pop %v1562
        %v1564 = vmul.f32 %v1522, 1.442695
        %v1565 = vpow.pop %v1564
        %v1566 = vmul.f32 %v1523, 1.442695
        %v1567 = vpow.pop %v1566
        %v1568 = vmul.f32 %v1524, 1.442695
        %v1569 = vpow.pop %v1568
        %v1570 = vmul.f32 %v1525, 1.442695
        %v1571 = vpow.pop %v1570
        %v1572 = vmul.f32 %v1526, 1.442695
        %v1573 = vpow.pop %v1572
        %v1574 = vmul.f32 %v1527, 1.442695
        %v1575 = vpow.pop %v1574
        %v1576 = vmul.f32 %v1528, 1.442695
        %v1577 = vpow.pop %v1576
        %v1578 = vmul.f32 %v1529, 1.442695
        %v1579 = vpow.pop %v1578
        %v1580 = vmul.f32 %v1530, 1.442695
        %v1581 = vpow.pop %v1580
        %v1582 = vmul.f32 %v1531, 1.442695
        %v1583 = vpow.pop %v1582
        %v1584 = vmul.f32 %v1532, 1.442695
        %v1585 = vpow.pop %v1584
        %v1586 = vmul.f32 %v1533, 1.442695
        %v1587 = vpow.pop %v1586
        %v1588 = vmul.f32 %v1534, 1.442695
        %v1589 = vpow.pop %v1588
        %v1590 = vmul.f32 %v1535, 1.442695
        %v1591 = vpow.pop %v1590
        %v1592 = vmul.f32 %v1536, 1.442695
        %v1593 = vpow.pop %v1592
        %v1594 = vmul.f32 %v1537, 1.442695
        %v1595 = vpow.pop %v1594
        %v1596 = vmul.f32 %v1538, 1.442695
        %v1597 = vpow.pop %v1596
        %v1598 = vmul.f32 %v1539, 1.442695
        %v1599 = vpow.pop %v1598
        %v1600 = vmul.f32 %v1540, 1.442695
        %v1601 = vpow.pop %v1600
        %v1602 = vmul.f32 %v1541, 1.442695
        %v1603 = vpow.pop %v1602
        %v1604 = vmul.f32 %v1542, 1.442695
        %v1605 = vpow.pop %v1604
        %v1606 = vmul.f32 %v1543, 1.442695
        %v1607 = vpow.pop %v1606
        %1608 = vadd.xlane.f32.xlu0 %v1545
        %v1609 = vpop.xlane.xlu0 %1608
        %1610 = vadd.xlane.f32.xlu0 %v1547
        %v1611 = vpop.xlane.xlu0 %1610
        %1612 = vadd.xlane.f32.xlu0 %v1549
        %v1613 = vpop.xlane.xlu0 %1612
        %1614 = vadd.xlane.f32.xlu0 %v1551
        %v1615 = vpop.xlane.xlu0 %1614
        %1616 = vadd.xlane.f32.xlu0 %v1553
        %v1617 = vpop.xlane.xlu0 %1616
        %1618 = vadd.xlane.f32.xlu0 %v1555
        %v1619 = vpop.xlane.xlu0 %1618
        %1620 = vadd.xlane.f32.xlu0 %v1557
        %v1621 = vpop.xlane.xlu0 %1620
        %1622 = vadd.xlane.f32.xlu0 %v1559
        %v1623 = vpop.xlane.xlu0 %1622
        %1624 = vadd.xlane.f32.xlu0 %v1561
        %v1625 = vpop.xlane.xlu0 %1624
        %1626 = vadd.xlane.f32.xlu0 %v1563
        %v1627 = vpop.xlane.xlu0 %1626
        %1628 = vadd.xlane.f32.xlu0 %v1565
        %v1629 = vpop.xlane.xlu0 %1628
        %1630 = vadd.xlane.f32.xlu0 %v1567
        %v1631 = vpop.xlane.xlu0 %1630
        %1632 = vadd.xlane.f32.xlu0 %v1569
        %v1633 = vpop.xlane.xlu0 %1632
        %1634 = vadd.xlane.f32.xlu0 %v1571
        %v1635 = vpop.xlane.xlu0 %1634
        %1636 = vadd.xlane.f32.xlu0 %v1573
        %v1637 = vpop.xlane.xlu0 %1636
        %1638 = vadd.xlane.f32.xlu0 %v1575
        %v1639 = vpop.xlane.xlu0 %1638
        %1640 = vadd.xlane.f32.xlu0 %v1577
        %v1641 = vpop.xlane.xlu0 %1640
        %1642 = vadd.xlane.f32.xlu0 %v1579
        %v1643 = vpop.xlane.xlu0 %1642
        %1644 = vadd.xlane.f32.xlu0 %v1581
        %v1645 = vpop.xlane.xlu0 %1644
        %1646 = vadd.xlane.f32.xlu0 %v1583
        %v1647 = vpop.xlane.xlu0 %1646
        %1648 = vadd.xlane.f32.xlu0 %v1585
        %v1649 = vpop.xlane.xlu0 %1648
        %1650 = vadd.xlane.f32.xlu0 %v1587
        %v1651 = vpop.xlane.xlu0 %1650
        %1652 = vadd.xlane.f32.xlu0 %v1589
        %v1653 = vpop.xlane.xlu0 %1652
        %1654 = vadd.xlane.f32.xlu0 %v1591
        %v1655 = vpop.xlane.xlu0 %1654
        %1656 = vadd.xlane.f32.xlu0 %v1593
        %v1657 = vpop.xlane.xlu0 %1656
        %1658 = vadd.xlane.f32.xlu0 %v1595
        %v1659 = vpop.xlane.xlu0 %1658
        %1660 = vadd.xlane.f32.xlu0 %v1597
        %v1661 = vpop.xlane.xlu0 %1660
        %1662 = vadd.xlane.f32.xlu0 %v1599
        %v1663 = vpop.xlane.xlu0 %1662
        %1664 = vadd.xlane.f32.xlu0 %v1601
        %v1665 = vpop.xlane.xlu0 %1664
        %1666 = vadd.xlane.f32.xlu0 %v1603
        %v1667 = vpop.xlane.xlu0 %1666
        %1668 = vadd.xlane.f32.xlu0 %v1605
        %v1669 = vpop.xlane.xlu0 %1668
        %1670 = vadd.xlane.f32.xlu0 %v1607
        %v1671 = vpop.xlane.xlu0 %1670
        %v1672 = vlog2.pop %v1609
        %v1673 = vmul.f32 %v1672, 0.6931472
        %v1674 = vlog2.pop %v1611
        %v1675 = vmul.f32 %v1674, 0.6931472
        %v1676 = vlog2.pop %v1613
        %v1677 = vmul.f32 %v1676, 0.6931472
        %v1678 = vlog2.pop %v1615
        %v1679 = vmul.f32 %v1678, 0.6931472
        %v1680 = vlog2.pop %v1617
        %v1681 = vmul.f32 %v1680, 0.6931472
        %v1682 = vlog2.pop %v1619
        %v1683 = vmul.f32 %v1682, 0.6931472
        %v1684 = vlog2.pop %v1621
        %v1685 = vmul.f32 %v1684, 0.6931472
        %v1686 = vlog2.pop %v1623
        %v1687 = vmul.f32 %v1686, 0.6931472
        %v1688 = vlog2.pop %v1625
        %v1689 = vmul.f32 %v1688, 0.6931472
        %v1690 = vlog2.pop %v1627
        %v1691 = vmul.f32 %v1690, 0.6931472
        %v1692 = vlog2.pop %v1629
        %v1693 = vmul.f32 %v1692, 0.6931472
        %v1694 = vlog2.pop %v1631
        %v1695 = vmul.f32 %v1694, 0.6931472
        %v1696 = vlog2.pop %v1633
        %v1697 = vmul.f32 %v1696, 0.6931472
        %v1698 = vlog2.pop %v1635
        %v1699 = vmul.f32 %v1698, 0.6931472
        %v1700 = vlog2.pop %v1637
        %v1701 = vmul.f32 %v1700, 0.6931472
        %v1702 = vlog2.pop %v1639
        %v1703 = vmul.f32 %v1702, 0.6931472
        %v1704 = vlog2.pop %v1641
        %v1705 = vmul.f32 %v1704, 0.6931472
        %v1706 = vlog2.pop %v1643
        %v1707 = vmul.f32 %v1706, 0.6931472
        %v1708 = vlog2.pop %v1645
        %v1709 = vmul.f32 %v1708, 0.6931472
        %v1710 = vlog2.pop %v1647
        %v1711 = vmul.f32 %v1710, 0.6931472
        %v1712 = vlog2.pop %v1649
        %v1713 = vmul.f32 %v1712, 0.6931472
        %v1714 = vlog2.pop %v1651
        %v1715 = vmul.f32 %v1714, 0.6931472
        %v1716 = vlog2.pop %v1653
        %v1717 = vmul.f32 %v1716, 0.6931472
        %v1718 = vlog2.pop %v1655
        %v1719 = vmul.f32 %v1718, 0.6931472
        %v1720 = vlog2.pop %v1657
        %v1721 = vmul.f32 %v1720, 0.6931472
        %v1722 = vlog2.pop %v1659
        %v1723 = vmul.f32 %v1722, 0.6931472
        %v1724 = vlog2.pop %v1661
        %v1725 = vmul.f32 %v1724, 0.6931472
        %v1726 = vlog2.pop %v1663
        %v1727 = vmul.f32 %v1726, 0.6931472
        %v1728 = vlog2.pop %v1665
        %v1729 = vmul.f32 %v1728, 0.6931472
        %v1730 = vlog2.pop %v1667
        %v1731 = vmul.f32 %v1730, 0.6931472
        %v1732 = vlog2.pop %v1669
        %v1733 = vmul.f32 %v1732, 0.6931472
        %v1734 = vlog2.pop %v1671
        %v1735 = vmul.f32 %v1734, 0.6931472
        %v1736 = vsub.f32 %v1512, %v1673
        %v1737 = vsub.f32 %v1513, %v1675
        %v1738 = vsub.f32 %v1514, %v1677
        %v1739 = vsub.f32 %v1515, %v1679
        %v1740 = vsub.f32 %v1516, %v1681
        %v1741 = vsub.f32 %v1517, %v1683
        %v1742 = vsub.f32 %v1518, %v1685
        %v1743 = vsub.f32 %v1519, %v1687
        %v1744 = vsub.f32 %v1520, %v1689
        %v1745 = vsub.f32 %v1521, %v1691
        %v1746 = vsub.f32 %v1522, %v1693
        %v1747 = vsub.f32 %v1523, %v1695
        %v1748 = vsub.f32 %v1524, %v1697
        %v1749 = vsub.f32 %v1525, %v1699
        %v1750 = vsub.f32 %v1526, %v1701
        %v1751 = vsub.f32 %v1527, %v1703
        %v1752 = vsub.f32 %v1528, %v1705
        %v1753 = vsub.f32 %v1529, %v1707
        %v1754 = vsub.f32 %v1530, %v1709
        %v1755 = vsub.f32 %v1531, %v1711
        %v1756 = vsub.f32 %v1532, %v1713
        %v1757 = vsub.f32 %v1533, %v1715
        %v1758 = vsub.f32 %v1534, %v1717
        %v1759 = vsub.f32 %v1535, %v1719
        %v1760 = vsub.f32 %v1536, %v1721
        %v1761 = vsub.f32 %v1537, %v1723
        %v1762 = vsub.f32 %v1538, %v1725
        %v1763 = vsub.f32 %v1539, %v1727
        %v1764 = vsub.f32 %v1540, %v1729
        %v1765 = vsub.f32 %v1541, %v1731
        %v1766 = vsub.f32 %v1542, %v1733
        %v1767 = vsub.f32 %v1543, %v1735
        %1768 = vst [vmem:[%s203] sm:$0xff] %v1736
        %1769 = vst [vmem:[%s203 + $0x8] sm:$0xff] %v1737
        %1770 = vst [vmem:[%s203 + $0x10] sm:$0xff] %v1738
        %1771 = vst [vmem:[%s203 + $0x18] sm:$0xff] %v1739
        %1772 = vst [vmem:[%s203 + $0x20] sm:$0xff] %v1740
        %1773 = vst [vmem:[%s203 + $0x28] sm:$0xff] %v1741
        %1774 = vst [vmem:[%s203 + $0x30] sm:$0xff] %v1742
        %1775 = vst [vmem:[%s203 + $0x38] sm:$0xff] %v1743
        %1776 = vst [vmem:[%s203 + $0x40] sm:$0xff] %v1744
        %1777 = vst [vmem:[%s203 + $0x48] sm:$0xff] %v1745
        %1778 = vst [vmem:[%s203 + $0x50] sm:$0xff] %v1746
        %1779 = vst [vmem:[%s203 + $0x58] sm:$0xff] %v1747
        %1780 = vst [vmem:[%s203 + $0x60] sm:$0xff] %v1748
        %1781 = vst [vmem:[%s203 + $0x68] sm:$0xff] %v1749
        %1782 = vst [vmem:[%s203 + $0x70] sm:$0xff] %v1750
        %1783 = vst [vmem:[%s203 + $0x78] sm:$0xff] %v1751
        %1784 = vst [vmem:[%s203 + $0x80] sm:$0xff] %v1752
        %1785 = vst [vmem:[%s203 + $0x88] sm:$0xff] %v1753
        %1786 = vst [vmem:[%s203 + $0x90] sm:$0xff] %v1754
        %1787 = vst [vmem:[%s203 + $0x98] sm:$0xff] %v1755
        %1788 = vst [vmem:[%s203 + $0xa0] sm:$0xff] %v1756
        %1789 = vst [vmem:[%s203 + $0xa8] sm:$0xff] %v1757
        %1790 = vst [vmem:[%s203 + $0xb0] sm:$0xff] %v1758
        %1791 = vst [vmem:[%s203 + $0xb8] sm:$0xff] %v1759
        %1792 = vst [vmem:[%s203 + $0xc0] sm:$0xff] %v1760
        %1793 = vst [vmem:[%s203 + $0xc8] sm:$0xff] %v1761
        %1794 = vst [vmem:[%s203 + $0xd0] sm:$0xff] %v1762
        %1795 = vst [vmem:[%s203 + $0xd8] sm:$0xff] %v1763
        %1796 = vst [vmem:[%s203 + $0xe0] sm:$0xff] %v1764
        %1797 = vst [vmem:[%s203 + $0xe8] sm:$0xff] %v1765
        %1798 = vst [vmem:[%s203 + $0xf0] sm:$0xff] %v1766
        %1799 = vst [vmem:[%s203 + $0xf8] sm:$0xff] %v1767
      $region44: #{gcn_forward.5} parent=31 // pred_fallthru
        _
      %s1800 = smul.u32 32, %s18
      %p1801 = scmp.lt.s32.totalorder %s1800, 63
      %s1802 = scalar_select %p1801, %s1800, 63
      %s1803 = smul.addr %s1802, 8
      %s1804 = scalar_lea.vmem %s3, %s1803
      // Predicated region
      $region45: #{gcn_forward.5} parent=31 // pred_check
        %p1805 = pneg %p114
      $region46: #{gcn_forward.5} parent=31 // pred_check_branch
        %1807 = sbr.rel (%p1805) target = $region48
      $region47: #{gcn_forward.5} parent=31 // pred_region
        %s1808 = smul.u32 32, %s18
      $region48: #{gcn_forward.5} parent=31 // pred_fallthru
        _
    $region32: #{gcn_forward.5} parent=5 // pred_fallthru
      _
    %p1809 = scmp.le.s32.totalorder 2, %s9
    // Predicated region
    $region49: #{gcn_forward.5} parent=5 // pred_check
      %p1810 = pneg %p1809
    $region50: #{gcn_forward.5} parent=5 // pred_check_branch
      %1812 = sbr.rel (%p1810) target = $region52
    $region51: #{gcn_forward.5} parent=5 // pred_region
      %s1813 = ssub.s32 %s9, 2
      // Predicated region
      $region53: #{gcn_forward.5} parent=51 // pred_check
        %p1814 = pneg %p120
      $region54: #{gcn_forward.5} parent=51 // pred_check_branch
        %1816 = sbr.rel (%p1814) target = $region56
      $region55: #{gcn_forward.5} parent=51 // pred_region
        %s1817 = smul.u32 32, %s20
        %p1818 = scmp.lt.s32.totalorder %s1817, 63
        %s1819 = scalar_select %p1818, %s1817, 63
        %s1820 = smul.addr %s1819, 8
        %s1821 = scalar_lea.vmem %s3, %s1820
      $region56: #{gcn_forward.5} parent=51 // pred_fallthru
        _
    $region52: #{gcn_forward.5} parent=5 // pred_fallthru
      _
  $region6: #{gcn_forward.5} parent=0 // loop_footer
    %s13 = sadd.s32 1, %s9
  $region7: #{gcn_forward.5} parent=0 // loop_footer_branch
    %8 = sbr.rel target = $region3
  $region8: #{gcn_forward.5} parent=0 // loop_exit
    _

</llo_original>
